<compile_context>
chip_gen: v7x
topology: tpu7x:2x2x1
jax: 0.10.0
libtpu: 0.0.40
codegen_flags: <defaults>
</compile_context>

<pallas_src>
import functools
import math

import jax
import jax.numpy as jnp
from jax import lax
from jax.experimental import pallas as pl
from jax.experimental.pallas import tpu as pltpu

EPS = 1e-5        # torch nn.LayerNorm default eps
NEG_INF = -1e30   # additive mask for padded key columns (exp underflows to 0)


# ---------------------------------------------------------------------------
# in-kernel helpers
# ---------------------------------------------------------------------------
def _layernorm(x, g, b):
    mu = jnp.mean(x, axis=-1, keepdims=True)
    var = jnp.mean((x - mu) ** 2, axis=-1, keepdims=True)
    return (x - mu) * lax.rsqrt(var + EPS) * g + b


def _erf(x):
    # Abramowitz & Stegun 7.1.26 (|err| <= 1.5e-7): avoids relying on an erf
    # lowering in Mosaic; uses only mul/add/exp (VPU + EUP slots).
    p = 0.3275911
    a1, a2, a3, a4, a5 = 0.254829592, -0.284496736, 1.421413741, -1.453152027, 1.061405429
    s = jnp.where(x >= 0.0, 1.0, -1.0)
    ax = jnp.abs(x)
    t = 1.0 / (1.0 + p * ax)
    poly = ((((a5 * t + a4) * t + a3) * t + a2) * t + a1) * t
    return s * (1.0 - poly * jnp.exp(-ax * ax))


def _gelu_exact(x):
    # torch nn.GELU() default (erf-based)
    return 0.5 * x * (1.0 + _erf(x * (1.0 / math.sqrt(2.0))))


def _bf16(x):
    return x.astype(jnp.bfloat16)


# ---------------------------------------------------------------------------
# fused kernel: one transformer layer per grid step (+ prologue / epilogue)
# ---------------------------------------------------------------------------
def fused_vit_layer_kernel(
    patches_ref,                                              # (B*n, patch_dim)
    pe_g1_ref, pe_b1_ref, pe_w_ref, pe_bw_ref, pe_g2_ref, pe_b2_ref,
    cls_ref, pos_ref,                                         # (1,D), (N,D)
    attn_g_ref, attn_b_ref, wqkv_ref, wout_ref, bout_ref,     # this layer's slices
    ff_g_ref, ff_b_ref, w1_ref, b1_ref, w2_ref, b2_ref,
    head_g_ref, head_b_ref, wh_ref, bh_ref,
    o_ref,                                                    # (B, num_classes)
    x_s,                                                      # VMEM (B*N_pad, D) slab
    *, B, n, N_pad, heads, dim_head, scale,
):
    l = pl.program_id(0)
    N = n + 1
    inner = heads * dim_head
    D = x_s.shape[-1]

    # ---- grid step 0: patch embedding + [cls ; tokens] + pos into the slab ----
    @pl.when(l == 0)
    def _():
        p = patches_ref[...]
        pn = _layernorm(p, pe_g1_ref[...], pe_b1_ref[...])
        emb = jnp.dot(_bf16(pn), pe_w_ref[...],
                      preferred_element_type=jnp.float32) + pe_bw_ref[...]
        emb = _layernorm(emb, pe_g2_ref[...], pe_b2_ref[...])          # (B*n, D)
        emb3 = emb.reshape(B, n, D)
        pos = pos_ref[...]                                             # (N, D)
        cls_row = cls_ref[...] + pos[0:1, :]                           # (1, D)
        pos_rest = pos[1:, :]                                          # (n, D)
        # zero the whole slab first: keeps the N_pad-N padded rows finite
        x_s[...] = jnp.zeros_like(x_s)
        for b in range(B):   # step-0 only; static, 8-aligned batch blocks
            x_s[b * N_pad + 1: b * N_pad + 1 + n, :] = emb3[b] + pos_rest
            x_s[b * N_pad: b * N_pad + 1, :] = cls_row
        # emb_dropout p=0.0 -> identity

    x = x_s[...]                                     # (B*N_pad, D) resident activation

    # additive mask for padded key columns (cols >= N)
    key_bias = jnp.where(
        lax.broadcasted_iota(jnp.int32, (N_pad, N_pad), 1) < N, 0.0, NEG_INF
    ).astype(jnp.float32)[None]                      # (1, N_pad, N_pad)

    # ---- pre-LN multi-head self-attention ------------------------------------
    xn = _layernorm(x, attn_g_ref[...], attn_b_ref[...])
    qkv = jnp.dot(_bf16(xn), wqkv_ref[...],
                  preferred_element_type=jnp.float32)               # (B*Np, 3*inner)
    wout = wout_ref[...]                                            # (inner, D) bf16
    proj = jnp.zeros((B * N_pad, D), jnp.float32)
    for h in range(heads):
        lo = h * dim_head
        q = _bf16(qkv[:, lo: lo + dim_head]).reshape(B, N_pad, dim_head)
        k = _bf16(qkv[:, inner + lo: inner + lo + dim_head]).reshape(B, N_pad, dim_head)
        v = _bf16(qkv[:, 2 * inner + lo: 2 * inner + lo + dim_head]).reshape(B, N_pad, dim_head)
        dots = jnp.einsum('bnd,bmd->bnm', q, k,
                          preferred_element_type=jnp.float32) * scale  # (B, Np, Np)
        dots = dots + key_bias
        dots = dots - jnp.max(dots, axis=-1, keepdims=True)
        e = jnp.exp(dots)
        denom = jnp.sum(e, axis=-1, keepdims=True)
        attn = e * pl.reciprocal(denom, approx=True)
        out_h = jnp.einsum('bnm,bmd->bnd', _bf16(attn), v,
                           preferred_element_type=jnp.float32)         # (B, Np, dh)
        # fold heads into the output projection in registers: sum_h out_h @ Wout[h]
        proj = proj + jnp.dot(_bf16(out_h.reshape(B * N_pad, dim_head)),
                              wout[lo: lo + dim_head, :],
                              preferred_element_type=jnp.float32)
    x = proj + bout_ref[...] + x                                       # residual

    # ---- pre-LN PHM feed-forward (full PHM weights pre-built via kron sum) ----
    xn2 = _layernorm(x, ff_g_ref[...], ff_b_ref[...])
    h1 = jnp.dot(_bf16(xn2), w1_ref[...],
                 preferred_element_type=jnp.float32) + b1_ref[...]
    h1 = _gelu_exact(h1)
    y = jnp.dot(_bf16(h1), w2_ref[...],
                preferred_element_type=jnp.float32) + b2_ref[...]
    x = y + x                                                          # residual

    x_s[...] = x                                     # persist for the next grid step

    # ---- last grid step: final LN on CLS rows + classifier head ---------------
    @pl.when(l == pl.num_programs(0) - 1)
    def _():
        cls_rows = x.reshape(B, N_pad, D)[:, 0, :]                     # (B, D)
        xh = _layernorm(cls_rows, head_g_ref[...], head_b_ref[...])
        o_ref[...] = jnp.dot(_bf16(xh), wh_ref[...],
                             preferred_element_type=jnp.float32) + bh_ref[...]


# ---------------------------------------------------------------------------
# wrapper
# ---------------------------------------------------------------------------
def phm_vit_forward(img, params, cfg):
    B, C, H, W = img.shape
    p = cfg["patch_size"]
    hh, ww = H // p, W // p
    # Rearrange 'b c (h p1) (w p2) -> b (h w) (p1 p2 c)'  (layout prep, no compute)
    xr = img.reshape(B, C, hh, p, ww, p).transpose(0, 2, 4, 3, 5, 1)
    patches = xr.reshape(B * hh * ww, p * p * C)

    n = hh * ww
    N = n + 1
    N_pad = ((N + 7) // 8) * 8                 # sublane-aligned per-batch token block
    dim = cfg["dim"]
    depth = cfg["depth"]
    heads = cfg["heads"]
    dim_head = cfg["dim_head"]
    num_classes = cfg["num_classes"]
    scale = dim_head ** (-0.5)

    const_inputs = (patches, *params["patch_embed"],
                    params["cls_token"], params["pos_embedding"])
    layer_inputs = (*params["attn"], *params["ff"])      # all stacked along depth
    head_inputs = (*params["head"],)

    def const_spec(a):                         # fetched once (block index constant)
        nd = a.ndim
        return pl.BlockSpec(a.shape, lambda l, _nd=nd: (0,) * _nd)

    def layer_spec(a):                         # stream one layer per grid step
        nd = a.ndim
        return pl.BlockSpec((None,) + a.shape[1:],
                            lambda l, _nd=nd: (l,) + (0,) * (_nd - 1))

    in_specs = ([const_spec(a) for a in const_inputs]
                + [layer_spec(a) for a in layer_inputs]
                + [const_spec(a) for a in head_inputs])

    # VMEM budget from the actual footprint: double-buffered inputs (one layer's
    # weights at a time) + activation slab + output; capped for v7x (64 MiB) headroom.
    nbytes = lambda a: a.size * a.dtype.itemsize
    footprint = (2 * sum(nbytes(a) for a in const_inputs + head_inputs)
                 + 2 * sum(nbytes(a) // a.shape[0] for a in layer_inputs)
                 + B * N_pad * dim * 4
                 + 2 * B * num_classes * 4)
    vmem_limit = int(min(48 * 1024 * 1024, max(16 * 1024 * 1024, 2 * footprint)))

    kern = functools.partial(
        fused_vit_layer_kernel,
        B=B, n=n, N_pad=N_pad, heads=heads, dim_head=dim_head, scale=scale)

    return pl.pallas_call(
        kern,
        out_shape=jax.ShapeDtypeStruct((B, num_classes), jnp.float32),
        grid_spec=pltpu.PrefetchScalarGridSpec(
            num_scalar_prefetch=0,
            grid=(depth,),
            in_specs=in_specs,
            out_specs=pl.BlockSpec((B, num_classes), lambda l: (0, 0)),
            scratch_shapes=[pltpu.VMEM((B * N_pad, dim), jnp.float32)],
        ),
        compiler_params=pltpu.CompilerParams(
            dimension_semantics=("arbitrary",),
            vmem_limit_bytes=vmem_limit,
        ),
    )(*const_inputs, *layer_inputs, *head_inputs)


# ---------------------------------------------------------------------------
# parameter setup (deterministic, synthetic)
# ---------------------------------------------------------------------------
def phm_weight(rule, w):
    # H = sum_i kron(phm_rule[i], W[i]); rule: (p,p,p), w: (p, in/p, out/p) -> (in, out)
    return sum(jnp.kron(rule[i], w[i]) for i in range(rule.shape[0]))


def init_params(cfg, key):
    keys = list(jax.random.split(key, 64))
    it = iter(keys)

    def nrm(shape, std=0.02, dtype=jnp.float32):
        return (std * jax.random.normal(next(it), shape)).astype(dtype)

    dim = cfg["dim"]
    patch_dim = cfg["channels"] * cfg["patch_size"] ** 2
    inner = cfg["heads"] * cfg["dim_head"]
    mlp = cfg["mlp_dim"]
    depth = cfg["depth"]
    phm = 4  # hypercomplex_division
    num_patches = (cfg["image_size"] // cfg["patch_size"]) ** 2
    N = num_patches + 1

    params = {}
    params["patch_embed"] = (
        jnp.ones((1, patch_dim), jnp.float32), jnp.zeros((1, patch_dim), jnp.float32),
        nrm((patch_dim, dim), dtype=jnp.bfloat16), nrm((1, dim), 0.01),
        jnp.ones((1, dim), jnp.float32), jnp.zeros((1, dim), jnp.float32),
    )
    params["cls_token"] = nrm((1, dim), 1.0)
    params["pos_embedding"] = nrm((N, dim), 1.0)

    # attention params stacked along depth (weight matrices in bf16)
    params["attn"] = (
        jnp.ones((depth, 1, dim), jnp.float32),
        jnp.zeros((depth, 1, dim), jnp.float32),
        nrm((depth, dim, 3 * inner), dtype=jnp.bfloat16),   # to_qkv (no bias)
        nrm((depth, inner, dim), dtype=jnp.bfloat16),       # to_out weight
        nrm((depth, 1, dim), 0.01),                         # to_out bias
    )

    # PHM feed-forward params stacked along depth (full weights via Kronecker sum)
    w1_list, w2_list = [], []
    for _ in range(depth):
        rule1 = nrm((phm, phm, phm), 0.1)
        w1 = nrm((phm, dim // phm, mlp // phm), 0.2)
        rule2 = nrm((phm, phm, phm), 0.1)
        w2 = nrm((phm, mlp // phm, dim // phm), 0.2)
        w1_list.append(phm_weight(rule1, w1))
        w2_list.append(phm_weight(rule2, w2))
    params["ff"] = (
        jnp.ones((depth, 1, dim), jnp.float32),
        jnp.zeros((depth, 1, dim), jnp.float32),
        jnp.stack(w1_list).astype(jnp.bfloat16),            # (depth, dim, mlp)
        jnp.zeros((depth, 1, mlp), jnp.float32),
        jnp.stack(w2_list).astype(jnp.bfloat16),            # (depth, mlp, dim)
        jnp.zeros((depth, 1, dim), jnp.float32),
    )

    params["head"] = (
        jnp.ones((1, dim), jnp.float32), jnp.zeros((1, dim), jnp.float32),
        nrm((dim, cfg["num_classes"]), dtype=jnp.bfloat16),
        nrm((1, cfg["num_classes"]), 0.01),
    )
    return params


# ---------------------------------------------------------------------------
if __name__ == "__main__":
    cfg = dict(
        image_size=16, patch_size=4, channels=3,
        dim=32, depth=2, heads=4, dim_head=8, mlp_dim=64,
        num_classes=10,
    )
    key = jax.random.PRNGKey(0)
    k_img, k_par = jax.random.split(key)
    img = jax.random.normal(
        k_img, (2, cfg["channels"], cfg["image_size"], cfg["image_size"]),
        dtype=jnp.float32)
    params = init_params(cfg, k_par)

    logits = phm_vit_forward(img, params, cfg)
    logits = jax.block_until_ready(logits)
    assert logits.shape == (2, cfg["num_classes"]) and logits.dtype == jnp.float32
    assert bool(jnp.all(jnp.isfinite(logits)))
    print("KERNEL_OK")
</pallas_src>

<mosaic_0001>
module attributes {stable_mosaic.version = 11 : i64} {
  func.func @fused_vit_layer_kernel(%arg0: i32, %arg1: memref<32x48xf32, #tpu.memory_space<vmem>>, %arg2: memref<1x48xf32, #tpu.memory_space<vmem>>, %arg3: memref<1x48xf32, #tpu.memory_space<vmem>>, %arg4: memref<48x32xbf16, #tpu.memory_space<vmem>>, %arg5: memref<1x32xf32, #tpu.memory_space<vmem>>, %arg6: memref<1x32xf32, #tpu.memory_space<vmem>>, %arg7: memref<1x32xf32, #tpu.memory_space<vmem>>, %arg8: memref<1x32xf32, #tpu.memory_space<vmem>>, %arg9: memref<17x32xf32, #tpu.memory_space<vmem>>, %arg10: memref<1x1x32xf32, #tpu.memory_space<vmem>>, %arg11: memref<1x1x32xf32, #tpu.memory_space<vmem>>, %arg12: memref<1x32x96xbf16, #tpu.memory_space<vmem>>, %arg13: memref<1x32x32xbf16, #tpu.memory_space<vmem>>, %arg14: memref<1x1x32xf32, #tpu.memory_space<vmem>>, %arg15: memref<1x1x32xf32, #tpu.memory_space<vmem>>, %arg16: memref<1x1x32xf32, #tpu.memory_space<vmem>>, %arg17: memref<1x32x64xbf16, #tpu.memory_space<vmem>>, %arg18: memref<1x1x64xf32, #tpu.memory_space<vmem>>, %arg19: memref<1x64x32xbf16, #tpu.memory_space<vmem>>, %arg20: memref<1x1x32xf32, #tpu.memory_space<vmem>>, %arg21: memref<1x32xf32, #tpu.memory_space<vmem>>, %arg22: memref<1x32xf32, #tpu.memory_space<vmem>>, %arg23: memref<32x10xbf16, #tpu.memory_space<vmem>>, %arg24: memref<1x10xf32, #tpu.memory_space<vmem>>, %arg25: memref<2x10xf32, #tpu.memory_space<vmem>>, %arg26: memref<48x32xf32, #tpu.memory_space<vmem>>) attributes {dimension_semantics = [#tpu.dimension_semantics<arbitrary>], iteration_bounds = array<i64: 2>, scalar_prefetch = 0 : i64, scratch_operands = 1 : i64, tpu.core_type = #tpu.core_type<tc>, window_params = [{pipeline_mode = #tpu.pipeline_mode<synchronous>, transform_indices = @transform_0, window_bounds = array<i64: 32, 48>}, {pipeline_mode = #tpu.pipeline_mode<synchronous>, transform_indices = @transform_1, window_bounds = array<i64: 1, 48>}, {pipeline_mode = #tpu.pipeline_mode<synchronous>, transform_indices = @transform_2, window_bounds = array<i64: 1, 48>}, {pipeline_mode = #tpu.pipeline_mode<synchronous>, transform_indices = @transform_3, window_bounds = array<i64: 48, 32>}, {pipeline_mode = #tpu.pipeline_mode<synchronous>, transform_indices = @transform_4, window_bounds = array<i64: 1, 32>}, {pipeline_mode = #tpu.pipeline_mode<synchronous>, transform_indices = @transform_5, window_bounds = array<i64: 1, 32>}, {pipeline_mode = #tpu.pipeline_mode<synchronous>, transform_indices = @transform_6, window_bounds = array<i64: 1, 32>}, {pipeline_mode = #tpu.pipeline_mode<synchronous>, transform_indices = @transform_7, window_bounds = array<i64: 1, 32>}, {pipeline_mode = #tpu.pipeline_mode<synchronous>, transform_indices = @transform_8, window_bounds = array<i64: 17, 32>}, {transform_indices = @transform_9, window_bounds = array<i64: 1, 1, 32>}, {transform_indices = @transform_10, window_bounds = array<i64: 1, 1, 32>}, {transform_indices = @transform_11, window_bounds = array<i64: 1, 32, 96>}, {transform_indices = @transform_12, window_bounds = array<i64: 1, 32, 32>}, {transform_indices = @transform_13, window_bounds = array<i64: 1, 1, 32>}, {transform_indices = @transform_14, window_bounds = array<i64: 1, 1, 32>}, {transform_indices = @transform_15, window_bounds = array<i64: 1, 1, 32>}, {transform_indices = @transform_16, window_bounds = array<i64: 1, 32, 64>}, {transform_indices = @transform_17, window_bounds = array<i64: 1, 1, 64>}, {transform_indices = @transform_18, window_bounds = array<i64: 1, 64, 32>}, {transform_indices = @transform_19, window_bounds = array<i64: 1, 1, 32>}, {pipeline_mode = #tpu.pipeline_mode<synchronous>, transform_indices = @transform_20, window_bounds = array<i64: 1, 32>}, {pipeline_mode = #tpu.pipeline_mode<synchronous>, transform_indices = @transform_21, window_bounds = array<i64: 1, 32>}, {pipeline_mode = #tpu.pipeline_mode<synchronous>, transform_indices = @transform_22, window_bounds = array<i64: 32, 10>}, {pipeline_mode = #tpu.pipeline_mode<synchronous>, transform_indices = @transform_23, window_bounds = array<i64: 1, 10>}, {pipeline_mode = #tpu.pipeline_mode<synchronous>, transform_indices = @transform_24, window_bounds = array<i64: 2, 10>}]} {
    %c0_i32 = arith.constant 0 : i32
    %0 = arith.cmpi eq, %arg0, %c0_i32 : i32
    %1 = arith.extui %0 : i1 to i32
    %c0_i32_0 = arith.constant 0 : i32
    %2 = arith.cmpi ne, %1, %c0_i32_0 : i32
    scf.if %2 {
      %c0_93 = arith.constant 0 : index
      %c0_94 = arith.constant 0 : index
      %261 = vector.load %arg1[%c0_93, %c0_94] : memref<32x48xf32, #tpu.memory_space<vmem>>, vector<32x48xf32>
      %c0_95 = arith.constant 0 : index
      %c0_96 = arith.constant 0 : index
      %262 = vector.load %arg2[%c0_95, %c0_96] : memref<1x48xf32, #tpu.memory_space<vmem>>, vector<1x48xf32>
      %c0_97 = arith.constant 0 : index
      %c0_98 = arith.constant 0 : index
      %263 = vector.load %arg3[%c0_97, %c0_98] : memref<1x48xf32, #tpu.memory_space<vmem>>, vector<1x48xf32>
      %cst_99 = arith.constant dense<0.000000e+00> : vector<32xf32>
      %264 = vector.multi_reduction <add>, %261, %cst_99 [1] : vector<32x48xf32> to vector<32xf32>
      %265 = vector.shape_cast %264 : vector<32xf32> to vector<32x1xf32>
      %cst_100 = arith.constant 4.800000e+01 : f32
      %266 = vector.broadcast %cst_100 : f32 to vector<32x1xf32>
      %267 = arith.divf %265, %266 : vector<32x1xf32>
      %268 = vector.broadcast %267 : vector<32x1xf32> to vector<32x48xf32>
      %269 = arith.subf %261, %268 : vector<32x48xf32>
      %270 = arith.mulf %269, %269 : vector<32x48xf32>
      %cst_101 = arith.constant dense<0.000000e+00> : vector<32xf32>
      %271 = vector.multi_reduction <add>, %270, %cst_101 [1] : vector<32x48xf32> to vector<32xf32>
      %272 = vector.shape_cast %271 : vector<32xf32> to vector<32x1xf32>
      %cst_102 = arith.constant 4.800000e+01 : f32
      %273 = vector.broadcast %cst_102 : f32 to vector<32x1xf32>
      %274 = arith.divf %272, %273 : vector<32x1xf32>
      %275 = vector.broadcast %267 : vector<32x1xf32> to vector<32x48xf32>
      %276 = arith.subf %261, %275 : vector<32x48xf32>
      %cst_103 = arith.constant 9.99999974E-6 : f32
      %277 = vector.broadcast %cst_103 : f32 to vector<32x1xf32>
      %278 = arith.addf %274, %277 : vector<32x1xf32>
      %279 = math.rsqrt %278 : vector<32x1xf32>
      %280 = vector.broadcast %279 : vector<32x1xf32> to vector<32x48xf32>
      %281 = arith.mulf %276, %280 : vector<32x48xf32>
      %282 = vector.broadcast %262 : vector<1x48xf32> to vector<32x48xf32>
      %283 = arith.mulf %281, %282 : vector<32x48xf32>
      %284 = vector.broadcast %263 : vector<1x48xf32> to vector<32x48xf32>
      %285 = arith.addf %283, %284 : vector<32x48xf32>
      %286 = arith.truncf %285 : vector<32x48xf32> to vector<32x48xbf16>
      %c0_104 = arith.constant 0 : index
      %c0_105 = arith.constant 0 : index
      %287 = vector.load %arg4[%c0_104, %c0_105] : memref<48x32xbf16, #tpu.memory_space<vmem>>, vector<48x32xbf16>
      %cst_106 = arith.constant dense<0.000000e+00> : vector<32x32xf32>
      %288 = tpu.matmul %286, %287, %cst_106 {dimension_numbers = #tpu.dot_dimension_numbers<[1], [0], [0], [1], [0, 0, 1, 1], [], []>} : vector<32x48xbf16>, vector<48x32xbf16>, vector<32x32xf32> -> vector<32x32xf32>
      %c0_107 = arith.constant 0 : index
      %c0_108 = arith.constant 0 : index
      %289 = vector.load %arg5[%c0_107, %c0_108] : memref<1x32xf32, #tpu.memory_space<vmem>>, vector<1x32xf32>
      %290 = vector.broadcast %289 : vector<1x32xf32> to vector<32x32xf32>
      %291 = arith.addf %288, %290 : vector<32x32xf32>
      %c0_109 = arith.constant 0 : index
      %c0_110 = arith.constant 0 : index
      %292 = vector.load %arg6[%c0_109, %c0_110] : memref<1x32xf32, #tpu.memory_space<vmem>>, vector<1x32xf32>
      %c0_111 = arith.constant 0 : index
      %c0_112 = arith.constant 0 : index
      %293 = vector.load %arg7[%c0_111, %c0_112] : memref<1x32xf32, #tpu.memory_space<vmem>>, vector<1x32xf32>
      %cst_113 = arith.constant dense<0.000000e+00> : vector<32xf32>
      %294 = vector.multi_reduction <add>, %291, %cst_113 [1] : vector<32x32xf32> to vector<32xf32>
      %295 = vector.shape_cast %294 : vector<32xf32> to vector<32x1xf32>
      %cst_114 = arith.constant 3.200000e+01 : f32
      %296 = vector.broadcast %cst_114 : f32 to vector<32x1xf32>
      %297 = arith.divf %295, %296 : vector<32x1xf32>
      %298 = vector.broadcast %297 : vector<32x1xf32> to vector<32x32xf32>
      %299 = arith.subf %291, %298 : vector<32x32xf32>
      %300 = arith.mulf %299, %299 : vector<32x32xf32>
      %cst_115 = arith.constant dense<0.000000e+00> : vector<32xf32>
      %301 = vector.multi_reduction <add>, %300, %cst_115 [1] : vector<32x32xf32> to vector<32xf32>
      %302 = vector.shape_cast %301 : vector<32xf32> to vector<32x1xf32>
      %cst_116 = arith.constant 3.200000e+01 : f32
      %303 = vector.broadcast %cst_116 : f32 to vector<32x1xf32>
      %304 = arith.divf %302, %303 : vector<32x1xf32>
      %305 = vector.broadcast %297 : vector<32x1xf32> to vector<32x32xf32>
      %306 = arith.subf %291, %305 : vector<32x32xf32>
      %cst_117 = arith.constant 9.99999974E-6 : f32
      %307 = vector.broadcast %cst_117 : f32 to vector<32x1xf32>
      %308 = arith.addf %304, %307 : vector<32x1xf32>
      %309 = math.rsqrt %308 : vector<32x1xf32>
      %310 = vector.broadcast %309 : vector<32x1xf32> to vector<32x32xf32>
      %311 = arith.mulf %306, %310 : vector<32x32xf32>
      %312 = vector.broadcast %292 : vector<1x32xf32> to vector<32x32xf32>
      %313 = arith.mulf %311, %312 : vector<32x32xf32>
      %314 = vector.broadcast %293 : vector<1x32xf32> to vector<32x32xf32>
      %315 = arith.addf %313, %314 : vector<32x32xf32>
      %316 = vector.shape_cast %315 : vector<32x32xf32> to vector<2x16x32xf32>
      %c0_118 = arith.constant 0 : index
      %c0_119 = arith.constant 0 : index
      %317 = vector.load %arg9[%c0_118, %c0_119] : memref<17x32xf32, #tpu.memory_space<vmem>>, vector<17x32xf32>
      %c0_120 = arith.constant 0 : index
      %c0_121 = arith.constant 0 : index
      %318 = vector.load %arg8[%c0_120, %c0_121] : memref<1x32xf32, #tpu.memory_space<vmem>>, vector<1x32xf32>
      %319 = vector.extract_strided_slice %317 {offsets = [0, 0], sizes = [1, 32], strides = [1, 1]} : vector<17x32xf32> to vector<1x32xf32>
      %320 = arith.addf %318, %319 : vector<1x32xf32>
      %321 = vector.extract_strided_slice %317 {offsets = [1, 0], sizes = [16, 32], strides = [1, 1]} : vector<17x32xf32> to vector<16x32xf32>
      %cst_122 = arith.constant 0.000000e+00 : f32
      %322 = vector.broadcast %cst_122 : f32 to vector<48x32xf32>
      %c0_123 = arith.constant 0 : index
      %c0_124 = arith.constant 0 : index
      %323 = vector.load %arg26[%c0_123, %c0_124] : memref<48x32xf32, #tpu.memory_space<vmem>>, vector<48x32xf32>
      tpu.vector_store %arg26[%c0_123, %c0_124], %322 {strides = array<i32>} : memref<48x32xf32, #tpu.memory_space<vmem>>, vector<48x32xf32>,
      %324 = vector.extract_strided_slice %316 {offsets = [0, 0, 0], sizes = [1, 16, 32], strides = [1, 1, 1]} : vector<2x16x32xf32> to vector<1x16x32xf32>
      %325 = vector.shape_cast %324 : vector<1x16x32xf32> to vector<16x32xf32>
      %326 = arith.addf %325, %321 : vector<16x32xf32>
      %c1 = arith.constant 1 : index
      %c0_125 = arith.constant 0 : index
      %327 = vector.load %arg26[%c1, %c0_125] : memref<48x32xf32, #tpu.memory_space<vmem>>, vector<16x32xf32>
      tpu.vector_store %arg26[%c1, %c0_125], %326 {strides = array<i32>} : memref<48x32xf32, #tpu.memory_space<vmem>>, vector<16x32xf32>,
      %c0_126 = arith.constant 0 : index
      %c0_127 = arith.constant 0 : index
      %328 = vector.load %arg26[%c0_126, %c0_127] : memref<48x32xf32, #tpu.memory_space<vmem>>, vector<1x32xf32>
      tpu.vector_store %arg26[%c0_126, %c0_127], %320 {strides = array<i32>} : memref<48x32xf32, #tpu.memory_space<vmem>>, vector<1x32xf32>,
      %329 = vector.extract_strided_slice %316 {offsets = [1, 0, 0], sizes = [1, 16, 32], strides = [1, 1, 1]} : vector<2x16x32xf32> to vector<1x16x32xf32>
      %330 = vector.shape_cast %329 : vector<1x16x32xf32> to vector<16x32xf32>
      %331 = arith.addf %330, %321 : vector<16x32xf32>
      %c25 = arith.constant 25 : index
      %c0_128 = arith.constant 0 : index
      %332 = vector.load %arg26[%c25, %c0_128] : memref<48x32xf32, #tpu.memory_space<vmem>>, vector<16x32xf32>
      tpu.vector_store %arg26[%c25, %c0_128], %331 {strides = array<i32>} : memref<48x32xf32, #tpu.memory_space<vmem>>, vector<16x32xf32>,
      %c24 = arith.constant 24 : index
      %c0_129 = arith.constant 0 : index
      %333 = vector.load %arg26[%c24, %c0_129] : memref<48x32xf32, #tpu.memory_space<vmem>>, vector<1x32xf32>
      tpu.vector_store %arg26[%c24, %c0_129], %320 {strides = array<i32>} : memref<48x32xf32, #tpu.memory_space<vmem>>, vector<1x32xf32>,
    } else {
    }
    %c0 = arith.constant 0 : index
    %c0_1 = arith.constant 0 : index
    %3 = vector.load %arg26[%c0, %c0_1] : memref<48x32xf32, #tpu.memory_space<vmem>>, vector<48x32xf32>
    %4 = tpu.iota {dimensions = array<i32: 1>} : vector<24x24xi32>
    %c17_i32 = arith.constant 17 : i32
    %5 = vector.broadcast %c17_i32 : i32 to vector<24x24xi32>
    %6 = arith.cmpi slt, %4, %5 : vector<24x24xi32>
    %cst = arith.constant 0.000000e+00 : f32
    %cst_2 = arith.constant -1.000000e+30 : f32
    %7 = vector.broadcast %cst : f32 to vector<24x24xf32>
    %8 = vector.broadcast %cst_2 : f32 to vector<24x24xf32>
    %9 = arith.select %6, %7, %8 : vector<24x24xi1>, vector<24x24xf32>
    %10 = vector.shape_cast %9 : vector<24x24xf32> to vector<1x24x24xf32>
    %c0_3 = arith.constant 0 : index
    %c0_4 = arith.constant 0 : index
    %c0_5 = arith.constant 0 : index
    %11 = vector.load %arg10[%c0_3, %c0_4, %c0_5] : memref<1x1x32xf32, #tpu.memory_space<vmem>>, vector<1x1x32xf32>
    %12 = vector.shape_cast %11 : vector<1x1x32xf32> to vector<1x32xf32>
    %c0_6 = arith.constant 0 : index
    %c0_7 = arith.constant 0 : index
    %c0_8 = arith.constant 0 : index
    %13 = vector.load %arg11[%c0_6, %c0_7, %c0_8] : memref<1x1x32xf32, #tpu.memory_space<vmem>>, vector<1x1x32xf32>
    %14 = vector.shape_cast %13 : vector<1x1x32xf32> to vector<1x32xf32>
    %cst_9 = arith.constant dense<0.000000e+00> : vector<48xf32>
    %15 = vector.multi_reduction <add>, %3, %cst_9 [1] : vector<48x32xf32> to vector<48xf32>
    %16 = vector.shape_cast %15 : vector<48xf32> to vector<48x1xf32>
    %cst_10 = arith.constant 3.200000e+01 : f32
    %17 = vector.broadcast %cst_10 : f32 to vector<48x1xf32>
    %18 = arith.divf %16, %17 : vector<48x1xf32>
    %19 = vector.broadcast %18 : vector<48x1xf32> to vector<48x32xf32>
    %20 = arith.subf %3, %19 : vector<48x32xf32>
    %21 = arith.mulf %20, %20 : vector<48x32xf32>
    %cst_11 = arith.constant dense<0.000000e+00> : vector<48xf32>
    %22 = vector.multi_reduction <add>, %21, %cst_11 [1] : vector<48x32xf32> to vector<48xf32>
    %23 = vector.shape_cast %22 : vector<48xf32> to vector<48x1xf32>
    %cst_12 = arith.constant 3.200000e+01 : f32
    %24 = vector.broadcast %cst_12 : f32 to vector<48x1xf32>
    %25 = arith.divf %23, %24 : vector<48x1xf32>
    %26 = vector.broadcast %18 : vector<48x1xf32> to vector<48x32xf32>
    %27 = arith.subf %3, %26 : vector<48x32xf32>
    %cst_13 = arith.constant 9.99999974E-6 : f32
    %28 = vector.broadcast %cst_13 : f32 to vector<48x1xf32>
    %29 = arith.addf %25, %28 : vector<48x1xf32>
    %30 = math.rsqrt %29 : vector<48x1xf32>
    %31 = vector.broadcast %30 : vector<48x1xf32> to vector<48x32xf32>
    %32 = arith.mulf %27, %31 : vector<48x32xf32>
    %33 = vector.broadcast %12 : vector<1x32xf32> to vector<48x32xf32>
    %34 = arith.mulf %32, %33 : vector<48x32xf32>
    %35 = vector.broadcast %14 : vector<1x32xf32> to vector<48x32xf32>
    %36 = arith.addf %34, %35 : vector<48x32xf32>
    %37 = arith.truncf %36 : vector<48x32xf32> to vector<48x32xbf16>
    %c0_14 = arith.constant 0 : index
    %c0_15 = arith.constant 0 : index
    %c0_16 = arith.constant 0 : index
    %38 = vector.load %arg12[%c0_14, %c0_15, %c0_16] : memref<1x32x96xbf16, #tpu.memory_space<vmem>>, vector<1x32x96xbf16>
    %39 = vector.shape_cast %38 : vector<1x32x96xbf16> to vector<32x96xbf16>
    %cst_17 = arith.constant dense<0.000000e+00> : vector<48x96xf32>
    %40 = tpu.matmul %37, %39, %cst_17 {dimension_numbers = #tpu.dot_dimension_numbers<[1], [0], [0], [1], [0, 0, 1, 1], [], []>} : vector<48x32xbf16>, vector<32x96xbf16>, vector<48x96xf32> -> vector<48x96xf32>
    %c0_18 = arith.constant 0 : index
    %c0_19 = arith.constant 0 : index
    %c0_20 = arith.constant 0 : index
    %41 = vector.load %arg13[%c0_18, %c0_19, %c0_20] : memref<1x32x32xbf16, #tpu.memory_space<vmem>>, vector<1x32x32xbf16>
    %42 = vector.shape_cast %41 : vector<1x32x32xbf16> to vector<32x32xbf16>
    %cst_21 = arith.constant 0.000000e+00 : f32
    %43 = vector.broadcast %cst_21 : f32 to vector<48x32xf32>
    %44 = vector.extract_strided_slice %40 {offsets = [0, 0], sizes = [48, 8], strides = [1, 1]} : vector<48x96xf32> to vector<48x8xf32>
    %45 = arith.truncf %44 : vector<48x8xf32> to vector<48x8xbf16>
    %46 = vector.shape_cast %45 : vector<48x8xbf16> to vector<2x24x8xbf16>
    %47 = vector.extract_strided_slice %40 {offsets = [0, 32], sizes = [48, 8], strides = [1, 1]} : vector<48x96xf32> to vector<48x8xf32>
    %48 = arith.truncf %47 : vector<48x8xf32> to vector<48x8xbf16>
    %49 = vector.shape_cast %48 : vector<48x8xbf16> to vector<2x24x8xbf16>
    %50 = vector.extract_strided_slice %40 {offsets = [0, 64], sizes = [48, 8], strides = [1, 1]} : vector<48x96xf32> to vector<48x8xf32>
    %51 = arith.truncf %50 : vector<48x8xf32> to vector<48x8xbf16>
    %52 = vector.shape_cast %51 : vector<48x8xbf16> to vector<2x24x8xbf16>
    "tpu.trace_start"() <{level = 10 : i32, message = "bnd,bmd->bnm"}> : () -> ()
    %cst_22 = arith.constant dense<0.000000e+00> : vector<2x24x24xf32>
    %53 = tpu.matmul %46, %49, %cst_22 {dimension_numbers = #tpu.dot_dimension_numbers<[2], [2], [1], [1], [0, 0, 0, 1, 1, 1], [0], [0]>} : vector<2x24x8xbf16>, vector<2x24x8xbf16>, vector<2x24x24xf32> -> vector<2x24x24xf32>
    "tpu.trace_stop"() : () -> ()
    %cst_23 = arith.constant 0.353553385 : f32
    %54 = vector.broadcast %cst_23 : f32 to vector<2x24x24xf32>
    %55 = arith.mulf %53, %54 : vector<2x24x24xf32>
    %56 = vector.broadcast %10 : vector<1x24x24xf32> to vector<2x24x24xf32>
    %57 = arith.addf %55, %56 : vector<2x24x24xf32>
    %cst_24 = arith.constant dense<0xFF800000> : vector<2x24xf32>
    %58 = vector.multi_reduction <maximumf>, %57, %cst_24 [2] : vector<2x24x24xf32> to vector<2x24xf32>
    %59 = vector.shape_cast %58 : vector<2x24xf32> to vector<2x24x1xf32>
    %60 = vector.broadcast %59 : vector<2x24x1xf32> to vector<2x24x24xf32>
    %61 = arith.subf %57, %60 : vector<2x24x24xf32>
    %62 = math.exp %61 : vector<2x24x24xf32>
    %cst_25 = arith.constant dense<0.000000e+00> : vector<2x24xf32>
    %63 = vector.multi_reduction <add>, %62, %cst_25 [2] : vector<2x24x24xf32> to vector<2x24xf32>
    %64 = vector.shape_cast %63 : vector<2x24xf32> to vector<2x24x1xf32>
    %65 = tpu.reciprocal %64 {approx = true} : vector<2x24x1xf32> -> vector<2x24x1xf32>
    %66 = vector.broadcast %65 : vector<2x24x1xf32> to vector<2x24x24xf32>
    %67 = arith.mulf %62, %66 : vector<2x24x24xf32>
    %68 = arith.truncf %67 : vector<2x24x24xf32> to vector<2x24x24xbf16>
    "tpu.trace_start"() <{level = 10 : i32, message = "bnm,bmd->bnd"}> : () -> ()
    %cst_26 = arith.constant dense<0.000000e+00> : vector<2x24x8xf32>
    %69 = tpu.matmul %68, %52, %cst_26 {dimension_numbers = #tpu.dot_dimension_numbers<[2], [1], [1], [2], [0, 0, 0, 1, 1, 2], [0], [0]>} : vector<2x24x24xbf16>, vector<2x24x8xbf16>, vector<2x24x8xf32> -> vector<2x24x8xf32>
    "tpu.trace_stop"() : () -> ()
    %70 = vector.shape_cast %69 : vector<2x24x8xf32> to vector<48x8xf32>
    %71 = arith.truncf %70 : vector<48x8xf32> to vector<48x8xbf16>
    %72 = vector.extract_strided_slice %42 {offsets = [0, 0], sizes = [8, 32], strides = [1, 1]} : vector<32x32xbf16> to vector<8x32xbf16>
    %cst_27 = arith.constant dense<0.000000e+00> : vector<48x32xf32>
    %73 = tpu.matmul %71, %72, %cst_27 {dimension_numbers = #tpu.dot_dimension_numbers<[1], [0], [0], [1], [0, 0, 1, 1], [], []>} : vector<48x8xbf16>, vector<8x32xbf16>, vector<48x32xf32> -> vector<48x32xf32>
    %74 = arith.addf %43, %73 : vector<48x32xf32>
    %75 = vector.extract_strided_slice %40 {offsets = [0, 8], sizes = [48, 8], strides = [1, 1]} : vector<48x96xf32> to vector<48x8xf32>
    %76 = arith.truncf %75 : vector<48x8xf32> to vector<48x8xbf16>
    %77 = vector.shape_cast %76 : vector<48x8xbf16> to vector<2x24x8xbf16>
    %78 = vector.extract_strided_slice %40 {offsets = [0, 40], sizes = [48, 8], strides = [1, 1]} : vector<48x96xf32> to vector<48x8xf32>
    %79 = arith.truncf %78 : vector<48x8xf32> to vector<48x8xbf16>
    %80 = vector.shape_cast %79 : vector<48x8xbf16> to vector<2x24x8xbf16>
    %81 = vector.extract_strided_slice %40 {offsets = [0, 72], sizes = [48, 8], strides = [1, 1]} : vector<48x96xf32> to vector<48x8xf32>
    %82 = arith.truncf %81 : vector<48x8xf32> to vector<48x8xbf16>
    %83 = vector.shape_cast %82 : vector<48x8xbf16> to vector<2x24x8xbf16>
    "tpu.trace_start"() <{level = 10 : i32, message = "bnd,bmd->bnm"}> : () -> ()
    %cst_28 = arith.constant dense<0.000000e+00> : vector<2x24x24xf32>
    %84 = tpu.matmul %77, %80, %cst_28 {dimension_numbers = #tpu.dot_dimension_numbers<[2], [2], [1], [1], [0, 0, 0, 1, 1, 1], [0], [0]>} : vector<2x24x8xbf16>, vector<2x24x8xbf16>, vector<2x24x24xf32> -> vector<2x24x24xf32>
    "tpu.trace_stop"() : () -> ()
    %cst_29 = arith.constant 0.353553385 : f32
    %85 = vector.broadcast %cst_29 : f32 to vector<2x24x24xf32>
    %86 = arith.mulf %84, %85 : vector<2x24x24xf32>
    %87 = vector.broadcast %10 : vector<1x24x24xf32> to vector<2x24x24xf32>
    %88 = arith.addf %86, %87 : vector<2x24x24xf32>
    %cst_30 = arith.constant dense<0xFF800000> : vector<2x24xf32>
    %89 = vector.multi_reduction <maximumf>, %88, %cst_30 [2] : vector<2x24x24xf32> to vector<2x24xf32>
    %90 = vector.shape_cast %89 : vector<2x24xf32> to vector<2x24x1xf32>
    %91 = vector.broadcast %90 : vector<2x24x1xf32> to vector<2x24x24xf32>
    %92 = arith.subf %88, %91 : vector<2x24x24xf32>
    %93 = math.exp %92 : vector<2x24x24xf32>
    %cst_31 = arith.constant dense<0.000000e+00> : vector<2x24xf32>
    %94 = vector.multi_reduction <add>, %93, %cst_31 [2] : vector<2x24x24xf32> to vector<2x24xf32>
    %95 = vector.shape_cast %94 : vector<2x24xf32> to vector<2x24x1xf32>
    %96 = tpu.reciprocal %95 {approx = true} : vector<2x24x1xf32> -> vector<2x24x1xf32>
    %97 = vector.broadcast %96 : vector<2x24x1xf32> to vector<2x24x24xf32>
    %98 = arith.mulf %93, %97 : vector<2x24x24xf32>
    %99 = arith.truncf %98 : vector<2x24x24xf32> to vector<2x24x24xbf16>
    "tpu.trace_start"() <{level = 10 : i32, message = "bnm,bmd->bnd"}> : () -> ()
    %cst_32 = arith.constant dense<0.000000e+00> : vector<2x24x8xf32>
    %100 = tpu.matmul %99, %83, %cst_32 {dimension_numbers = #tpu.dot_dimension_numbers<[2], [1], [1], [2], [0, 0, 0, 1, 1, 2], [0], [0]>} : vector<2x24x24xbf16>, vector<2x24x8xbf16>, vector<2x24x8xf32> -> vector<2x24x8xf32>
    "tpu.trace_stop"() : () -> ()
    %101 = vector.shape_cast %100 : vector<2x24x8xf32> to vector<48x8xf32>
    %102 = arith.truncf %101 : vector<48x8xf32> to vector<48x8xbf16>
    %103 = vector.extract_strided_slice %42 {offsets = [8, 0], sizes = [8, 32], strides = [1, 1]} : vector<32x32xbf16> to vector<8x32xbf16>
    %cst_33 = arith.constant dense<0.000000e+00> : vector<48x32xf32>
    %104 = tpu.matmul %102, %103, %cst_33 {dimension_numbers = #tpu.dot_dimension_numbers<[1], [0], [0], [1], [0, 0, 1, 1], [], []>} : vector<48x8xbf16>, vector<8x32xbf16>, vector<48x32xf32> -> vector<48x32xf32>
    %105 = arith.addf %74, %104 : vector<48x32xf32>
    %106 = vector.extract_strided_slice %40 {offsets = [0, 16], sizes = [48, 8], strides = [1, 1]} : vector<48x96xf32> to vector<48x8xf32>
    %107 = arith.truncf %106 : vector<48x8xf32> to vector<48x8xbf16>
    %108 = vector.shape_cast %107 : vector<48x8xbf16> to vector<2x24x8xbf16>
    %109 = vector.extract_strided_slice %40 {offsets = [0, 48], sizes = [48, 8], strides = [1, 1]} : vector<48x96xf32> to vector<48x8xf32>
    %110 = arith.truncf %109 : vector<48x8xf32> to vector<48x8xbf16>
    %111 = vector.shape_cast %110 : vector<48x8xbf16> to vector<2x24x8xbf16>
    %112 = vector.extract_strided_slice %40 {offsets = [0, 80], sizes = [48, 8], strides = [1, 1]} : vector<48x96xf32> to vector<48x8xf32>
    %113 = arith.truncf %112 : vector<48x8xf32> to vector<48x8xbf16>
    %114 = vector.shape_cast %113 : vector<48x8xbf16> to vector<2x24x8xbf16>
    "tpu.trace_start"() <{level = 10 : i32, message = "bnd,bmd->bnm"}> : () -> ()
    %cst_34 = arith.constant dense<0.000000e+00> : vector<2x24x24xf32>
    %115 = tpu.matmul %108, %111, %cst_34 {dimension_numbers = #tpu.dot_dimension_numbers<[2], [2], [1], [1], [0, 0, 0, 1, 1, 1], [0], [0]>} : vector<2x24x8xbf16>, vector<2x24x8xbf16>, vector<2x24x24xf32> -> vector<2x24x24xf32>
    "tpu.trace_stop"() : () -> ()
    %cst_35 = arith.constant 0.353553385 : f32
    %116 = vector.broadcast %cst_35 : f32 to vector<2x24x24xf32>
    %117 = arith.mulf %115, %116 : vector<2x24x24xf32>
    %118 = vector.broadcast %10 : vector<1x24x24xf32> to vector<2x24x24xf32>
    %119 = arith.addf %117, %118 : vector<2x24x24xf32>
    %cst_36 = arith.constant dense<0xFF800000> : vector<2x24xf32>
    %120 = vector.multi_reduction <maximumf>, %119, %cst_36 [2] : vector<2x24x24xf32> to vector<2x24xf32>
    %121 = vector.shape_cast %120 : vector<2x24xf32> to vector<2x24x1xf32>
    %122 = vector.broadcast %121 : vector<2x24x1xf32> to vector<2x24x24xf32>
    %123 = arith.subf %119, %122 : vector<2x24x24xf32>
    %124 = math.exp %123 : vector<2x24x24xf32>
    %cst_37 = arith.constant dense<0.000000e+00> : vector<2x24xf32>
    %125 = vector.multi_reduction <add>, %124, %cst_37 [2] : vector<2x24x24xf32> to vector<2x24xf32>
    %126 = vector.shape_cast %125 : vector<2x24xf32> to vector<2x24x1xf32>
    %127 = tpu.reciprocal %126 {approx = true} : vector<2x24x1xf32> -> vector<2x24x1xf32>
    %128 = vector.broadcast %127 : vector<2x24x1xf32> to vector<2x24x24xf32>
    %129 = arith.mulf %124, %128 : vector<2x24x24xf32>
    %130 = arith.truncf %129 : vector<2x24x24xf32> to vector<2x24x24xbf16>
    "tpu.trace_start"() <{level = 10 : i32, message = "bnm,bmd->bnd"}> : () -> ()
    %cst_38 = arith.constant dense<0.000000e+00> : vector<2x24x8xf32>
    %131 = tpu.matmul %130, %114, %cst_38 {dimension_numbers = #tpu.dot_dimension_numbers<[2], [1], [1], [2], [0, 0, 0, 1, 1, 2], [0], [0]>} : vector<2x24x24xbf16>, vector<2x24x8xbf16>, vector<2x24x8xf32> -> vector<2x24x8xf32>
    "tpu.trace_stop"() : () -> ()
    %132 = vector.shape_cast %131 : vector<2x24x8xf32> to vector<48x8xf32>
    %133 = arith.truncf %132 : vector<48x8xf32> to vector<48x8xbf16>
    %134 = vector.extract_strided_slice %42 {offsets = [16, 0], sizes = [8, 32], strides = [1, 1]} : vector<32x32xbf16> to vector<8x32xbf16>
    %cst_39 = arith.constant dense<0.000000e+00> : vector<48x32xf32>
    %135 = tpu.matmul %133, %134, %cst_39 {dimension_numbers = #tpu.dot_dimension_numbers<[1], [0], [0], [1], [0, 0, 1, 1], [], []>} : vector<48x8xbf16>, vector<8x32xbf16>, vector<48x32xf32> -> vector<48x32xf32>
    %136 = arith.addf %105, %135 : vector<48x32xf32>
    %137 = vector.extract_strided_slice %40 {offsets = [0, 24], sizes = [48, 8], strides = [1, 1]} : vector<48x96xf32> to vector<48x8xf32>
    %138 = arith.truncf %137 : vector<48x8xf32> to vector<48x8xbf16>
    %139 = vector.shape_cast %138 : vector<48x8xbf16> to vector<2x24x8xbf16>
    %140 = vector.extract_strided_slice %40 {offsets = [0, 56], sizes = [48, 8], strides = [1, 1]} : vector<48x96xf32> to vector<48x8xf32>
    %141 = arith.truncf %140 : vector<48x8xf32> to vector<48x8xbf16>
    %142 = vector.shape_cast %141 : vector<48x8xbf16> to vector<2x24x8xbf16>
    %143 = vector.extract_strided_slice %40 {offsets = [0, 88], sizes = [48, 8], strides = [1, 1]} : vector<48x96xf32> to vector<48x8xf32>
    %144 = arith.truncf %143 : vector<48x8xf32> to vector<48x8xbf16>
    %145 = vector.shape_cast %144 : vector<48x8xbf16> to vector<2x24x8xbf16>
    "tpu.trace_start"() <{level = 10 : i32, message = "bnd,bmd->bnm"}> : () -> ()
    %cst_40 = arith.constant dense<0.000000e+00> : vector<2x24x24xf32>
    %146 = tpu.matmul %139, %142, %cst_40 {dimension_numbers = #tpu.dot_dimension_numbers<[2], [2], [1], [1], [0, 0, 0, 1, 1, 1], [0], [0]>} : vector<2x24x8xbf16>, vector<2x24x8xbf16>, vector<2x24x24xf32> -> vector<2x24x24xf32>
    "tpu.trace_stop"() : () -> ()
    %cst_41 = arith.constant 0.353553385 : f32
    %147 = vector.broadcast %cst_41 : f32 to vector<2x24x24xf32>
    %148 = arith.mulf %146, %147 : vector<2x24x24xf32>
    %149 = vector.broadcast %10 : vector<1x24x24xf32> to vector<2x24x24xf32>
    %150 = arith.addf %148, %149 : vector<2x24x24xf32>
    %cst_42 = arith.constant dense<0xFF800000> : vector<2x24xf32>
    %151 = vector.multi_reduction <maximumf>, %150, %cst_42 [2] : vector<2x24x24xf32> to vector<2x24xf32>
    %152 = vector.shape_cast %151 : vector<2x24xf32> to vector<2x24x1xf32>
    %153 = vector.broadcast %152 : vector<2x24x1xf32> to vector<2x24x24xf32>
    %154 = arith.subf %150, %153 : vector<2x24x24xf32>
    %155 = math.exp %154 : vector<2x24x24xf32>
    %cst_43 = arith.constant dense<0.000000e+00> : vector<2x24xf32>
    %156 = vector.multi_reduction <add>, %155, %cst_43 [2] : vector<2x24x24xf32> to vector<2x24xf32>
    %157 = vector.shape_cast %156 : vector<2x24xf32> to vector<2x24x1xf32>
    %158 = tpu.reciprocal %157 {approx = true} : vector<2x24x1xf32> -> vector<2x24x1xf32>
    %159 = vector.broadcast %158 : vector<2x24x1xf32> to vector<2x24x24xf32>
    %160 = arith.mulf %155, %159 : vector<2x24x24xf32>
    %161 = arith.truncf %160 : vector<2x24x24xf32> to vector<2x24x24xbf16>
    "tpu.trace_start"() <{level = 10 : i32, message = "bnm,bmd->bnd"}> : () -> ()
    %cst_44 = arith.constant dense<0.000000e+00> : vector<2x24x8xf32>
    %162 = tpu.matmul %161, %145, %cst_44 {dimension_numbers = #tpu.dot_dimension_numbers<[2], [1], [1], [2], [0, 0, 0, 1, 1, 2], [0], [0]>} : vector<2x24x24xbf16>, vector<2x24x8xbf16>, vector<2x24x8xf32> -> vector<2x24x8xf32>
    "tpu.trace_stop"() : () -> ()
    %163 = vector.shape_cast %162 : vector<2x24x8xf32> to vector<48x8xf32>
    %164 = arith.truncf %163 : vector<48x8xf32> to vector<48x8xbf16>
    %165 = vector.extract_strided_slice %42 {offsets = [24, 0], sizes = [8, 32], strides = [1, 1]} : vector<32x32xbf16> to vector<8x32xbf16>
    %cst_45 = arith.constant dense<0.000000e+00> : vector<48x32xf32>
    %166 = tpu.matmul %164, %165, %cst_45 {dimension_numbers = #tpu.dot_dimension_numbers<[1], [0], [0], [1], [0, 0, 1, 1], [], []>} : vector<48x8xbf16>, vector<8x32xbf16>, vector<48x32xf32> -> vector<48x32xf32>
    %167 = arith.addf %136, %166 : vector<48x32xf32>
    %c0_46 = arith.constant 0 : index
    %c0_47 = arith.constant 0 : index
    %c0_48 = arith.constant 0 : index
    %168 = vector.load %arg14[%c0_46, %c0_47, %c0_48] : memref<1x1x32xf32, #tpu.memory_space<vmem>>, vector<1x1x32xf32>
    %169 = vector.shape_cast %168 : vector<1x1x32xf32> to vector<1x32xf32>
    %170 = vector.broadcast %169 : vector<1x32xf32> to vector<48x32xf32>
    %171 = arith.addf %167, %170 : vector<48x32xf32>
    %172 = arith.addf %171, %3 : vector<48x32xf32>
    %c0_49 = arith.constant 0 : index
    %c0_50 = arith.constant 0 : index
    %c0_51 = arith.constant 0 : index
    %173 = vector.load %arg15[%c0_49, %c0_50, %c0_51] : memref<1x1x32xf32, #tpu.memory_space<vmem>>, vector<1x1x32xf32>
    %174 = vector.shape_cast %173 : vector<1x1x32xf32> to vector<1x32xf32>
    %c0_52 = arith.constant 0 : index
    %c0_53 = arith.constant 0 : index
    %c0_54 = arith.constant 0 : index
    %175 = vector.load %arg16[%c0_52, %c0_53, %c0_54] : memref<1x1x32xf32, #tpu.memory_space<vmem>>, vector<1x1x32xf32>
    %176 = vector.shape_cast %175 : vector<1x1x32xf32> to vector<1x32xf32>
    %cst_55 = arith.constant dense<0.000000e+00> : vector<48xf32>
    %177 = vector.multi_reduction <add>, %172, %cst_55 [1] : vector<48x32xf32> to vector<48xf32>
    %178 = vector.shape_cast %177 : vector<48xf32> to vector<48x1xf32>
    %cst_56 = arith.constant 3.200000e+01 : f32
    %179 = vector.broadcast %cst_56 : f32 to vector<48x1xf32>
    %180 = arith.divf %178, %179 : vector<48x1xf32>
    %181 = vector.broadcast %180 : vector<48x1xf32> to vector<48x32xf32>
    %182 = arith.subf %172, %181 : vector<48x32xf32>
    %183 = arith.mulf %182, %182 : vector<48x32xf32>
    %cst_57 = arith.constant dense<0.000000e+00> : vector<48xf32>
    %184 = vector.multi_reduction <add>, %183, %cst_57 [1] : vector<48x32xf32> to vector<48xf32>
    %185 = vector.shape_cast %184 : vector<48xf32> to vector<48x1xf32>
    %cst_58 = arith.constant 3.200000e+01 : f32
    %186 = vector.broadcast %cst_58 : f32 to vector<48x1xf32>
    %187 = arith.divf %185, %186 : vector<48x1xf32>
    %188 = vector.broadcast %180 : vector<48x1xf32> to vector<48x32xf32>
    %189 = arith.subf %172, %188 : vector<48x32xf32>
    %cst_59 = arith.constant 9.99999974E-6 : f32
    %190 = vector.broadcast %cst_59 : f32 to vector<48x1xf32>
    %191 = arith.addf %187, %190 : vector<48x1xf32>
    %192 = math.rsqrt %191 : vector<48x1xf32>
    %193 = vector.broadcast %192 : vector<48x1xf32> to vector<48x32xf32>
    %194 = arith.mulf %189, %193 : vector<48x32xf32>
    %195 = vector.broadcast %174 : vector<1x32xf32> to vector<48x32xf32>
    %196 = arith.mulf %194, %195 : vector<48x32xf32>
    %197 = vector.broadcast %176 : vector<1x32xf32> to vector<48x32xf32>
    %198 = arith.addf %196, %197 : vector<48x32xf32>
    %199 = arith.truncf %198 : vector<48x32xf32> to vector<48x32xbf16>
    %c0_60 = arith.constant 0 : index
    %c0_61 = arith.constant 0 : index
    %c0_62 = arith.constant 0 : index
    %200 = vector.load %arg17[%c0_60, %c0_61, %c0_62] : memref<1x32x64xbf16, #tpu.memory_space<vmem>>, vector<1x32x64xbf16>
    %201 = vector.shape_cast %200 : vector<1x32x64xbf16> to vector<32x64xbf16>
    %cst_63 = arith.constant dense<0.000000e+00> : vector<48x64xf32>
    %202 = tpu.matmul %199, %201, %cst_63 {dimension_numbers = #tpu.dot_dimension_numbers<[1], [0], [0], [1], [0, 0, 1, 1], [], []>} : vector<48x32xbf16>, vector<32x64xbf16>, vector<48x64xf32> -> vector<48x64xf32>
    %c0_64 = arith.constant 0 : index
    %c0_65 = arith.constant 0 : index
    %c0_66 = arith.constant 0 : index
    %203 = vector.load %arg18[%c0_64, %c0_65, %c0_66] : memref<1x1x64xf32, #tpu.memory_space<vmem>>, vector<1x1x64xf32>
    %204 = vector.shape_cast %203 : vector<1x1x64xf32> to vector<1x64xf32>
    %205 = vector.broadcast %204 : vector<1x64xf32> to vector<48x64xf32>
    %206 = arith.addf %202, %205 : vector<48x64xf32>
    %cst_67 = arith.constant 5.000000e-01 : f32
    %207 = vector.broadcast %cst_67 : f32 to vector<48x64xf32>
    %208 = arith.mulf %207, %206 : vector<48x64xf32>
    %cst_68 = arith.constant 0.707106769 : f32
    %209 = vector.broadcast %cst_68 : f32 to vector<48x64xf32>
    %210 = arith.mulf %206, %209 : vector<48x64xf32>
    %cst_69 = arith.constant 0.000000e+00 : f32
    %211 = vector.broadcast %cst_69 : f32 to vector<48x64xf32>
    %212 = arith.cmpf oge, %210, %211 : vector<48x64xf32>
    %cst_70 = arith.constant 1.000000e+00 : f32
    %cst_71 = arith.constant -1.000000e+00 : f32
    %213 = vector.broadcast %cst_70 : f32 to vector<48x64xf32>
    %214 = vector.broadcast %cst_71 : f32 to vector<48x64xf32>
    %215 = arith.select %212, %213, %214 : vector<48x64xi1>, vector<48x64xf32>
    %216 = math.absf %210 : vector<48x64xf32>
    %cst_72 = arith.constant 0.327591091 : f32
    %217 = vector.broadcast %cst_72 : f32 to vector<48x64xf32>
    %218 = arith.mulf %217, %216 : vector<48x64xf32>
    %cst_73 = arith.constant 1.000000e+00 : f32
    %219 = vector.broadcast %cst_73 : f32 to vector<48x64xf32>
    %220 = arith.addf %219, %218 : vector<48x64xf32>
    %cst_74 = arith.constant 1.000000e+00 : f32
    %221 = vector.broadcast %cst_74 : f32 to vector<48x64xf32>
    %222 = arith.divf %221, %220 : vector<48x64xf32>
    %cst_75 = arith.constant 1.06140542 : f32
    %223 = vector.broadcast %cst_75 : f32 to vector<48x64xf32>
    %224 = arith.mulf %223, %222 : vector<48x64xf32>
    %cst_76 = arith.constant -1.45315206 : f32
    %225 = vector.broadcast %cst_76 : f32 to vector<48x64xf32>
    %226 = arith.addf %224, %225 : vector<48x64xf32>
    %227 = arith.mulf %226, %222 : vector<48x64xf32>
    %cst_77 = arith.constant 1.42141378 : f32
    %228 = vector.broadcast %cst_77 : f32 to vector<48x64xf32>
    %229 = arith.addf %227, %228 : vector<48x64xf32>
    %230 = arith.mulf %229, %222 : vector<48x64xf32>
    %cst_78 = arith.constant -0.284496725 : f32
    %231 = vector.broadcast %cst_78 : f32 to vector<48x64xf32>
    %232 = arith.addf %230, %231 : vector<48x64xf32>
    %233 = arith.mulf %232, %222 : vector<48x64xf32>
    %cst_79 = arith.constant 0.254829586 : f32
    %234 = vector.broadcast %cst_79 : f32 to vector<48x64xf32>
    %235 = arith.addf %233, %234 : vector<48x64xf32>
    %236 = arith.mulf %235, %222 : vector<48x64xf32>
    %cst_80 = arith.constant 0.000000e+00 : f32
    %237 = vector.broadcast %cst_80 : f32 to vector<48x64xf32>
    %238 = arith.subf %237, %216 : vector<48x64xf32>
    %239 = arith.mulf %238, %216 : vector<48x64xf32>
    %240 = math.exp %239 : vector<48x64xf32>
    %241 = arith.mulf %236, %240 : vector<48x64xf32>
    %cst_81 = arith.constant 1.000000e+00 : f32
    %242 = vector.broadcast %cst_81 : f32 to vector<48x64xf32>
    %243 = arith.subf %242, %241 : vector<48x64xf32>
    %244 = arith.mulf %215, %243 : vector<48x64xf32>
    %cst_82 = arith.constant 1.000000e+00 : f32
    %245 = vector.broadcast %cst_82 : f32 to vector<48x64xf32>
    %246 = arith.addf %245, %244 : vector<48x64xf32>
    %247 = arith.mulf %208, %246 : vector<48x64xf32>
    %248 = arith.truncf %247 : vector<48x64xf32> to vector<48x64xbf16>
    %c0_83 = arith.constant 0 : index
    %c0_84 = arith.constant 0 : index
    %c0_85 = arith.constant 0 : index
    %249 = vector.load %arg19[%c0_83, %c0_84, %c0_85] : memref<1x64x32xbf16, #tpu.memory_space<vmem>>, vector<1x64x32xbf16>
    %250 = vector.shape_cast %249 : vector<1x64x32xbf16> to vector<64x32xbf16>
    %cst_86 = arith.constant dense<0.000000e+00> : vector<48x32xf32>
    %251 = tpu.matmul %248, %250, %cst_86 {dimension_numbers = #tpu.dot_dimension_numbers<[1], [0], [0], [1], [0, 0, 1, 1], [], []>} : vector<48x64xbf16>, vector<64x32xbf16>, vector<48x32xf32> -> vector<48x32xf32>
    %c0_87 = arith.constant 0 : index
    %c0_88 = arith.constant 0 : index
    %c0_89 = arith.constant 0 : index
    %252 = vector.load %arg20[%c0_87, %c0_88, %c0_89] : memref<1x1x32xf32, #tpu.memory_space<vmem>>, vector<1x1x32xf32>
    %253 = vector.shape_cast %252 : vector<1x1x32xf32> to vector<1x32xf32>
    %254 = vector.broadcast %253 : vector<1x32xf32> to vector<48x32xf32>
    %255 = arith.addf %251, %254 : vector<48x32xf32>
    %256 = arith.addf %255, %172 : vector<48x32xf32>
    %c0_90 = arith.constant 0 : index
    %c0_91 = arith.constant 0 : index
    %257 = vector.load %arg26[%c0_90, %c0_91] : memref<48x32xf32, #tpu.memory_space<vmem>>, vector<48x32xf32>
    tpu.vector_store %arg26[%c0_90, %c0_91], %256 {strides = array<i32>} : memref<48x32xf32, #tpu.memory_space<vmem>>, vector<48x32xf32>,
    %c1_i32 = arith.constant 1 : i32
    %258 = arith.cmpi eq, %arg0, %c1_i32 : i32
    %259 = arith.extui %258 : i1 to i32
    %c0_i32_92 = arith.constant 0 : i32
    %260 = arith.cmpi ne, %259, %c0_i32_92 : i32
    scf.if %260 {
      %261 = vector.shape_cast %256 : vector<48x32xf32> to vector<2x24x32xf32>
      %262 = vector.extract_strided_slice %261 {offsets = [0, 0, 0], sizes = [2, 1, 32], strides = [1, 1, 1]} : vector<2x24x32xf32> to vector<2x1x32xf32>
      %263 = vector.shape_cast %262 : vector<2x1x32xf32> to vector<2x32xf32>
      %c0_93 = arith.constant 0 : index
      %c0_94 = arith.constant 0 : index
      %264 = vector.load %arg21[%c0_93, %c0_94] : memref<1x32xf32, #tpu.memory_space<vmem>>, vector<1x32xf32>
      %c0_95 = arith.constant 0 : index
      %c0_96 = arith.constant 0 : index
      %265 = vector.load %arg22[%c0_95, %c0_96] : memref<1x32xf32, #tpu.memory_space<vmem>>, vector<1x32xf32>
      %cst_97 = arith.constant dense<0.000000e+00> : vector<2xf32>
      %266 = vector.multi_reduction <add>, %263, %cst_97 [1] : vector<2x32xf32> to vector<2xf32>
      %267 = vector.shape_cast %266 : vector<2xf32> to vector<2x1xf32>
      %cst_98 = arith.constant 3.200000e+01 : f32
      %268 = vector.broadcast %cst_98 : f32 to vector<2x1xf32>
      %269 = arith.divf %267, %268 : vector<2x1xf32>
      %270 = vector.broadcast %269 : vector<2x1xf32> to vector<2x32xf32>
      %271 = arith.subf %263, %270 : vector<2x32xf32>
      %272 = arith.mulf %271, %271 : vector<2x32xf32>
      %cst_99 = arith.constant dense<0.000000e+00> : vector<2xf32>
      %273 = vector.multi_reduction <add>, %272, %cst_99 [1] : vector<2x32xf32> to vector<2xf32>
      %274 = vector.shape_cast %273 : vector<2xf32> to vector<2x1xf32>
      %cst_100 = arith.constant 3.200000e+01 : f32
      %275 = vector.broadcast %cst_100 : f32 to vector<2x1xf32>
      %276 = arith.divf %274, %275 : vector<2x1xf32>
      %277 = vector.broadcast %269 : vector<2x1xf32> to vector<2x32xf32>
      %278 = arith.subf %263, %277 : vector<2x32xf32>
      %cst_101 = arith.constant 9.99999974E-6 : f32
      %279 = vector.broadcast %cst_101 : f32 to vector<2x1xf32>
      %280 = arith.addf %276, %279 : vector<2x1xf32>
      %281 = math.rsqrt %280 : vector<2x1xf32>
      %282 = vector.broadcast %281 : vector<2x1xf32> to vector<2x32xf32>
      %283 = arith.mulf %278, %282 : vector<2x32xf32>
      %284 = vector.broadcast %264 : vector<1x32xf32> to vector<2x32xf32>
      %285 = arith.mulf %283, %284 : vector<2x32xf32>
      %286 = vector.broadcast %265 : vector<1x32xf32> to vector<2x32xf32>
      %287 = arith.addf %285, %286 : vector<2x32xf32>
      %288 = arith.truncf %287 : vector<2x32xf32> to vector<2x32xbf16>
      %c0_102 = arith.constant 0 : index
      %c0_103 = arith.constant 0 : index
      %289 = vector.load %arg23[%c0_102, %c0_103] : memref<32x10xbf16, #tpu.memory_space<vmem>>, vector<32x10xbf16>
      %cst_104 = arith.constant dense<0.000000e+00> : vector<2x10xf32>
      %290 = tpu.matmul %288, %289, %cst_104 {dimension_numbers = #tpu.dot_dimension_numbers<[1], [0], [0], [1], [0, 0, 1, 1], [], []>} : vector<2x32xbf16>, vector<32x10xbf16>, vector<2x10xf32> -> vector<2x10xf32>
      %c0_105 = arith.constant 0 : index
      %c0_106 = arith.constant 0 : index
      %291 = vector.load %arg24[%c0_105, %c0_106] : memref<1x10xf32, #tpu.memory_space<vmem>>, vector<1x10xf32>
      %292 = vector.broadcast %291 : vector<1x10xf32> to vector<2x10xf32>
      %293 = arith.addf %290, %292 : vector<2x10xf32>
      %c0_107 = arith.constant 0 : index
      %c0_108 = arith.constant 0 : index
      %294 = vector.load %arg25[%c0_107, %c0_108] : memref<2x10xf32, #tpu.memory_space<vmem>>, vector<2x10xf32>
      tpu.vector_store %arg25[%c0_107, %c0_108], %293 {strides = array<i32>} : memref<2x10xf32, #tpu.memory_space<vmem>>, vector<2x10xf32>,
    } else {
    }
    return
  }
  func.func @transform_0(%arg0: i32) -> (i32, i32) {
    %c0_i32 = arith.constant 0 : i32
    %c0_i32_0 = arith.constant 0 : i32
    %c0_i32_1 = arith.constant 0 : i32
    return %c0_i32, %c0_i32_0 : i32, i32
  }
  func.func @transform_1(%arg0: i32) -> (i32, i32) {
    %c0_i32 = arith.constant 0 : i32
    %c0_i32_0 = arith.constant 0 : i32
    %c0_i32_1 = arith.constant 0 : i32
    return %c0_i32, %c0_i32_0 : i32, i32
  }
  func.func @transform_2(%arg0: i32) -> (i32, i32) {
    %c0_i32 = arith.constant 0 : i32
    %c0_i32_0 = arith.constant 0 : i32
    %c0_i32_1 = arith.constant 0 : i32
    return %c0_i32, %c0_i32_0 : i32, i32
  }
  func.func @transform_3(%arg0: i32) -> (i32, i32) {
    %c0_i32 = arith.constant 0 : i32
    %c0_i32_0 = arith.constant 0 : i32
    %c0_i32_1 = arith.constant 0 : i32
    return %c0_i32, %c0_i32_0 : i32, i32
  }
  func.func @transform_4(%arg0: i32) -> (i32, i32) {
    %c0_i32 = arith.constant 0 : i32
    %c0_i32_0 = arith.constant 0 : i32
    %c0_i32_1 = arith.constant 0 : i32
    return %c0_i32, %c0_i32_0 : i32, i32
  }
  func.func @transform_5(%arg0: i32) -> (i32, i32) {
    %c0_i32 = arith.constant 0 : i32
    %c0_i32_0 = arith.constant 0 : i32
    %c0_i32_1 = arith.constant 0 : i32
    return %c0_i32, %c0_i32_0 : i32, i32
  }
  func.func @transform_6(%arg0: i32) -> (i32, i32) {
    %c0_i32 = arith.constant 0 : i32
    %c0_i32_0 = arith.constant 0 : i32
    %c0_i32_1 = arith.constant 0 : i32
    return %c0_i32, %c0_i32_0 : i32, i32
  }
  func.func @transform_7(%arg0: i32) -> (i32, i32) {
    %c0_i32 = arith.constant 0 : i32
    %c0_i32_0 = arith.constant 0 : i32
    %c0_i32_1 = arith.constant 0 : i32
    return %c0_i32, %c0_i32_0 : i32, i32
  }
  func.func @transform_8(%arg0: i32) -> (i32, i32) {
    %c0_i32 = arith.constant 0 : i32
    %c0_i32_0 = arith.constant 0 : i32
    %c0_i32_1 = arith.constant 0 : i32
    return %c0_i32, %c0_i32_0 : i32, i32
  }
  func.func @transform_9(%arg0: i32) -> (i32, i32, i32) {
    %c0_i32 = arith.constant 0 : i32
    %c0_i32_0 = arith.constant 0 : i32
    %c0_i32_1 = arith.constant 0 : i32
    return %arg0, %c0_i32, %c0_i32_0 : i32, i32, i32
  }
  func.func @transform_10(%arg0: i32) -> (i32, i32, i32) {
    %c0_i32 = arith.constant 0 : i32
    %c0_i32_0 = arith.constant 0 : i32
    %c0_i32_1 = arith.constant 0 : i32
    return %arg0, %c0_i32, %c0_i32_0 : i32, i32, i32
  }
  func.func @transform_11(%arg0: i32) -> (i32, i32, i32) {
    %c0_i32 = arith.constant 0 : i32
    %c0_i32_0 = arith.constant 0 : i32
    %c0_i32_1 = arith.constant 0 : i32
    return %arg0, %c0_i32, %c0_i32_0 : i32, i32, i32
  }
  func.func @transform_12(%arg0: i32) -> (i32, i32, i32) {
    %c0_i32 = arith.constant 0 : i32
    %c0_i32_0 = arith.constant 0 : i32
    %c0_i32_1 = arith.constant 0 : i32
    return %arg0, %c0_i32, %c0_i32_0 : i32, i32, i32
  }
  func.func @transform_13(%arg0: i32) -> (i32, i32, i32) {
    %c0_i32 = arith.constant 0 : i32
    %c0_i32_0 = arith.constant 0 : i32
    %c0_i32_1 = arith.constant 0 : i32
    return %arg0, %c0_i32, %c0_i32_0 : i32, i32, i32
  }
  func.func @transform_14(%arg0: i32) -> (i32, i32, i32) {
    %c0_i32 = arith.constant 0 : i32
    %c0_i32_0 = arith.constant 0 : i32
    %c0_i32_1 = arith.constant 0 : i32
    return %arg0, %c0_i32, %c0_i32_0 : i32, i32, i32
  }
  func.func @transform_15(%arg0: i32) -> (i32, i32, i32) {
    %c0_i32 = arith.constant 0 : i32
    %c0_i32_0 = arith.constant 0 : i32
    %c0_i32_1 = arith.constant 0 : i32
    return %arg0, %c0_i32, %c0_i32_0 : i32, i32, i32
  }
  func.func @transform_16(%arg0: i32) -> (i32, i32, i32) {
    %c0_i32 = arith.constant 0 : i32
    %c0_i32_0 = arith.constant 0 : i32
    %c0_i32_1 = arith.constant 0 : i32
    return %arg0, %c0_i32, %c0_i32_0 : i32, i32, i32
  }
  func.func @transform_17(%arg0: i32) -> (i32, i32, i32) {
    %c0_i32 = arith.constant 0 : i32
    %c0_i32_0 = arith.constant 0 : i32
    %c0_i32_1 = arith.constant 0 : i32
    return %arg0, %c0_i32, %c0_i32_0 : i32, i32, i32
  }
  func.func @transform_18(%arg0: i32) -> (i32, i32, i32) {
    %c0_i32 = arith.constant 0 : i32
    %c0_i32_0 = arith.constant 0 : i32
    %c0_i32_1 = arith.constant 0 : i32
    return %arg0, %c0_i32, %c0_i32_0 : i32, i32, i32
  }
  func.func @transform_19(%arg0: i32) -> (i32, i32, i32) {
    %c0_i32 = arith.constant 0 : i32
    %c0_i32_0 = arith.constant 0 : i32
    %c0_i32_1 = arith.constant 0 : i32
    return %arg0, %c0_i32, %c0_i32_0 : i32, i32, i32
  }
  func.func @transform_20(%arg0: i32) -> (i32, i32) {
    %c0_i32 = arith.constant 0 : i32
    %c0_i32_0 = arith.constant 0 : i32
    %c0_i32_1 = arith.constant 0 : i32
    return %c0_i32, %c0_i32_0 : i32, i32
  }
  func.func @transform_21(%arg0: i32) -> (i32, i32) {
    %c0_i32 = arith.constant 0 : i32
    %c0_i32_0 = arith.constant 0 : i32
    %c0_i32_1 = arith.constant 0 : i32
    return %c0_i32, %c0_i32_0 : i32, i32
  }
  func.func @transform_22(%arg0: i32) -> (i32, i32) {
    %c0_i32 = arith.constant 0 : i32
    %c0_i32_0 = arith.constant 0 : i32
    %c0_i32_1 = arith.constant 0 : i32
    return %c0_i32, %c0_i32_0 : i32, i32
  }
  func.func @transform_23(%arg0: i32) -> (i32, i32) {
    %c0_i32 = arith.constant 0 : i32
    %c0_i32_0 = arith.constant 0 : i32
    %c0_i32_1 = arith.constant 0 : i32
    return %c0_i32, %c0_i32_0 : i32, i32
  }
  func.func @transform_24(%arg0: i32) -> (i32, i32) {
    %c0_i32 = arith.constant 0 : i32
    %c0_i32_0 = arith.constant 0 : i32
    %c0_i32_1 = arith.constant 0 : i32
    return %c0_i32, %c0_i32_0 : i32, i32
  }
}

</mosaic_0001>

<llo_original>
// kernel: tpu_custom_call.1
$region0: #{tpu_custom_call.1}
  #allocation0 [shape = 'u32[]', space=smem, size = 0x4, offset = 0x4, fixed_abs, tag = 'smem constant byte address 0x4 - core index']
  #allocation1 [shape = 'u32[144,128]{1,0:T(1,128)}', space=vmem, size = 0x12000, scoped, tag = 'internal scratch']
  #allocation2 [shape = 'f32[48,32]{1,0:T(8,128)}', space=vmem, size = 0x6000, scoped, tag = 'scratch operand']
  %s0 = inlined_call_operand.vmem [shape: f32[32,48], index: 0, kind: input, shape index: {}]
  %s1 = inlined_call_operand.hbm [shape: f32[1,48], index: 1, kind: input, shape index: {}]
  %s2 = inlined_call_operand.hbm [shape: f32[1,48], index: 2, kind: input, shape index: {}]
  %s3 = inlined_call_operand.vmem [shape: bf16[48,32], index: 3, kind: input, shape index: {}]
  %s4 = inlined_call_operand.hbm [shape: f32[1,32], index: 4, kind: input, shape index: {}]
  %s5 = inlined_call_operand.hbm [shape: f32[1,32], index: 5, kind: input, shape index: {}]
  %s6 = inlined_call_operand.hbm [shape: f32[1,32], index: 6, kind: input, shape index: {}]
  %s7 = inlined_call_operand.hbm [shape: f32[1,32], index: 7, kind: input, shape index: {}]
  %s8 = inlined_call_operand.vmem [shape: f32[17,32], index: 8, kind: input, shape index: {}]
  %s9 = inlined_call_operand.vmem [shape: f32[2,1,32], index: 9, kind: input, shape index: {}]
  %s10 = inlined_call_operand.vmem [shape: f32[2,1,32], index: 10, kind: input, shape index: {}]
  %s11 = inlined_call_operand.vmem [shape: bf16[2,32,96], index: 11, kind: input, shape index: {}]
  %s12 = inlined_call_operand.vmem [shape: bf16[2,32,32], index: 12, kind: input, shape index: {}]
  %s13 = inlined_call_operand.vmem [shape: f32[2,1,32], index: 13, kind: input, shape index: {}]
  %s14 = inlined_call_operand.vmem [shape: f32[2,1,32], index: 14, kind: input, shape index: {}]
  %s15 = inlined_call_operand.vmem [shape: f32[2,1,32], index: 15, kind: input, shape index: {}]
  %s16 = inlined_call_operand.vmem [shape: bf16[2,32,64], index: 16, kind: input, shape index: {}]
  %s17 = inlined_call_operand.vmem [shape: f32[2,1,64], index: 17, kind: input, shape index: {}]
  %s18 = inlined_call_operand.vmem [shape: bf16[2,64,32], index: 18, kind: input, shape index: {}]
  %s19 = inlined_call_operand.vmem [shape: f32[2,1,32], index: 19, kind: input, shape index: {}]
  %s20 = inlined_call_operand.vmem [shape: f32[1,32], index: 20, kind: input, shape index: {}]
  %s21 = inlined_call_operand.vmem [shape: f32[1,32], index: 21, kind: input, shape index: {}]
  %s22 = inlined_call_operand.vmem [shape: bf16[32,10], index: 22, kind: input, shape index: {}]
  %s23 = inlined_call_operand.vmem [shape: f32[1,10], index: 23, kind: input, shape index: {}]
  %s24 = inlined_call_operand.hbm [shape: f32[2,10], index: 24, kind: output, shape index: {}]
  %s25 = sld [smem:[#allocation0]]
  $region161: #{tpu_custom_call.1} parent=0
    _
  %s27 = ssub.s32 1, %s25
  %s28 = scalar_select 0, %s27, %s25
  $region1: #{tpu_custom_call.1} parent=0
    #allocation3 [shape = 'u8[512]{0}', space=vmem, size = 0x400, scoped, tag = 'input window, operand 1, single buffered']
    #allocation4 [shape = 's32[2]{0}', space=sflag, size = 0x8, scoped, tag = 'scoped memory for tpu_custom_call.1']
    #allocation5 [shape = 's32[2]{0}', space=sflag, size = 0x8, scoped, tag = 'scoped memory for tpu_custom_call.1']
    #allocation6 [shape = 'u8[512]{0}', space=vmem, size = 0x400, scoped, tag = 'input window, operand 2, single buffered']
    #allocation7 [shape = 's32[1]{0}', space=sflag, size = 0x4, scoped, tag = 'scoped memory for tpu_custom_call.1']
    #allocation8 [shape = 'u8[512]{0}', space=vmem, size = 0x400, scoped, tag = 'input window, operand 4, single buffered']
    #allocation9 [shape = 'u8[512]{0}', space=vmem, size = 0x400, scoped, tag = 'input window, operand 5, single buffered']
    #allocation10 [shape = 's32[1]{0}', space=sflag, size = 0x4, scoped, tag = 'scoped memory for tpu_custom_call.1']
    #allocation11 [shape = 'u8[512]{0}', space=vmem, size = 0x400, scoped, tag = 'input window, operand 6, single buffered']
    #allocation12 [shape = 'u8[512]{0}', space=vmem, size = 0x400, scoped, tag = 'input window, operand 7, single buffered']
    #allocation13 [shape = 's32[1]{0}', space=sflag, size = 0x4, scoped, tag = 'scoped memory for tpu_custom_call.1']
    #allocation14 [shape = 'u8[1024]{0}', space=vmem, size = 0x400, scoped, tag = 'output window, operand 0, single buffered']
    %29 = vsyncpa [#allocation4], 0
    %30 = vsyncpa [#allocation7], 0
    %31 = vsyncpa [#allocation10], 0
    %32 = vsyncpa [#allocation13], 0
    %33 = vsyncpa [#allocation5], 0
    loop: start=0, step=1, limit=4
    $region2: #{tpu_custom_call.1} parent=1 // loop_pre_header
      _
    $region3: #{tpu_custom_call.1} parent=1 // loop_header
      %s35 = sphi 0, %s39
      %p36 = scmp.ge.s32.totalorder %s35, 4
      %s43 = sphi 0, %s43
      %s45 = sphi 0, %s43
      %s46 = sphi 0, %s45
      %s60 = sphi 0, %s46
      %s64 = sphi 0, %s64
      %s66 = sphi 0, %s64
      %s67 = sphi 0, %s66
      %s81 = sphi 0, %s67
      %s85 = sphi 0, %s85
      %s87 = sphi 0, %s85
      %s88 = sphi 0, %s87
      %s102 = sphi 0, %s88
      %s106 = sphi 0, %s106
      %s108 = sphi 0, %s106
      %s109 = sphi 0, %s108
      %s123 = sphi 0, %s109
      %s127 = sphi 0, %s127
      %s129 = sphi 0, %s127
      %s130 = sphi 0, %s129
      %s144 = sphi 0, %s130
      %s148 = sphi 0, %s148
      %s150 = sphi 0, %s148
      %s151 = sphi 0, %s150
      %s165 = sphi 0, %s151
      %s169 = sphi 0, %s169
      %s171 = sphi 0, %s169
      %s172 = sphi 0, %s171
      %s186 = sphi 0, %s172
      %s190 = sphi 0, %s190
      %s192 = sphi 0, %s190
      %s193 = sphi 0, %s192
      %s207 = sphi 0, %s193
      %s211 = sphi 0, %s211
      %s213 = sphi 0, %s211
      %s214 = sphi 0, %s213
      %s228 = sphi 0, %s214
      %s234 = sphi 0, %s236
      %s237 = sphi 0, %s234
      %s238 = sphi 0, %s237
      %s254 = sphi 0, %s238
      %s260 = sphi 0, %s262
      %s263 = sphi 0, %s260
      %s264 = sphi 0, %s263
      %s280 = sphi 0, %s264
      %s286 = sphi 0, %s288
      %s289 = sphi 0, %s286
      %s290 = sphi 0, %s289
      %s306 = sphi 0, %s290
      %s312 = sphi 0, %s314
      %s315 = sphi 0, %s312
      %s316 = sphi 0, %s315
      %s332 = sphi 0, %s316
      %s338 = sphi 0, %s340
      %s341 = sphi 0, %s338
      %s342 = sphi 0, %s341
      %s358 = sphi 0, %s342
      %s364 = sphi 0, %s366
      %s367 = sphi 0, %s364
      %s368 = sphi 0, %s367
      %s384 = sphi 0, %s368
      %s390 = sphi 0, %s392
      %s393 = sphi 0, %s390
      %s394 = sphi 0, %s393
      %s410 = sphi 0, %s394
      %s416 = sphi 0, %s418
      %s419 = sphi 0, %s416
      %s420 = sphi 0, %s419
      %s436 = sphi 0, %s420
      %s442 = sphi 0, %s444
      %s445 = sphi 0, %s442
      %s446 = sphi 0, %s445
      %s462 = sphi 0, %s446
      %s468 = sphi 0, %s470
      %s471 = sphi 0, %s468
      %s472 = sphi 0, %s471
      %s488 = sphi 0, %s472
      %s494 = sphi 0, %s496
      %s497 = sphi 0, %s494
      %s498 = sphi 0, %s497
      %s514 = sphi 0, %s498
      %s518 = sphi 0, %s518
      %s520 = sphi 0, %s518
      %s521 = sphi 0, %s520
      %s535 = sphi 0, %s521
      %s539 = sphi 0, %s539
      %s541 = sphi 0, %s539
      %s542 = sphi 0, %s541
      %s556 = sphi 0, %s542
      %s560 = sphi 0, %s560
      %s562 = sphi 0, %s560
      %s563 = sphi 0, %s562
      %s577 = sphi 0, %s563
      %s581 = sphi 0, %s581
      %s583 = sphi 0, %s581
      %s584 = sphi 0, %s583
      %s598 = sphi 0, %s584
      %s602 = sphi 0, %s602
      %s604 = sphi 0, %s602
      %s605 = sphi 0, %s604
      %s619 = sphi 0, %s605
    $region4: #{tpu_custom_call.1} parent=1 // loop_header_branch
      %38 = sbr.rel (%p36) target = $region8
    $region5: #{tpu_custom_call.1} parent=1 // loop_body
      %s40 = ssub.s32 %s35, 1
      %s41 = ssub.s32 %s35, 2
      %s42 = sadd.s32 %s35, 1
      %s44 = sadd.s32 %s43, 1
      %p47 = scmp.eq.s32.totalorder %s35, 1
      %p48 = scmp.ne.s32.totalorder %s43, %s45
      %p49 = scmp.eq.s32.totalorder %s35, 0
      %p50 = por %p48, %p49
      %p51 = scmp.ne.s32.totalorder %s43, %s45
      %p52 = scmp.eq.s32.totalorder %s40, 1
      %p53 = por %p51, %p52
      %p54 = scmp.ne.s32.totalorder %s45, %s46
      %p55 = scmp.eq.s32.totalorder %s40, 0
      %p56 = por %p54, %p55
      %p57 = scmp.ne.s32.totalorder %s45, %s46
      %p58 = scmp.eq.s32.totalorder %s41, 1
      %p59 = por %p57, %p58
      %p61 = scmp.ne.s32.totalorder %s46, %s60
      %p62 = scmp.eq.s32.totalorder %s41, 0
      %p63 = por %p61, %p62
      %s65 = sadd.s32 %s64, 1
      %p68 = scmp.eq.s32.totalorder %s35, 1
      %p69 = scmp.ne.s32.totalorder %s64, %s66
      %p70 = scmp.eq.s32.totalorder %s35, 0
      %p71 = por %p69, %p70
      %p72 = scmp.ne.s32.totalorder %s64, %s66
      %p73 = scmp.eq.s32.totalorder %s40, 1
      %p74 = por %p72, %p73
      %p75 = scmp.ne.s32.totalorder %s66, %s67
      %p76 = scmp.eq.s32.totalorder %s40, 0
      %p77 = por %p75, %p76
      %p78 = scmp.ne.s32.totalorder %s66, %s67
      %p79 = scmp.eq.s32.totalorder %s41, 1
      %p80 = por %p78, %p79
      %p82 = scmp.ne.s32.totalorder %s67, %s81
      %p83 = scmp.eq.s32.totalorder %s41, 0
      %p84 = por %p82, %p83
      %s86 = sadd.s32 %s85, 1
      %p89 = scmp.eq.s32.totalorder %s35, 1
      %p90 = scmp.ne.s32.totalorder %s85, %s87
      %p91 = scmp.eq.s32.totalorder %s35, 0
      %p92 = por %p90, %p91
      %p93 = scmp.ne.s32.totalorder %s85, %s87
      %p94 = scmp.eq.s32.totalorder %s40, 1
      %p95 = por %p93, %p94
      %p96 = scmp.ne.s32.totalorder %s87, %s88
      %p97 = scmp.eq.s32.totalorder %s40, 0
      %p98 = por %p96, %p97
      %p99 = scmp.ne.s32.totalorder %s87, %s88
      %p100 = scmp.eq.s32.totalorder %s41, 1
      %p101 = por %p99, %p100
      %p103 = scmp.ne.s32.totalorder %s88, %s102
      %p104 = scmp.eq.s32.totalorder %s41, 0
      %p105 = por %p103, %p104
      %s107 = sadd.s32 %s106, 1
      %p110 = scmp.eq.s32.totalorder %s35, 1
      %p111 = scmp.ne.s32.totalorder %s106, %s108
      %p112 = scmp.eq.s32.totalorder %s35, 0
      %p113 = por %p111, %p112
      %p114 = scmp.ne.s32.totalorder %s106, %s108
      %p115 = scmp.eq.s32.totalorder %s40, 1
      %p116 = por %p114, %p115
      %p117 = scmp.ne.s32.totalorder %s108, %s109
      %p118 = scmp.eq.s32.totalorder %s40, 0
      %p119 = por %p117, %p118
      %p120 = scmp.ne.s32.totalorder %s108, %s109
      %p121 = scmp.eq.s32.totalorder %s41, 1
      %p122 = por %p120, %p121
      %p124 = scmp.ne.s32.totalorder %s109, %s123
      %p125 = scmp.eq.s32.totalorder %s41, 0
      %p126 = por %p124, %p125
      %s128 = sadd.s32 %s127, 1
      %p131 = scmp.eq.s32.totalorder %s35, 1
      %p132 = scmp.ne.s32.totalorder %s127, %s129
      %p133 = scmp.eq.s32.totalorder %s35, 0
      %p134 = por %p132, %p133
      %p135 = scmp.ne.s32.totalorder %s127, %s129
      %p136 = scmp.eq.s32.totalorder %s40, 1
      %p137 = por %p135, %p136
      %p138 = scmp.ne.s32.totalorder %s129, %s130
      %p139 = scmp.eq.s32.totalorder %s40, 0
      %p140 = por %p138, %p139
      %p141 = scmp.ne.s32.totalorder %s129, %s130
      %p142 = scmp.eq.s32.totalorder %s41, 1
      %p143 = por %p141, %p142
      %p145 = scmp.ne.s32.totalorder %s130, %s144
      %p146 = scmp.eq.s32.totalorder %s41, 0
      %p147 = por %p145, %p146
      %s149 = sadd.s32 %s148, 1
      %p152 = scmp.eq.s32.totalorder %s35, 1
      %p153 = scmp.ne.s32.totalorder %s148, %s150
      %p154 = scmp.eq.s32.totalorder %s35, 0
      %p155 = por %p153, %p154
      %p156 = scmp.ne.s32.totalorder %s148, %s150
      %p157 = scmp.eq.s32.totalorder %s40, 1
      %p158 = por %p156, %p157
      %p159 = scmp.ne.s32.totalorder %s150, %s151
      %p160 = scmp.eq.s32.totalorder %s40, 0
      %p161 = por %p159, %p160
      %p162 = scmp.ne.s32.totalorder %s150, %s151
      %p163 = scmp.eq.s32.totalorder %s41, 1
      %p164 = por %p162, %p163
      %p166 = scmp.ne.s32.totalorder %s151, %s165
      %p167 = scmp.eq.s32.totalorder %s41, 0
      %p168 = por %p166, %p167
      %s170 = sadd.s32 %s169, 1
      %p173 = scmp.eq.s32.totalorder %s35, 1
      %p174 = scmp.ne.s32.totalorder %s169, %s171
      %p175 = scmp.eq.s32.totalorder %s35, 0
      %p176 = por %p174, %p175
      %p177 = scmp.ne.s32.totalorder %s169, %s171
      %p178 = scmp.eq.s32.totalorder %s40, 1
      %p179 = por %p177, %p178
      %p180 = scmp.ne.s32.totalorder %s171, %s172
      %p181 = scmp.eq.s32.totalorder %s40, 0
      %p182 = por %p180, %p181
      %p183 = scmp.ne.s32.totalorder %s171, %s172
      %p184 = scmp.eq.s32.totalorder %s41, 1
      %p185 = por %p183, %p184
      %p187 = scmp.ne.s32.totalorder %s172, %s186
      %p188 = scmp.eq.s32.totalorder %s41, 0
      %p189 = por %p187, %p188
      %s191 = sadd.s32 %s190, 1
      %p194 = scmp.eq.s32.totalorder %s35, 1
      %p195 = scmp.ne.s32.totalorder %s190, %s192
      %p196 = scmp.eq.s32.totalorder %s35, 0
      %p197 = por %p195, %p196
      %p198 = scmp.ne.s32.totalorder %s190, %s192
      %p199 = scmp.eq.s32.totalorder %s40, 1
      %p200 = por %p198, %p199
      %p201 = scmp.ne.s32.totalorder %s192, %s193
      %p202 = scmp.eq.s32.totalorder %s40, 0
      %p203 = por %p201, %p202
      %p204 = scmp.ne.s32.totalorder %s192, %s193
      %p205 = scmp.eq.s32.totalorder %s41, 1
      %p206 = por %p204, %p205
      %p208 = scmp.ne.s32.totalorder %s193, %s207
      %p209 = scmp.eq.s32.totalorder %s41, 0
      %p210 = por %p208, %p209
      %s212 = sadd.s32 %s211, 1
      %p215 = scmp.eq.s32.totalorder %s35, 1
      %p216 = scmp.ne.s32.totalorder %s211, %s213
      %p217 = scmp.eq.s32.totalorder %s35, 0
      %p218 = por %p216, %p217
      %p219 = scmp.ne.s32.totalorder %s211, %s213
      %p220 = scmp.eq.s32.totalorder %s40, 1
      %p221 = por %p219, %p220
      %p222 = scmp.ne.s32.totalorder %s213, %s214
      %p223 = scmp.eq.s32.totalorder %s40, 0
      %p224 = por %p222, %p223
      %p225 = scmp.ne.s32.totalorder %s213, %s214
      %p226 = scmp.eq.s32.totalorder %s41, 1
      %p227 = por %p225, %p226
      %p229 = scmp.ne.s32.totalorder %s214, %s228
      %p230 = scmp.eq.s32.totalorder %s41, 0
      %p231 = por %p229, %p230
      %s232 = ssub.s32 %s35, %s42
      %p233 = scmp.eq.s32.totalorder %s232, 0
      %s235 = sadd.s32 %s234, 1
      %s236 = scalar_select %p233, %s234, %s235
      %p239 = pneg %p233
      %p240 = scmp.eq.s32.totalorder %s35, 1
      %p241 = por %p239, %p240
      %p242 = scmp.ne.s32.totalorder %s234, %s237
      %p243 = scmp.eq.s32.totalorder %s35, 0
      %p244 = por %p242, %p243
      %p245 = scmp.ne.s32.totalorder %s234, %s237
      %p246 = scmp.eq.s32.totalorder %s40, 1
      %p247 = por %p245, %p246
      %p248 = scmp.ne.s32.totalorder %s237, %s238
      %p249 = scmp.eq.s32.totalorder %s40, 0
      %p250 = por %p248, %p249
      %p251 = scmp.ne.s32.totalorder %s237, %s238
      %p252 = scmp.eq.s32.totalorder %s41, 1
      %p253 = por %p251, %p252
      %p255 = scmp.ne.s32.totalorder %s238, %s254
      %p256 = scmp.eq.s32.totalorder %s41, 0
      %p257 = por %p255, %p256
      %s258 = ssub.s32 %s35, %s42
      %p259 = scmp.eq.s32.totalorder %s258, 0
      %s261 = sadd.s32 %s260, 1
      %s262 = scalar_select %p259, %s260, %s261
      %p265 = pneg %p259
      %p266 = scmp.eq.s32.totalorder %s35, 1
      %p267 = por %p265, %p266
      %p268 = scmp.ne.s32.totalorder %s260, %s263
      %p269 = scmp.eq.s32.totalorder %s35, 0
      %p270 = por %p268, %p269
      %p271 = scmp.ne.s32.totalorder %s260, %s263
      %p272 = scmp.eq.s32.totalorder %s40, 1
      %p273 = por %p271, %p272
      %p274 = scmp.ne.s32.totalorder %s263, %s264
      %p275 = scmp.eq.s32.totalorder %s40, 0
      %p276 = por %p274, %p275
      %p277 = scmp.ne.s32.totalorder %s263, %s264
      %p278 = scmp.eq.s32.totalorder %s41, 1
      %p279 = por %p277, %p278
      %p281 = scmp.ne.s32.totalorder %s264, %s280
      %p282 = scmp.eq.s32.totalorder %s41, 0
      %p283 = por %p281, %p282
      %s284 = ssub.s32 %s35, %s42
      %p285 = scmp.eq.s32.totalorder %s284, 0
      %s287 = sadd.s32 %s286, 1
      %s288 = scalar_select %p285, %s286, %s287
      %p291 = pneg %p285
      %p292 = scmp.eq.s32.totalorder %s35, 1
      %p293 = por %p291, %p292
      %p294 = scmp.ne.s32.totalorder %s286, %s289
      %p295 = scmp.eq.s32.totalorder %s35, 0
      %p296 = por %p294, %p295
      %p297 = scmp.ne.s32.totalorder %s286, %s289
      %p298 = scmp.eq.s32.totalorder %s40, 1
      %p299 = por %p297, %p298
      %p300 = scmp.ne.s32.totalorder %s289, %s290
      %p301 = scmp.eq.s32.totalorder %s40, 0
      %p302 = por %p300, %p301
      %p303 = scmp.ne.s32.totalorder %s289, %s290
      %p304 = scmp.eq.s32.totalorder %s41, 1
      %p305 = por %p303, %p304
      %p307 = scmp.ne.s32.totalorder %s290, %s306
      %p308 = scmp.eq.s32.totalorder %s41, 0
      %p309 = por %p307, %p308
      %s310 = ssub.s32 %s35, %s42
      %p311 = scmp.eq.s32.totalorder %s310, 0
      %s313 = sadd.s32 %s312, 1
      %s314 = scalar_select %p311, %s312, %s313
      %p317 = pneg %p311
      %p318 = scmp.eq.s32.totalorder %s35, 1
      %p319 = por %p317, %p318
      %p320 = scmp.ne.s32.totalorder %s312, %s315
      %p321 = scmp.eq.s32.totalorder %s35, 0
      %p322 = por %p320, %p321
      %p323 = scmp.ne.s32.totalorder %s312, %s315
      %p324 = scmp.eq.s32.totalorder %s40, 1
      %p325 = por %p323, %p324
      %p326 = scmp.ne.s32.totalorder %s315, %s316
      %p327 = scmp.eq.s32.totalorder %s40, 0
      %p328 = por %p326, %p327
      %p329 = scmp.ne.s32.totalorder %s315, %s316
      %p330 = scmp.eq.s32.totalorder %s41, 1
      %p331 = por %p329, %p330
      %p333 = scmp.ne.s32.totalorder %s316, %s332
      %p334 = scmp.eq.s32.totalorder %s41, 0
      %p335 = por %p333, %p334
      %s336 = ssub.s32 %s35, %s42
      %p337 = scmp.eq.s32.totalorder %s336, 0
      %s339 = sadd.s32 %s338, 1
      %s340 = scalar_select %p337, %s338, %s339
      %p343 = pneg %p337
      %p344 = scmp.eq.s32.totalorder %s35, 1
      %p345 = por %p343, %p344
      %p346 = scmp.ne.s32.totalorder %s338, %s341
      %p347 = scmp.eq.s32.totalorder %s35, 0
      %p348 = por %p346, %p347
      %p349 = scmp.ne.s32.totalorder %s338, %s341
      %p350 = scmp.eq.s32.totalorder %s40, 1
      %p351 = por %p349, %p350
      %p352 = scmp.ne.s32.totalorder %s341, %s342
      %p353 = scmp.eq.s32.totalorder %s40, 0
      %p354 = por %p352, %p353
      %p355 = scmp.ne.s32.totalorder %s341, %s342
      %p356 = scmp.eq.s32.totalorder %s41, 1
      %p357 = por %p355, %p356
      %p359 = scmp.ne.s32.totalorder %s342, %s358
      %p360 = scmp.eq.s32.totalorder %s41, 0
      %p361 = por %p359, %p360
      %s362 = ssub.s32 %s35, %s42
      %p363 = scmp.eq.s32.totalorder %s362, 0
      %s365 = sadd.s32 %s364, 1
      %s366 = scalar_select %p363, %s364, %s365
      %p369 = pneg %p363
      %p370 = scmp.eq.s32.totalorder %s35, 1
      %p371 = por %p369, %p370
      %p372 = scmp.ne.s32.totalorder %s364, %s367
      %p373 = scmp.eq.s32.totalorder %s35, 0
      %p374 = por %p372, %p373
      %p375 = scmp.ne.s32.totalorder %s364, %s367
      %p376 = scmp.eq.s32.totalorder %s40, 1
      %p377 = por %p375, %p376
      %p378 = scmp.ne.s32.totalorder %s367, %s368
      %p379 = scmp.eq.s32.totalorder %s40, 0
      %p380 = por %p378, %p379
      %p381 = scmp.ne.s32.totalorder %s367, %s368
      %p382 = scmp.eq.s32.totalorder %s41, 1
      %p383 = por %p381, %p382
      %p385 = scmp.ne.s32.totalorder %s368, %s384
      %p386 = scmp.eq.s32.totalorder %s41, 0
      %p387 = por %p385, %p386
      %s388 = ssub.s32 %s35, %s42
      %p389 = scmp.eq.s32.totalorder %s388, 0
      %s391 = sadd.s32 %s390, 1
      %s392 = scalar_select %p389, %s390, %s391
      %p395 = pneg %p389
      %p396 = scmp.eq.s32.totalorder %s35, 1
      %p397 = por %p395, %p396
      %p398 = scmp.ne.s32.totalorder %s390, %s393
      %p399 = scmp.eq.s32.totalorder %s35, 0
      %p400 = por %p398, %p399
      %p401 = scmp.ne.s32.totalorder %s390, %s393
      %p402 = scmp.eq.s32.totalorder %s40, 1
      %p403 = por %p401, %p402
      %p404 = scmp.ne.s32.totalorder %s393, %s394
      %p405 = scmp.eq.s32.totalorder %s40, 0
      %p406 = por %p404, %p405
      %p407 = scmp.ne.s32.totalorder %s393, %s394
      %p408 = scmp.eq.s32.totalorder %s41, 1
      %p409 = por %p407, %p408
      %p411 = scmp.ne.s32.totalorder %s394, %s410
      %p412 = scmp.eq.s32.totalorder %s41, 0
      %p413 = por %p411, %p412
      %s414 = ssub.s32 %s35, %s42
      %p415 = scmp.eq.s32.totalorder %s414, 0
      %s417 = sadd.s32 %s416, 1
      %s418 = scalar_select %p415, %s416, %s417
      %p421 = pneg %p415
      %p422 = scmp.eq.s32.totalorder %s35, 1
      %p423 = por %p421, %p422
      %p424 = scmp.ne.s32.totalorder %s416, %s419
      %p425 = scmp.eq.s32.totalorder %s35, 0
      %p426 = por %p424, %p425
      %p427 = scmp.ne.s32.totalorder %s416, %s419
      %p428 = scmp.eq.s32.totalorder %s40, 1
      %p429 = por %p427, %p428
      %p430 = scmp.ne.s32.totalorder %s419, %s420
      %p431 = scmp.eq.s32.totalorder %s40, 0
      %p432 = por %p430, %p431
      %p433 = scmp.ne.s32.totalorder %s419, %s420
      %p434 = scmp.eq.s32.totalorder %s41, 1
      %p435 = por %p433, %p434
      %p437 = scmp.ne.s32.totalorder %s420, %s436
      %p438 = scmp.eq.s32.totalorder %s41, 0
      %p439 = por %p437, %p438
      %s440 = ssub.s32 %s35, %s42
      %p441 = scmp.eq.s32.totalorder %s440, 0
      %s443 = sadd.s32 %s442, 1
      %s444 = scalar_select %p441, %s442, %s443
      %p447 = pneg %p441
      %p448 = scmp.eq.s32.totalorder %s35, 1
      %p449 = por %p447, %p448
      %p450 = scmp.ne.s32.totalorder %s442, %s445
      %p451 = scmp.eq.s32.totalorder %s35, 0
      %p452 = por %p450, %p451
      %p453 = scmp.ne.s32.totalorder %s442, %s445
      %p454 = scmp.eq.s32.totalorder %s40, 1
      %p455 = por %p453, %p454
      %p456 = scmp.ne.s32.totalorder %s445, %s446
      %p457 = scmp.eq.s32.totalorder %s40, 0
      %p458 = por %p456, %p457
      %p459 = scmp.ne.s32.totalorder %s445, %s446
      %p460 = scmp.eq.s32.totalorder %s41, 1
      %p461 = por %p459, %p460
      %p463 = scmp.ne.s32.totalorder %s446, %s462
      %p464 = scmp.eq.s32.totalorder %s41, 0
      %p465 = por %p463, %p464
      %s466 = ssub.s32 %s35, %s42
      %p467 = scmp.eq.s32.totalorder %s466, 0
      %s469 = sadd.s32 %s468, 1
      %s470 = scalar_select %p467, %s468, %s469
      %p473 = pneg %p467
      %p474 = scmp.eq.s32.totalorder %s35, 1
      %p475 = por %p473, %p474
      %p476 = scmp.ne.s32.totalorder %s468, %s471
      %p477 = scmp.eq.s32.totalorder %s35, 0
      %p478 = por %p476, %p477
      %p479 = scmp.ne.s32.totalorder %s468, %s471
      %p480 = scmp.eq.s32.totalorder %s40, 1
      %p481 = por %p479, %p480
      %p482 = scmp.ne.s32.totalorder %s471, %s472
      %p483 = scmp.eq.s32.totalorder %s40, 0
      %p484 = por %p482, %p483
      %p485 = scmp.ne.s32.totalorder %s471, %s472
      %p486 = scmp.eq.s32.totalorder %s41, 1
      %p487 = por %p485, %p486
      %p489 = scmp.ne.s32.totalorder %s472, %s488
      %p490 = scmp.eq.s32.totalorder %s41, 0
      %p491 = por %p489, %p490
      %s492 = ssub.s32 %s35, %s42
      %p493 = scmp.eq.s32.totalorder %s492, 0
      %s495 = sadd.s32 %s494, 1
      %s496 = scalar_select %p493, %s494, %s495
      %p499 = pneg %p493
      %p500 = scmp.eq.s32.totalorder %s35, 1
      %p501 = por %p499, %p500
      %p502 = scmp.ne.s32.totalorder %s494, %s497
      %p503 = scmp.eq.s32.totalorder %s35, 0
      %p504 = por %p502, %p503
      %p505 = scmp.ne.s32.totalorder %s494, %s497
      %p506 = scmp.eq.s32.totalorder %s40, 1
      %p507 = por %p505, %p506
      %p508 = scmp.ne.s32.totalorder %s497, %s498
      %p509 = scmp.eq.s32.totalorder %s40, 0
      %p510 = por %p508, %p509
      %p511 = scmp.ne.s32.totalorder %s497, %s498
      %p512 = scmp.eq.s32.totalorder %s41, 1
      %p513 = por %p511, %p512
      %p515 = scmp.ne.s32.totalorder %s498, %s514
      %p516 = scmp.eq.s32.totalorder %s41, 0
      %p517 = por %p515, %p516
      %s519 = sadd.s32 %s518, 1
      %p522 = scmp.eq.s32.totalorder %s35, 1
      %p523 = scmp.ne.s32.totalorder %s518, %s520
      %p524 = scmp.eq.s32.totalorder %s35, 0
      %p525 = por %p523, %p524
      %p526 = scmp.ne.s32.totalorder %s518, %s520
      %p527 = scmp.eq.s32.totalorder %s40, 1
      %p528 = por %p526, %p527
      %p529 = scmp.ne.s32.totalorder %s520, %s521
      %p530 = scmp.eq.s32.totalorder %s40, 0
      %p531 = por %p529, %p530
      %p532 = scmp.ne.s32.totalorder %s520, %s521
      %p533 = scmp.eq.s32.totalorder %s41, 1
      %p534 = por %p532, %p533
      %p536 = scmp.ne.s32.totalorder %s521, %s535
      %p537 = scmp.eq.s32.totalorder %s41, 0
      %p538 = por %p536, %p537
      %s540 = sadd.s32 %s539, 1
      %p543 = scmp.eq.s32.totalorder %s35, 1
      %p544 = scmp.ne.s32.totalorder %s539, %s541
      %p545 = scmp.eq.s32.totalorder %s35, 0
      %p546 = por %p544, %p545
      %p547 = scmp.ne.s32.totalorder %s539, %s541
      %p548 = scmp.eq.s32.totalorder %s40, 1
      %p549 = por %p547, %p548
      %p550 = scmp.ne.s32.totalorder %s541, %s542
      %p551 = scmp.eq.s32.totalorder %s40, 0
      %p552 = por %p550, %p551
      %p553 = scmp.ne.s32.totalorder %s541, %s542
      %p554 = scmp.eq.s32.totalorder %s41, 1
      %p555 = por %p553, %p554
      %p557 = scmp.ne.s32.totalorder %s542, %s556
      %p558 = scmp.eq.s32.totalorder %s41, 0
      %p559 = por %p557, %p558
      %s561 = sadd.s32 %s560, 1
      %p564 = scmp.eq.s32.totalorder %s35, 1
      %p565 = scmp.ne.s32.totalorder %s560, %s562
      %p566 = scmp.eq.s32.totalorder %s35, 0
      %p567 = por %p565, %p566
      %p568 = scmp.ne.s32.totalorder %s560, %s562
      %p569 = scmp.eq.s32.totalorder %s40, 1
      %p570 = por %p568, %p569
      %p571 = scmp.ne.s32.totalorder %s562, %s563
      %p572 = scmp.eq.s32.totalorder %s40, 0
      %p573 = por %p571, %p572
      %p574 = scmp.ne.s32.totalorder %s562, %s563
      %p575 = scmp.eq.s32.totalorder %s41, 1
      %p576 = por %p574, %p575
      %p578 = scmp.ne.s32.totalorder %s563, %s577
      %p579 = scmp.eq.s32.totalorder %s41, 0
      %p580 = por %p578, %p579
      %s582 = sadd.s32 %s581, 1
      %p585 = scmp.eq.s32.totalorder %s35, 1
      %p586 = scmp.ne.s32.totalorder %s581, %s583
      %p587 = scmp.eq.s32.totalorder %s35, 0
      %p588 = por %p586, %p587
      %p589 = scmp.ne.s32.totalorder %s581, %s583
      %p590 = scmp.eq.s32.totalorder %s40, 1
      %p591 = por %p589, %p590
      %p592 = scmp.ne.s32.totalorder %s583, %s584
      %p593 = scmp.eq.s32.totalorder %s40, 0
      %p594 = por %p592, %p593
      %p595 = scmp.ne.s32.totalorder %s583, %s584
      %p596 = scmp.eq.s32.totalorder %s41, 1
      %p597 = por %p595, %p596
      %p599 = scmp.ne.s32.totalorder %s584, %s598
      %p600 = scmp.eq.s32.totalorder %s41, 0
      %p601 = por %p599, %p600
      %s603 = sadd.s32 %s602, 1
      %p606 = scmp.eq.s32.totalorder %s35, 1
      %p607 = scmp.ne.s32.totalorder %s602, %s604
      %p608 = scmp.eq.s32.totalorder %s35, 0
      %p609 = por %p607, %p608
      %p610 = scmp.ne.s32.totalorder %s602, %s604
      %p611 = scmp.eq.s32.totalorder %s40, 1
      %p612 = por %p610, %p611
      %p613 = scmp.ne.s32.totalorder %s604, %s605
      %p614 = scmp.eq.s32.totalorder %s40, 0
      %p615 = por %p613, %p614
      %p616 = scmp.ne.s32.totalorder %s604, %s605
      %p617 = scmp.eq.s32.totalorder %s41, 1
      %p618 = por %p616, %p617
      %p620 = scmp.ne.s32.totalorder %s605, %s619
      %p621 = scmp.eq.s32.totalorder %s41, 0
      %p622 = por %p620, %p621
      %p623 = scmp.le.s32.totalorder 1, %s35
      %p624 = scmp.lt.s32.totalorder %s35, 3
      %p625 = pnand %p623, %p624
      %p626 = pneg %p625
      // Predicated region
      $region9: #{tpu_custom_call.1} parent=5 // pred_check
        _
      $region10: #{tpu_custom_call.1} parent=5 // pred_check_branch
        %628 = sbr.rel (%p625) target = $region12
      $region11: #{tpu_custom_call.1} parent=5 // pred_region
        %s629 = ssub.s32 %s35, 1
        // Predicated region
        $region13: #{tpu_custom_call.1} parent=11 // pred_check
          %p630 = pneg %p56
        $region14: #{tpu_custom_call.1} parent=11 // pred_check_branch
          %632 = sbr.rel (%p630) target = $region16
        $region15: #{tpu_custom_call.1} parent=11 // pred_region
          _
        $region16: #{tpu_custom_call.1} parent=11 // pred_fallthru
          _
        // Predicated region
        $region17: #{tpu_custom_call.1} parent=11 // pred_check
          %p633 = pneg %p77
        $region18: #{tpu_custom_call.1} parent=11 // pred_check_branch
          %635 = sbr.rel (%p633) target = $region20
        $region19: #{tpu_custom_call.1} parent=11 // pred_region
          %s637 = ssub.s32 16, 16
          %638 = vsyncadd [#allocation4], %s637
          %s640 = sshll.u32 [#allocation3], 4
          %s641 = int_to_ptr.vmem [resolvable:$true] %s640
          %643 = dma.hbm_to_vmem [thread:$0]  %s1, 16, %s641, [#allocation4]
        $region20: #{tpu_custom_call.1} parent=11 // pred_fallthru
          _
        // Predicated region
        $region21: #{tpu_custom_call.1} parent=11 // pred_check
          %p644 = pneg %p98
        $region22: #{tpu_custom_call.1} parent=11 // pred_check_branch
          %646 = sbr.rel (%p644) target = $region24
        $region23: #{tpu_custom_call.1} parent=11 // pred_region
          %s648 = ssub.s32 16, 16
          %649 = vsyncadd [#allocation7], %s648
          %s651 = sshll.u32 [#allocation6], 4
          %s652 = int_to_ptr.vmem [resolvable:$true] %s651
          %654 = dma.hbm_to_vmem [thread:$0]  %s2, 16, %s652, [#allocation7]
        $region24: #{tpu_custom_call.1} parent=11 // pred_fallthru
          _
        // Predicated region
        $region25: #{tpu_custom_call.1} parent=11 // pred_check
          %p655 = pneg %p119
        $region26: #{tpu_custom_call.1} parent=11 // pred_check_branch
          %657 = sbr.rel (%p655) target = $region28
        $region27: #{tpu_custom_call.1} parent=11 // pred_region
          _
        $region28: #{tpu_custom_call.1} parent=11 // pred_fallthru
          _
        // Predicated region
        $region29: #{tpu_custom_call.1} parent=11 // pred_check
          %p658 = pneg %p140
        $region30: #{tpu_custom_call.1} parent=11 // pred_check_branch
          %660 = sbr.rel (%p658) target = $region32
        $region31: #{tpu_custom_call.1} parent=11 // pred_region
          %s662 = ssub.s32 16, 16
          %663 = vsyncadd [#allocation7], %s662
          %s665 = sshll.u32 [#allocation8], 4
          %s666 = int_to_ptr.vmem [resolvable:$true] %s665
          %668 = dma.hbm_to_vmem [thread:$0]  %s4, 16, %s666, [#allocation7]
        $region32: #{tpu_custom_call.1} parent=11 // pred_fallthru
          _
        // Predicated region
        $region33: #{tpu_custom_call.1} parent=11 // pred_check
          %p669 = pneg %p161
        $region34: #{tpu_custom_call.1} parent=11 // pred_check_branch
          %671 = sbr.rel (%p669) target = $region36
        $region35: #{tpu_custom_call.1} parent=11 // pred_region
          %s673 = ssub.s32 16, 16
          %674 = vsyncadd [#allocation10], %s673
          %s676 = sshll.u32 [#allocation9], 4
          %s677 = int_to_ptr.vmem [resolvable:$true] %s676
          %679 = dma.hbm_to_vmem [thread:$0]  %s5, 16, %s677, [#allocation10]
        $region36: #{tpu_custom_call.1} parent=11 // pred_fallthru
          _
        // Predicated region
        $region37: #{tpu_custom_call.1} parent=11 // pred_check
          %p680 = pneg %p182
        $region38: #{tpu_custom_call.1} parent=11 // pred_check_branch
          %682 = sbr.rel (%p680) target = $region40
        $region39: #{tpu_custom_call.1} parent=11 // pred_region
          %s684 = ssub.s32 16, 16
          %685 = vsyncadd [#allocation10], %s684
          %s687 = sshll.u32 [#allocation11], 4
          %s688 = int_to_ptr.vmem [resolvable:$true] %s687
          %690 = dma.hbm_to_vmem [thread:$0]  %s6, 16, %s688, [#allocation10]
        $region40: #{tpu_custom_call.1} parent=11 // pred_fallthru
          _
        // Predicated region
        $region41: #{tpu_custom_call.1} parent=11 // pred_check
          %p691 = pneg %p203
        $region42: #{tpu_custom_call.1} parent=11 // pred_check_branch
          %693 = sbr.rel (%p691) target = $region44
        $region43: #{tpu_custom_call.1} parent=11 // pred_region
          %s695 = ssub.s32 16, 16
          %696 = vsyncadd [#allocation13], %s695
          %s698 = sshll.u32 [#allocation12], 4
          %s699 = int_to_ptr.vmem [resolvable:$true] %s698
          %701 = dma.hbm_to_vmem [thread:$0]  %s7, 16, %s699, [#allocation13]
        $region44: #{tpu_custom_call.1} parent=11 // pred_fallthru
          _
        // Predicated region
        $region45: #{tpu_custom_call.1} parent=11 // pred_check
          %p702 = pneg %p224
        $region46: #{tpu_custom_call.1} parent=11 // pred_check_branch
          %704 = sbr.rel (%p702) target = $region48
        $region47: #{tpu_custom_call.1} parent=11 // pred_region
          _
        $region48: #{tpu_custom_call.1} parent=11 // pred_fallthru
          _
        // Predicated region
        $region49: #{tpu_custom_call.1} parent=11 // pred_check
          %p705 = pneg %p531
        $region50: #{tpu_custom_call.1} parent=11 // pred_check_branch
          %707 = sbr.rel (%p705) target = $region52
        $region51: #{tpu_custom_call.1} parent=11 // pred_region
          _
        $region52: #{tpu_custom_call.1} parent=11 // pred_fallthru
          _
        // Predicated region
        $region53: #{tpu_custom_call.1} parent=11 // pred_check
          %p708 = pneg %p552
        $region54: #{tpu_custom_call.1} parent=11 // pred_check_branch
          %710 = sbr.rel (%p708) target = $region56
        $region55: #{tpu_custom_call.1} parent=11 // pred_region
          _
        $region56: #{tpu_custom_call.1} parent=11 // pred_fallthru
          _
        // Predicated region
        $region57: #{tpu_custom_call.1} parent=11 // pred_check
          %p711 = pneg %p573
        $region58: #{tpu_custom_call.1} parent=11 // pred_check_branch
          %713 = sbr.rel (%p711) target = $region60
        $region59: #{tpu_custom_call.1} parent=11 // pred_region
          _
        $region60: #{tpu_custom_call.1} parent=11 // pred_fallthru
          _
        // Predicated region
        $region61: #{tpu_custom_call.1} parent=11 // pred_check
          %p714 = pneg %p594
        $region62: #{tpu_custom_call.1} parent=11 // pred_check_branch
          %716 = sbr.rel (%p714) target = $region64
        $region63: #{tpu_custom_call.1} parent=11 // pred_region
          _
        $region64: #{tpu_custom_call.1} parent=11 // pred_fallthru
          _
      $region12: #{tpu_custom_call.1} parent=5 // pred_fallthru
        _
      %p717 = scmp.lt.s32.totalorder %s35, 2
      // Predicated region
      $region65: #{tpu_custom_call.1} parent=5 // pred_check
        %p718 = pneg %p717
      $region66: #{tpu_custom_call.1} parent=5 // pred_check_branch
        %720 = sbr.rel (%p718) target = $region68
      $region67: #{tpu_custom_call.1} parent=5 // pred_region
        // Predicated region
        $region69: #{tpu_custom_call.1} parent=67 // pred_check
          %p721 = pneg %p244
        $region70: #{tpu_custom_call.1} parent=67 // pred_check_branch
          %723 = sbr.rel (%p721) target = $region72
        $region71: #{tpu_custom_call.1} parent=67 // pred_region
          %p724 = scmp.lt.s32.totalorder %s35, 1
          %s725 = scalar_select %p724, %s35, 1
          %s726 = scalar_lea.vmem %s9, %s725
        $region72: #{tpu_custom_call.1} parent=67 // pred_fallthru
          _
        // Predicated region
        $region73: #{tpu_custom_call.1} parent=67 // pred_check
          %p727 = pneg %p270
        $region74: #{tpu_custom_call.1} parent=67 // pred_check_branch
          %729 = sbr.rel (%p727) target = $region76
        $region75: #{tpu_custom_call.1} parent=67 // pred_region
          %p730 = scmp.lt.s32.totalorder %s35, 1
          %s731 = scalar_select %p730, %s35, 1
          %s732 = scalar_lea.vmem %s10, %s731
        $region76: #{tpu_custom_call.1} parent=67 // pred_fallthru
          _
        // Predicated region
        $region77: #{tpu_custom_call.1} parent=67 // pred_check
          %p733 = pneg %p296
        $region78: #{tpu_custom_call.1} parent=67 // pred_check_branch
          %735 = sbr.rel (%p733) target = $region80
        $region79: #{tpu_custom_call.1} parent=67 // pred_region
          %p736 = scmp.lt.s32.totalorder %s35, 1
          %s737 = scalar_select %p736, %s35, 1
          %s738 = smul.addr %s737, 4
          %s739 = smul.addr %s738, 4
          %s740 = scalar_lea.vmem %s11, %s739
        $region80: #{tpu_custom_call.1} parent=67 // pred_fallthru
          _
        // Predicated region
        $region81: #{tpu_custom_call.1} parent=67 // pred_check
          %p741 = pneg %p322
        $region82: #{tpu_custom_call.1} parent=67 // pred_check_branch
          %743 = sbr.rel (%p741) target = $region84
        $region83: #{tpu_custom_call.1} parent=67 // pred_region
          %p744 = scmp.lt.s32.totalorder %s35, 1
          %s745 = scalar_select %p744, %s35, 1
          %s746 = smul.addr %s745, 4
          %s747 = smul.addr %s746, 4
          %s748 = scalar_lea.vmem %s12, %s747
        $region84: #{tpu_custom_call.1} parent=67 // pred_fallthru
          _
        // Predicated region
        $region85: #{tpu_custom_call.1} parent=67 // pred_check
          %p749 = pneg %p348
        $region86: #{tpu_custom_call.1} parent=67 // pred_check_branch
          %751 = sbr.rel (%p749) target = $region88
        $region87: #{tpu_custom_call.1} parent=67 // pred_region
          %p752 = scmp.lt.s32.totalorder %s35, 1
          %s753 = scalar_select %p752, %s35, 1
          %s754 = scalar_lea.vmem %s13, %s753
        $region88: #{tpu_custom_call.1} parent=67 // pred_fallthru
          _
        // Predicated region
        $region89: #{tpu_custom_call.1} parent=67 // pred_check
          %p755 = pneg %p374
        $region90: #{tpu_custom_call.1} parent=67 // pred_check_branch
          %757 = sbr.rel (%p755) target = $region92
        $region91: #{tpu_custom_call.1} parent=67 // pred_region
          %p758 = scmp.lt.s32.totalorder %s35, 1
          %s759 = scalar_select %p758, %s35, 1
          %s760 = scalar_lea.vmem %s14, %s759
        $region92: #{tpu_custom_call.1} parent=67 // pred_fallthru
          _
        // Predicated region
        $region93: #{tpu_custom_call.1} parent=67 // pred_check
          %p761 = pneg %p400
        $region94: #{tpu_custom_call.1} parent=67 // pred_check_branch
          %763 = sbr.rel (%p761) target = $region96
        $region95: #{tpu_custom_call.1} parent=67 // pred_region
          %p764 = scmp.lt.s32.totalorder %s35, 1
          %s765 = scalar_select %p764, %s35, 1
          %s766 = scalar_lea.vmem %s15, %s765
        $region96: #{tpu_custom_call.1} parent=67 // pred_fallthru
          _
        // Predicated region
        $region97: #{tpu_custom_call.1} parent=67 // pred_check
          %p767 = pneg %p426
        $region98: #{tpu_custom_call.1} parent=67 // pred_check_branch
          %769 = sbr.rel (%p767) target = $region100
        $region99: #{tpu_custom_call.1} parent=67 // pred_region
          %p770 = scmp.lt.s32.totalorder %s35, 1
          %s771 = scalar_select %p770, %s35, 1
          %s772 = smul.addr %s771, 4
          %s773 = smul.addr %s772, 4
          %s774 = scalar_lea.vmem %s16, %s773
        $region100: #{tpu_custom_call.1} parent=67 // pred_fallthru
          _
        // Predicated region
        $region101: #{tpu_custom_call.1} parent=67 // pred_check
          %p775 = pneg %p452
        $region102: #{tpu_custom_call.1} parent=67 // pred_check_branch
          %777 = sbr.rel (%p775) target = $region104
        $region103: #{tpu_custom_call.1} parent=67 // pred_region
          %p778 = scmp.lt.s32.totalorder %s35, 1
          %s779 = scalar_select %p778, %s35, 1
          %s780 = scalar_lea.vmem %s17, %s779
        $region104: #{tpu_custom_call.1} parent=67 // pred_fallthru
          _
        // Predicated region
        $region105: #{tpu_custom_call.1} parent=67 // pred_check
          %p781 = pneg %p478
        $region106: #{tpu_custom_call.1} parent=67 // pred_check_branch
          %783 = sbr.rel (%p781) target = $region108
        $region107: #{tpu_custom_call.1} parent=67 // pred_region
          %p784 = scmp.lt.s32.totalorder %s35, 1
          %s785 = scalar_select %p784, %s35, 1
          %s786 = smul.addr %s785, 8
          %s787 = smul.addr %s786, 4
          %s788 = scalar_lea.vmem %s18, %s787
        $region108: #{tpu_custom_call.1} parent=67 // pred_fallthru
          _
        // Predicated region
        $region109: #{tpu_custom_call.1} parent=67 // pred_check
          %p789 = pneg %p504
        $region110: #{tpu_custom_call.1} parent=67 // pred_check_branch
          %791 = sbr.rel (%p789) target = $region112
        $region111: #{tpu_custom_call.1} parent=67 // pred_region
          %p792 = scmp.lt.s32.totalorder %s35, 1
          %s793 = scalar_select %p792, %s35, 1
          %s794 = scalar_lea.vmem %s19, %s793
        $region112: #{tpu_custom_call.1} parent=67 // pred_fallthru
          _
      $region68: #{tpu_custom_call.1} parent=5 // pred_fallthru
        _
      %p795 = scmp.le.s32.totalorder 1, %s35
      %p796 = scmp.lt.s32.totalorder %s35, 3
      %p797 = pnand %p795, %p796
      %p798 = pneg %p797
      // Predicated region
      $region113: #{tpu_custom_call.1} parent=5 // pred_check
        _
      $region114: #{tpu_custom_call.1} parent=5 // pred_check_branch
        %800 = sbr.rel (%p797) target = $region116
      $region115: #{tpu_custom_call.1} parent=5 // pred_region
        %s801 = ssub.s32 %s35, 1
        // Predicated region
        $region117: #{tpu_custom_call.1} parent=115 // pred_check
          %p802 = pneg %p77
        $region118: #{tpu_custom_call.1} parent=115 // pred_check_branch
          %804 = sbr.rel (%p802) target = $region120
        $region119: #{tpu_custom_call.1} parent=115 // pred_region
          %805 = dma.done [#allocation4], 16
        $region120: #{tpu_custom_call.1} parent=115 // pred_fallthru
          _
        // Predicated region
        $region121: #{tpu_custom_call.1} parent=115 // pred_check
          %p806 = pneg %p98
        $region122: #{tpu_custom_call.1} parent=115 // pred_check_branch
          %808 = sbr.rel (%p806) target = $region124
        $region123: #{tpu_custom_call.1} parent=115 // pred_region
          %809 = dma.done [#allocation7], 16
        $region124: #{tpu_custom_call.1} parent=115 // pred_fallthru
          _
        // Predicated region
        $region125: #{tpu_custom_call.1} parent=115 // pred_check
          %p810 = pneg %p140
        $region126: #{tpu_custom_call.1} parent=115 // pred_check_branch
          %812 = sbr.rel (%p810) target = $region128
        $region127: #{tpu_custom_call.1} parent=115 // pred_region
          %813 = dma.done [#allocation7], 16
        $region128: #{tpu_custom_call.1} parent=115 // pred_fallthru
          _
        // Predicated region
        $region129: #{tpu_custom_call.1} parent=115 // pred_check
          %p814 = pneg %p161
        $region130: #{tpu_custom_call.1} parent=115 // pred_check_branch
          %816 = sbr.rel (%p814) target = $region132
        $region131: #{tpu_custom_call.1} parent=115 // pred_region
          %817 = dma.done [#allocation10], 16
        $region132: #{tpu_custom_call.1} parent=115 // pred_fallthru
          _
        // Predicated region
        $region133: #{tpu_custom_call.1} parent=115 // pred_check
          %p818 = pneg %p182
        $region134: #{tpu_custom_call.1} parent=115 // pred_check_branch
          %820 = sbr.rel (%p818) target = $region136
        $region135: #{tpu_custom_call.1} parent=115 // pred_region
          %821 = dma.done [#allocation10], 16
        $region136: #{tpu_custom_call.1} parent=115 // pred_fallthru
          _
        // Predicated region
        $region137: #{tpu_custom_call.1} parent=115 // pred_check
          %p822 = pneg %p203
        $region138: #{tpu_custom_call.1} parent=115 // pred_check_branch
          %824 = sbr.rel (%p822) target = $region140
        $region139: #{tpu_custom_call.1} parent=115 // pred_region
          %825 = dma.done [#allocation13], 16
        $region140: #{tpu_custom_call.1} parent=115 // pred_fallthru
          _
        %p826 = pneg %p56
        %p827 = pneg %p53
        %p828 = pneg %p77
        %p829 = pneg %p74
        %p830 = pneg %p98
        %p831 = pneg %p95
        %p832 = pneg %p119
        %p833 = pneg %p116
        %p834 = pneg %p140
        %p835 = pneg %p137
        %p836 = pneg %p161
        %p837 = pneg %p158
        %p838 = pneg %p182
        %p839 = pneg %p179
        %p840 = pneg %p203
        %p841 = pneg %p200
        %p842 = pneg %p224
        %p843 = pneg %p221
        %p844 = scmp.lt.s32.totalorder %s40, 1
        %s845 = scalar_select %p844, %s40, 1
        %s846 = scalar_lea.vmem %s9, %s845
        %p847 = pneg %p250
        %p848 = pneg %p247
        %p849 = scmp.lt.s32.totalorder %s40, 1
        %s850 = scalar_select %p849, %s40, 1
        %s851 = scalar_lea.vmem %s10, %s850
        %p852 = pneg %p276
        %p853 = pneg %p273
        %p854 = scmp.lt.s32.totalorder %s40, 1
        %s855 = scalar_select %p854, %s40, 1
        %s856 = smul.addr %s855, 4
        %s857 = smul.addr %s856, 4
        %s858 = scalar_lea.vmem %s11, %s857
        %p859 = pneg %p302
        %p860 = pneg %p299
        %p861 = scmp.lt.s32.totalorder %s40, 1
        %s862 = scalar_select %p861, %s40, 1
        %s863 = smul.addr %s862, 4
        %s864 = smul.addr %s863, 4
        %s865 = scalar_lea.vmem %s12, %s864
        %p866 = pneg %p328
        %p867 = pneg %p325
        %p868 = scmp.lt.s32.totalorder %s40, 1
        %s869 = scalar_select %p868, %s40, 1
        %s870 = scalar_lea.vmem %s13, %s869
        %p871 = pneg %p354
        %p872 = pneg %p351
        %p873 = scmp.lt.s32.totalorder %s40, 1
        %s874 = scalar_select %p873, %s40, 1
        %s875 = scalar_lea.vmem %s14, %s874
        %p876 = pneg %p380
        %p877 = pneg %p377
        %p878 = scmp.lt.s32.totalorder %s40, 1
        %s879 = scalar_select %p878, %s40, 1
        %s880 = scalar_lea.vmem %s15, %s879
        %p881 = pneg %p406
        %p882 = pneg %p403
        %p883 = scmp.lt.s32.totalorder %s40, 1
        %s884 = scalar_select %p883, %s40, 1
        %s885 = smul.addr %s884, 4
        %s886 = smul.addr %s885, 4
        %s887 = scalar_lea.vmem %s16, %s886
        %p888 = pneg %p432
        %p889 = pneg %p429
        %p890 = scmp.lt.s32.totalorder %s40, 1
        %s891 = scalar_select %p890, %s40, 1
        %s892 = scalar_lea.vmem %s17, %s891
        %p893 = pneg %p458
        %p894 = pneg %p455
        %p895 = scmp.lt.s32.totalorder %s40, 1
        %s896 = scalar_select %p895, %s40, 1
        %s897 = smul.addr %s896, 8
        %s898 = smul.addr %s897, 4
        %s899 = scalar_lea.vmem %s18, %s898
        %p900 = pneg %p484
        %p901 = pneg %p481
        %p902 = scmp.lt.s32.totalorder %s40, 1
        %s903 = scalar_select %p902, %s40, 1
        %s904 = scalar_lea.vmem %s19, %s903
        %p905 = pneg %p510
        %p906 = pneg %p507
        %p907 = pneg %p531
        %p908 = pneg %p528
        %p909 = pneg %p552
        %p910 = pneg %p549
        %p911 = pneg %p573
        %p912 = pneg %p570
        %p913 = pneg %p594
        %p914 = pneg %p591
        %p915 = pneg %p615
        %p916 = pneg %p612
        %p917 = scmp.lt.s32.totalorder %s40, 1
        %s918 = scalar_select %p917, %s40, 1
        %s919 = scalar_lea.vmem %s9, %s918
        %p920 = scmp.lt.s32.totalorder %s40, 1
        %s921 = scalar_select %p920, %s40, 1
        %s922 = scalar_lea.vmem %s10, %s921
        %p923 = scmp.lt.s32.totalorder %s40, 1
        %s924 = scalar_select %p923, %s40, 1
        %s925 = smul.addr %s924, 4
        %s926 = smul.addr %s925, 4
        %s927 = scalar_lea.vmem %s11, %s926
        %p928 = scmp.lt.s32.totalorder %s40, 1
        %s929 = scalar_select %p928, %s40, 1
        %s930 = smul.addr %s929, 4
        %s931 = smul.addr %s930, 4
        %s932 = scalar_lea.vmem %s12, %s931
        %p933 = scmp.lt.s32.totalorder %s40, 1
        %s934 = scalar_select %p933, %s40, 1
        %s935 = scalar_lea.vmem %s13, %s934
        %p936 = scmp.lt.s32.totalorder %s40, 1
        %s937 = scalar_select %p936, %s40, 1
        %s938 = scalar_lea.vmem %s14, %s937
        %p939 = scmp.lt.s32.totalorder %s40, 1
        %s940 = scalar_select %p939, %s40, 1
        %s941 = scalar_lea.vmem %s15, %s940
        %p942 = scmp.lt.s32.totalorder %s40, 1
        %s943 = scalar_select %p942, %s40, 1
        %s944 = smul.addr %s943, 4
        %s945 = smul.addr %s944, 4
        %s946 = scalar_lea.vmem %s16, %s945
        %p947 = scmp.lt.s32.totalorder %s40, 1
        %s948 = scalar_select %p947, %s40, 1
        %s949 = scalar_lea.vmem %s17, %s948
        %p950 = scmp.lt.s32.totalorder %s40, 1
        %s951 = scalar_select %p950, %s40, 1
        %s952 = smul.addr %s951, 8
        %s953 = smul.addr %s952, 4
        %s954 = scalar_lea.vmem %s18, %s953
        %p955 = scmp.lt.s32.totalorder %s40, 1
        %s956 = scalar_select %p955, %s40, 1
        %s957 = scalar_lea.vmem %s19, %s956
        %p959 = scmp.eq.s32.totalorder %s40, 0
        // Predicated region
        $region141: #{tpu_custom_call.1} parent=115 // pred_check
          %p960 = pneg %p959
        $region142: #{tpu_custom_call.1} parent=115 // pred_check_branch
          %962 = sbr.rel (%p960) target = $region144
        $region143: #{tpu_custom_call.1} parent=115 // pred_region
          %v963 = vld [vmem:[%s0] sm:$0xff]
          %v964 = vld [vmem:[%s0 + $0x8] sm:$0xff]
          %v965 = vld [vmem:[%s0 + $0x10] sm:$0xff]
          %v966 = vld [vmem:[%s0 + $0x18] sm:$0xff]
          %v967 = vld [vmem:[#allocation3] sm:$0x1]
          %v968 = vld [vmem:[#allocation6] sm:$0x1]
          %vm969 = vcmask 392192
          %v970 = vsel %vm969, %v963, 0.0
          %971 = vadd.xlane.f32.xlu0 %v970
          %v972 = vpop.xlane.xlu0 %971
          %v973 = vsel %vm969, %v964, 0.0
          %974 = vadd.xlane.f32.xlu0 %v973
          %v975 = vpop.xlane.xlu0 %974
          %v976 = vsel %vm969, %v965, 0.0
          %977 = vadd.xlane.f32.xlu0 %v976
          %v978 = vpop.xlane.xlu0 %977
          %v979 = vsel %vm969, %v966, 0.0
          %980 = vadd.xlane.f32.xlu0 %v979
          %v981 = vpop.xlane.xlu0 %980
          %v982 = vrcp.pop 48.0
          %v983 = vmul.f32 %v972, %v982
          %v984 = vmul.f32 %v975, %v982
          %v985 = vmul.f32 %v978, %v982
          %v986 = vmul.f32 %v981, %v982
          %v987 = vsub.f32 %v963, %v983
          %v988 = vsub.f32 %v964, %v984
          %v989 = vsub.f32 %v965, %v985
          %v990 = vsub.f32 %v966, %v986
          %v991 = vmul.f32 %v987, %v987
          %v992 = vmul.f32 %v988, %v988
          %v993 = vmul.f32 %v989, %v989
          %v994 = vmul.f32 %v990, %v990
          %v995 = vsel %vm969, %v991, 0.0
          %996 = vadd.xlane.f32.xlu0 %v995
          %v997 = vpop.xlane.xlu0 %996
          %v998 = vsel %vm969, %v992, 0.0
          %999 = vadd.xlane.f32.xlu0 %v998
          %v1000 = vpop.xlane.xlu0 %999
          %v1001 = vsel %vm969, %v993, 0.0
          %1002 = vadd.xlane.f32.xlu0 %v1001
          %v1003 = vpop.xlane.xlu0 %1002
          %v1004 = vsel %vm969, %v994, 0.0
          %1005 = vadd.xlane.f32.xlu0 %v1004
          %v1006 = vpop.xlane.xlu0 %1005
          %v1007 = vmul.f32 %v997, %v982
          %v1008 = vmul.f32 %v1000, %v982
          %v1009 = vmul.f32 %v1003, %v982
          %v1010 = vmul.f32 %v1006, %v982
          %v1011 = vadd.f32 %v1007, 1e-05
          %v1012 = vadd.f32 %v1008, 1e-05
          %v1013 = vadd.f32 %v1009, 1e-05
          %v1014 = vadd.f32 %v1010, 1e-05
          %v1015 = vrsqrt.pop %v1011
          %v1016 = vrsqrt.pop %v1012
          %v1017 = vrsqrt.pop %v1013
          %v1018 = vrsqrt.pop %v1014
          %v1019 = vmul.f32 %v987, %v1015
          %v1020 = vmul.f32 %v988, %v1016
          %v1021 = vmul.f32 %v989, %v1017
          %v1022 = vmul.f32 %v990, %v1018
          %v1024 = vlaneseq
          %v1025 = vshrl.u32 %v1024, 7
          %v1026 = vsub.s32 0, %v1025
          %v1027 = vrot.slane %v967, %v1026
          %v1029 = vmul.f32 %v1019, %v1027
          %v1030 = vmul.f32 %v1020, %v1027
          %v1031 = vmul.f32 %v1021, %v1027
          %v1032 = vmul.f32 %v1022, %v1027
          %v1034 = vlaneseq
          %v1035 = vshrl.u32 %v1034, 7
          %v1036 = vsub.s32 0, %v1035
          %v1037 = vrot.slane %v968, %v1036
          %v1039 = vadd.f32 %v1029, %v1037
          %v1040 = vadd.f32 %v1030, %v1037
          %v1041 = vadd.f32 %v1031, %v1037
          %v1042 = vadd.f32 %v1032, %v1037
          %v1043 = vpack.c.bf16 %v1040, %v1039
          %v1044 = vpack.c.bf16 %v1042, %v1041
          %v1045 = vld [vmem:[%s3] sm:$0xf]
          %v1046 = vld [vmem:[%s3 + $0x4] sm:$0xf]
          %v1047 = vld [vmem:[%s3 + $0x8] sm:$0xf]
          %v1048 = vld [vmem:[%s3 + $0xc] sm:$0xf]
          %v1049 = vld [vmem:[%s3 + $0x10] sm:$0xf]
          %v1050 = vld [vmem:[%s3 + $0x14] sm:$0xf]
          %v1051 = vld [vmem:[#allocation8] sm:$0x1]
          %v1053 = vlaneseq
          %v1054 = vshrl.u32 %v1053, 7
          %v1055 = vsub.s32 0, %v1054
          %v1056 = vrot.slane %v1051, %v1055
          %v1064 = vunpack.c.l.b16 %v1045
          %v1065 = vunpack.c.l.b16 %v1046
          %v1066 = vunpack.c.l.b16 %v1047
          %v1067 = vunpack.c.l.b16 %v1048
          %v1068 = vunpack.c.l.b16 %v1049
          %v1069 = vunpack.c.l.b16 %v1050
          %v1070 = vpack.c.b16 %v1065, %v1064
          %v1071 = vpack.c.b16 %v1067, %v1066
          %v1072 = vpack.c.b16 %v1069, %v1068
          %v1077 = vsel %vm969, %v1043, 0
          %v1080 = vsel %vm969, %v1044, 0
          %1082 = vmatprep.subr.bf16.mxu0 0
          %1083 = vmatpush1.bf16.msra.mxu0 %v1070
          %1084 = vmatprep.subr.bf16.mxu0 0
          %1085 = vmatpush1.bf16.msra.mxu0 %v1071
          %1086 = vmatprep.subr.bf16.mxu0 0
          %1087 = vmatpush1.bf16.msra.mxu0 %v1072
          %1088 = vmatprep.subr.bf16.mxu0 0
          %1089 = vmatpush1.bf16.msra.mxu0 0
          %1090 = vmatprep.subr.bf16.mxu0 0
          %1091 = vmatpush1.bf16.msra.mxu0 0
          %1092 = vmatprep.subr.bf16.mxu0 0
          %1093 = vmatpush1.bf16.msra.mxu0 0
          %1094 = vmatprep.subr.bf16.mxu0 0
          %1095 = vmatpush1.bf16.msra.mxu0 0
          %1096 = vmatprep.subr.bf16.mxu0 0
          %1097 = vmatpush1.bf16.msra.mxu0 0
          %1098 = vmatprep.subr.bf16.mxu0 0
          %1099 = vmatpush1.bf16.msra.mxu0 0
          %1100 = vmatprep.subr.bf16.mxu0 0
          %1101 = vmatpush1.bf16.msra.mxu0 0
          %1102 = vmatprep.subr.bf16.mxu0 0
          %1103 = vmatpush1.bf16.msra.mxu0 0
          %1104 = vmatprep.subr.bf16.mxu0 0
          %1105 = vmatpush1.bf16.msra.mxu0 0
          %1106 = vmatprep.subr.bf16.mxu0 0
          %1107 = vmatpush1.bf16.msra.mxu0 0
          %1108 = vmatprep.subr.bf16.mxu0 0
          %1109 = vmatpush1.bf16.msra.mxu0 0
          %1110 = vmatprep.subr.bf16.mxu0 0
          %1111 = vmatpush1.bf16.msra.mxu0 0
          %1112 = vmatprep.subr.bf16.mxu0 0
          %1113 = vmatpush1.bf16.msra.mxu0 0
          %1114 = vmatprep.mubr.bf16.mxu0 0
          %1115 = vmatmul.mubr.bf16.gmra.mrb[0].mxu0 %v1077
          %v1116 = vpop.f32.mrb[0].mxu0
          %v1117 = vadd.f32 %v1056, %v1116
          %v1118 = vpop.f32.mrb[0].mxu0
          %v1119 = vpop.f32.mrb[0].mxu0
          %v1120 = vadd.f32 %v1056, %v1119
          %v1121 = vpop.f32.mrb[0].mxu0
          %1122 = vmatprep.mubr.bf16.mxu0 0
          %1123 = vmatmul.mubr.bf16.gmra.mrb[0].mxu0 %v1080
          %v1124 = vpop.f32.mrb[0].mxu0
          %v1125 = vadd.f32 %v1056, %v1124
          %v1126 = vpop.f32.mrb[0].mxu0
          %v1127 = vpop.f32.mrb[0].mxu0
          %v1128 = vadd.f32 %v1056, %v1127
          %v1129 = vpop.f32.mrb[0].mxu0
          %1130 = vdwg.mxu0
          %v1131 = vld [vmem:[#allocation9] sm:$0x1]
          %v1132 = vld [vmem:[#allocation11] sm:$0x1]
          %vm1133 = vcmask 261120
          %v1134 = vsel %vm1133, %v1117, 0.0
          %1135 = vadd.xlane.f32.xlu0 %v1134
          %v1136 = vpop.xlane.xlu0 %1135
          %v1137 = vsel %vm1133, %v1120, 0.0
          %1138 = vadd.xlane.f32.xlu0 %v1137
          %v1139 = vpop.xlane.xlu0 %1138
          %v1140 = vsel %vm1133, %v1125, 0.0
          %1141 = vadd.xlane.f32.xlu0 %v1140
          %v1142 = vpop.xlane.xlu0 %1141
          %v1143 = vsel %vm1133, %v1128, 0.0
          %1144 = vadd.xlane.f32.xlu0 %v1143
          %v1145 = vpop.xlane.xlu0 %1144
          %v1146 = vrcp.pop 32.0
          %v1147 = vmul.f32 %v1136, %v1146
          %v1148 = vmul.f32 %v1139, %v1146
          %v1149 = vmul.f32 %v1142, %v1146
          %v1150 = vmul.f32 %v1145, %v1146
          %v1151 = vsub.f32 %v1117, %v1147
          %v1152 = vsub.f32 %v1120, %v1148
          %v1153 = vsub.f32 %v1125, %v1149
          %v1154 = vsub.f32 %v1128, %v1150
          %v1155 = vmul.f32 %v1151, %v1151
          %v1156 = vmul.f32 %v1152, %v1152
          %v1157 = vmul.f32 %v1153, %v1153
          %v1158 = vmul.f32 %v1154, %v1154
          %v1159 = vsel %vm1133, %v1155, 0.0
          %1160 = vadd.xlane.f32.xlu0 %v1159
          %v1161 = vpop.xlane.xlu0 %1160
          %v1162 = vsel %vm1133, %v1156, 0.0
          %1163 = vadd.xlane.f32.xlu0 %v1162
          %v1164 = vpop.xlane.xlu0 %1163
          %v1165 = vsel %vm1133, %v1157, 0.0
          %1166 = vadd.xlane.f32.xlu0 %v1165
          %v1167 = vpop.xlane.xlu0 %1166
          %v1168 = vsel %vm1133, %v1158, 0.0
          %1169 = vadd.xlane.f32.xlu0 %v1168
          %v1170 = vpop.xlane.xlu0 %1169
          %v1171 = vmul.f32 %v1161, %v1146
          %v1172 = vmul.f32 %v1164, %v1146
          %v1173 = vmul.f32 %v1167, %v1146
          %v1174 = vmul.f32 %v1170, %v1146
          %v1175 = vadd.f32 %v1171, 1e-05
          %v1176 = vadd.f32 %v1172, 1e-05
          %v1177 = vadd.f32 %v1173, 1e-05
          %v1178 = vadd.f32 %v1174, 1e-05
          %v1179 = vrsqrt.pop %v1175
          %v1180 = vrsqrt.pop %v1176
          %v1181 = vrsqrt.pop %v1177
          %v1182 = vrsqrt.pop %v1178
          %v1183 = vmul.f32 %v1151, %v1179
          %v1184 = vmul.f32 %v1152, %v1180
          %v1185 = vmul.f32 %v1153, %v1181
          %v1186 = vmul.f32 %v1154, %v1182
          %v1188 = vlaneseq
          %v1189 = vshrl.u32 %v1188, 7
          %v1190 = vsub.s32 0, %v1189
          %v1191 = vrot.slane %v1131, %v1190
          %v1193 = vmul.f32 %v1183, %v1191
          %v1194 = vmul.f32 %v1184, %v1191
          %v1195 = vmul.f32 %v1185, %v1191
          %v1196 = vmul.f32 %v1186, %v1191
          %v1198 = vlaneseq
          %v1199 = vshrl.u32 %v1198, 7
          %v1200 = vsub.s32 0, %v1199
          %v1201 = vrot.slane %v1132, %v1200
          %v1203 = vadd.f32 %v1193, %v1201
          %v1204 = vadd.f32 %v1194, %v1201
          %v1205 = vadd.f32 %v1195, %v1201
          %v1206 = vadd.f32 %v1196, %v1201
          %v1207 = vld [vmem:[%s8] sm:$0xff]
          %v1208 = vld [vmem:[%s8 + $0x8] sm:$0xff]
          %v1209 = vld [vmem:[%s8 + $0x10] sm:$0x1]
          %v1210 = vld [vmem:[#allocation12] sm:$0x1]
          %v1211 = vadd.f32 %v1210, %v1207
          %1212 = vst.msk [vmem:[#allocation2] sm:$0xff] %vm1133, 0.0
          %1213 = vst.msk [vmem:[#allocation2 + $0x8] sm:$0xff] %vm1133, 0.0
          %1214 = vst.msk [vmem:[#allocation2 + $0x10] sm:$0xff] %vm1133, 0.0
          %1215 = vst.msk [vmem:[#allocation2 + $0x18] sm:$0xff] %vm1133, 0.0
          %1216 = vst.msk [vmem:[#allocation2 + $0x20] sm:$0xff] %vm1133, 0.0
          %1217 = vst.msk [vmem:[#allocation2 + $0x28] sm:$0xff] %vm1133, 0.0
          %vm1221 = vcmask 1046528
          %v1222 = vrot.slane %v1207, 1
          %v1223 = vrot.slane %v1208, 1
          %v1224 = vsel %vm1221, %v1222, %v1223
          %v1225 = vrot.slane %v1209, 1
          %v1226 = vsel %vm1221, %v1223, %v1225
          %v1229 = vadd.f32 %v1203, %v1224
          %v1230 = vadd.f32 %v1204, %v1226
          %1231 = vst.msk [vmem:[#allocation2 + $0x1] sm:$0xff] %vm1133, %v1229
          %1232 = vst.msk [vmem:[#allocation2 + $0x9] sm:$0xff] %vm1133, %v1230
          %vm1233 = vcmask 253952
          %1234 = vst.msk [vmem:[#allocation2] sm:$0x1] %vm1233, %v1211
          %v1235 = vadd.f32 %v1205, %v1224
          %v1236 = vadd.f32 %v1206, %v1226
          %1237 = vst.msk [vmem:[#allocation2 + $0x19] sm:$0xff] %vm1133, %v1235
          %1238 = vst.msk [vmem:[#allocation2 + $0x21] sm:$0xff] %vm1133, %v1236
          %1239 = vst.msk [vmem:[#allocation2 + $0x18] sm:$0x1] %vm1233, %v1211
        $region144: #{tpu_custom_call.1} parent=115 // pred_fallthru
          _
        %v1240 = vld [vmem:[#allocation2] sm:$0xff]
        %v1241 = vld [vmem:[#allocation2 + $0x8] sm:$0xff]
        %v1242 = vld [vmem:[#allocation2 + $0x10] sm:$0xff]
        %v1243 = vld [vmem:[#allocation2 + $0x18] sm:$0xff]
        %v1244 = vld [vmem:[#allocation2 + $0x20] sm:$0xff]
        %v1245 = vld [vmem:[#allocation2 + $0x28] sm:$0xff]
        %v1246 = vlaneseq
        %v1247 = vand.u32 %v1246, 127
        %vm1248 = vcmp.lt.s32.totalorder %v1247, 17
        %v1249 = vsel %vm1248, 0.0, -1e+30
        %v1250 = vld [vmem:[%s919] sm:$0x1]
        %v1251 = vld [vmem:[%s922] sm:$0x1]
        %vm1252 = vcmask 261120
        %v1253 = vsel %vm1252, %v1240, 0.0
        %1254 = vadd.xlane.f32.xlu0 %v1253
        %v1255 = vpop.xlane.xlu0 %1254
        %v1256 = vsel %vm1252, %v1241, 0.0
        %1257 = vadd.xlane.f32.xlu0 %v1256
        %v1258 = vpop.xlane.xlu0 %1257
        %v1259 = vsel %vm1252, %v1242, 0.0
        %1260 = vadd.xlane.f32.xlu0 %v1259
        %v1261 = vpop.xlane.xlu0 %1260
        %v1262 = vsel %vm1252, %v1243, 0.0
        %1263 = vadd.xlane.f32.xlu0 %v1262
        %v1264 = vpop.xlane.xlu0 %1263
        %v1265 = vsel %vm1252, %v1244, 0.0
        %1266 = vadd.xlane.f32.xlu0 %v1265
        %v1267 = vpop.xlane.xlu0 %1266
        %v1268 = vsel %vm1252, %v1245, 0.0
        %1269 = vadd.xlane.f32.xlu0 %v1268
        %v1270 = vpop.xlane.xlu0 %1269
        %v1271 = vrcp.pop 32.0
        %v1272 = vmul.f32 %v1255, %v1271
        %v1273 = vmul.f32 %v1258, %v1271
        %v1274 = vmul.f32 %v1261, %v1271
        %v1275 = vmul.f32 %v1264, %v1271
        %v1276 = vmul.f32 %v1267, %v1271
        %v1277 = vmul.f32 %v1270, %v1271
        %v1278 = vsub.f32 %v1240, %v1272
        %v1279 = vsub.f32 %v1241, %v1273
        %v1280 = vsub.f32 %v1242, %v1274
        %v1281 = vsub.f32 %v1243, %v1275
        %v1282 = vsub.f32 %v1244, %v1276
        %v1283 = vsub.f32 %v1245, %v1277
        %v1284 = vmul.f32 %v1278, %v1278
        %v1285 = vmul.f32 %v1279, %v1279
        %v1286 = vmul.f32 %v1280, %v1280
        %v1287 = vmul.f32 %v1281, %v1281
        %v1288 = vmul.f32 %v1282, %v1282
        %v1289 = vmul.f32 %v1283, %v1283
        %v1290 = vsel %vm1252, %v1284, 0.0
        %1291 = vadd.xlane.f32.xlu0 %v1290
        %v1292 = vpop.xlane.xlu0 %1291
        %v1293 = vsel %vm1252, %v1285, 0.0
        %1294 = vadd.xlane.f32.xlu0 %v1293
        %v1295 = vpop.xlane.xlu0 %1294
        %v1296 = vsel %vm1252, %v1286, 0.0
        %1297 = vadd.xlane.f32.xlu0 %v1296
        %v1298 = vpop.xlane.xlu0 %1297
        %v1299 = vsel %vm1252, %v1287, 0.0
        %1300 = vadd.xlane.f32.xlu0 %v1299
        %v1301 = vpop.xlane.xlu0 %1300
        %v1302 = vsel %vm1252, %v1288, 0.0
        %1303 = vadd.xlane.f32.xlu0 %v1302
        %v1304 = vpop.xlane.xlu0 %1303
        %v1305 = vsel %vm1252, %v1289, 0.0
        %1306 = vadd.xlane.f32.xlu0 %v1305
        %v1307 = vpop.xlane.xlu0 %1306
        %v1308 = vmul.f32 %v1292, %v1271
        %v1309 = vmul.f32 %v1295, %v1271
        %v1310 = vmul.f32 %v1298, %v1271
        %v1311 = vmul.f32 %v1301, %v1271
        %v1312 = vmul.f32 %v1304, %v1271
        %v1313 = vmul.f32 %v1307, %v1271
        %v1314 = vadd.f32 %v1308, 1e-05
        %v1315 = vadd.f32 %v1309, 1e-05
        %v1316 = vadd.f32 %v1310, 1e-05
        %v1317 = vadd.f32 %v1311, 1e-05
        %v1318 = vadd.f32 %v1312, 1e-05
        %v1319 = vadd.f32 %v1313, 1e-05
        %v1320 = vrsqrt.pop %v1314
        %v1321 = vrsqrt.pop %v1315
        %v1322 = vrsqrt.pop %v1316
        %v1323 = vrsqrt.pop %v1317
        %v1324 = vrsqrt.pop %v1318
        %v1325 = vrsqrt.pop %v1319
        %v1326 = vmul.f32 %v1278, %v1320
        %v1327 = vmul.f32 %v1279, %v1321
        %v1328 = vmul.f32 %v1280, %v1322
        %v1329 = vmul.f32 %v1281, %v1323
        %v1330 = vmul.f32 %v1282, %v1324
        %v1331 = vmul.f32 %v1283, %v1325
        %v1333 = vlaneseq
        %v1334 = vshrl.u32 %v1333, 7
        %v1335 = vsub.s32 0, %v1334
        %v1336 = vrot.slane %v1250, %v1335
        %v1338 = vmul.f32 %v1326, %v1336
        %v1339 = vmul.f32 %v1327, %v1336
        %v1340 = vmul.f32 %v1328, %v1336
        %v1341 = vmul.f32 %v1329, %v1336
        %v1342 = vmul.f32 %v1330, %v1336
        %v1343 = vmul.f32 %v1331, %v1336
        %v1345 = vlaneseq
        %v1346 = vshrl.u32 %v1345, 7
        %v1347 = vsub.s32 0, %v1346
        %v1348 = vrot.slane %v1251, %v1347
        %v1350 = vadd.f32 %v1338, %v1348
        %v1351 = vadd.f32 %v1339, %v1348
        %v1352 = vadd.f32 %v1340, %v1348
        %v1353 = vadd.f32 %v1341, %v1348
        %v1354 = vadd.f32 %v1342, %v1348
        %v1355 = vadd.f32 %v1343, %v1348
        %v1356 = vpack.c.bf16 %v1351, %v1350
        %v1357 = vpack.c.bf16 %v1353, %v1352
        %v1358 = vpack.c.bf16 %v1355, %v1354
        %v1359 = vld [vmem:[%s927] sm:$0xf]
        %v1360 = vld [vmem:[%s927 + $0x4] sm:$0xf]
        %v1361 = vld [vmem:[%s927 + $0x8] sm:$0xf]
        %v1362 = vld [vmem:[%s927 + $0xc] sm:$0xf]
        %v1367 = vunpack.c.l.b16 %v1359
        %v1368 = vunpack.c.l.b16 %v1360
        %v1369 = vunpack.c.l.b16 %v1361
        %v1370 = vunpack.c.l.b16 %v1362
        %v1371 = vpack.c.b16 %v1368, %v1367
        %v1372 = vpack.c.b16 %v1370, %v1369
        %v1376 = vsel %vm1252, %v1356, 0
        %v1379 = vsel %vm1252, %v1357, 0
        %v1382 = vsel %vm1252, %v1358, 0
        %1384 = vmatprep.subr.bf16.mxu0 0
        %1385 = vmatpush1.bf16.msra.mxu0 %v1371
        %1386 = vmatprep.subr.bf16.mxu0 0
        %1387 = vmatpush1.bf16.msra.mxu0 %v1372
        %1388 = vmatprep.subr.bf16.mxu0 0
        %1389 = vmatpush1.bf16.msra.mxu0 0
        %1390 = vmatprep.subr.bf16.mxu0 0
        %1391 = vmatpush1.bf16.msra.mxu0 0
        %1392 = vmatprep.subr.bf16.mxu0 0
        %1393 = vmatpush1.bf16.msra.mxu0 0
        %1394 = vmatprep.subr.bf16.mxu0 0
        %1395 = vmatpush1.bf16.msra.mxu0 0
        %1396 = vmatprep.subr.bf16.mxu0 0
        %1397 = vmatpush1.bf16.msra.mxu0 0
        %1398 = vmatprep.subr.bf16.mxu0 0
        %1399 = vmatpush1.bf16.msra.mxu0 0
        %1400 = vmatprep.subr.bf16.mxu0 0
        %1401 = vmatpush1.bf16.msra.mxu0 0
        %1402 = vmatprep.subr.bf16.mxu0 0
        %1403 = vmatpush1.bf16.msra.mxu0 0
        %1404 = vmatprep.subr.bf16.mxu0 0
        %1405 = vmatpush1.bf16.msra.mxu0 0
        %1406 = vmatprep.subr.bf16.mxu0 0
        %1407 = vmatpush1.bf16.msra.mxu0 0
        %1408 = vmatprep.subr.bf16.mxu0 0
        %1409 = vmatpush1.bf16.msra.mxu0 0
        %1410 = vmatprep.subr.bf16.mxu0 0
        %1411 = vmatpush1.bf16.msra.mxu0 0
        %1412 = vmatprep.subr.bf16.mxu0 0
        %1413 = vmatpush1.bf16.msra.mxu0 0
        %1414 = vmatprep.subr.bf16.mxu0 0
        %1415 = vmatpush1.bf16.msra.mxu0 0
        %1416 = vmatprep.mubr.bf16.mxu0 0
        %1417 = vmatmul.mubr.bf16.gmra.mrb[0].mxu0 %v1376
        %v1418 = vpop.f32.mrb[0].mxu0
        %v1419 = vadd.f32 0.0, %v1418
        %v1420 = vpop.f32.mrb[0].mxu0
        %v1421 = vpop.f32.mrb[0].mxu0
        %v1422 = vadd.f32 0.0, %v1421
        %v1423 = vpop.f32.mrb[0].mxu0
        %1424 = vmatprep.mubr.bf16.mxu0 0
        %1425 = vmatmul.mubr.bf16.gmra.mrb[0].mxu0 %v1379
        %v1426 = vpop.f32.mrb[0].mxu0
        %v1427 = vadd.f32 0.0, %v1426
        %v1428 = vpop.f32.mrb[0].mxu0
        %v1429 = vpop.f32.mrb[0].mxu0
        %v1430 = vadd.f32 0.0, %v1429
        %v1431 = vpop.f32.mrb[0].mxu0
        %1432 = vmatprep.mubr.bf16.mxu0 0
        %1433 = vmatmul.mubr.bf16.gmra.mrb[0].mxu0 %v1382
        %v1434 = vpop.f32.mrb[0].mxu0
        %v1435 = vadd.f32 0.0, %v1434
        %v1436 = vpop.f32.mrb[0].mxu0
        %v1437 = vpop.f32.mrb[0].mxu0
        %v1438 = vadd.f32 0.0, %v1437
        %v1439 = vpop.f32.mrb[0].mxu0
        %1440 = vdwg.mxu0
        %v1441 = vld [vmem:[%s932] sm:$0xf]
        %v1442 = vld [vmem:[%s932 + $0x4] sm:$0xf]
        %v1443 = vld [vmem:[%s932 + $0x8] sm:$0xf]
        %v1444 = vld [vmem:[%s932 + $0xc] sm:$0xf]
        %v1445 = vpack.c.bf16 %v1422, %v1419
        %v1446 = vpack.c.bf16 %v1430, %v1427
        %v1447 = vpack.c.bf16 %v1438, %v1435
        %v1451 = vunpack.c.l.b16 %v1445
        %v1452 = vunpack.c.h.b16 %v1445
        %v1453 = vunpack.c.l.b16 %v1446
        %v1454 = vunpack.c.h.b16 %v1446
        %v1455 = vunpack.c.l.b16 %v1447
        %v1456 = vunpack.c.h.b16 %v1447
        %v1457 = vpack.c.b16 %v1452, %v1451
        %v1458 = vpack.c.b16 %v1453, %v1453
        %1459 = vrot.lane.b32.xlu0 %v1457, 96
        %v1460 = vpop.permute.xlu0 %1459
        %1461 = vrot.lane.b32.xlu0 %v1458, 96
        %v1462 = vpop.permute.xlu0 %1461
        %vm1463 = vcmask 64512
        %v1465 = vsel %vm1463, %v1457, 0
        %v1468 = vsel %vm1463, %v1458, 0
        %v1471 = vsel %vm1463, %v1460, 0
        %v1474 = vsel %vm1463, %v1462, 0
        %1476 = vmatprep.subr.bf16.mxu0 0
        %1477 = vmatpush1.bf16.xpose.msra.mxu0 %v1471
        %1478 = vmatprep.subr.bf16.mxu0 0
        %1479 = vmatpush1.bf16.xpose.msra.mxu0 %v1474
        %1480 = vmatprep.subr.bf16.mxu0 0
        %1481 = vmatpush1.bf16.xpose.msra.mxu0 0
        %1482 = vmatprep.subr.bf16.mxu0 0
        %1483 = vmatpush1.bf16.xpose.msra.mxu0 0
        %1484 = vmatprep.subr.bf16.mxu0 0
        %1485 = vmatpush1.bf16.xpose.msra.mxu0 0
        %1486 = vmatprep.subr.bf16.mxu0 0
        %1487 = vmatpush1.bf16.xpose.msra.mxu0 0
        %1488 = vmatprep.subr.bf16.mxu0 0
        %1489 = vmatpush1.bf16.xpose.msra.mxu0 0
        %1490 = vmatprep.subr.bf16.mxu0 0
        %1491 = vmatpush1.bf16.xpose.msra.mxu0 0
        %1492 = vmatprep.subr.bf16.mxu0 0
        %1493 = vmatpush1.bf16.xpose.msra.mxu0 0
        %1494 = vmatprep.subr.bf16.mxu0 0
        %1495 = vmatpush1.bf16.xpose.msra.mxu0 0
        %1496 = vmatprep.subr.bf16.mxu0 0
        %1497 = vmatpush1.bf16.xpose.msra.mxu0 0
        %1498 = vmatprep.subr.bf16.mxu0 0
        %1499 = vmatpush1.bf16.xpose.msra.mxu0 0
        %1500 = vmatprep.subr.bf16.mxu0 0
        %1501 = vmatpush1.bf16.xpose.msra.mxu0 0
        %1502 = vmatprep.subr.bf16.mxu0 0
        %1503 = vmatpush1.bf16.xpose.msra.mxu0 0
        %1504 = vmatprep.subr.bf16.mxu0 0
        %1505 = vmatpush1.bf16.xpose.msra.mxu0 0
        %1506 = vmatprep.subr.bf16.mxu0 0
        %1507 = vmatpush1.bf16.xpose.msra.mxu0 0
        %1508 = vmatprep.mubr.bf16.mxu0 0
        %1509 = vmatmul.mubr.bf16.gmra.mrb[0].mxu0 %v1465
        %v1510 = vpop.f32.mrb[0].mxu0
        %v1511 = vadd.f32 0.0, %v1510
        %v1512 = vpop.f32.mrb[0].mxu0
        %v1513 = vpop.f32.mrb[0].mxu0
        %v1514 = vadd.f32 0.0, %v1513
        %v1515 = vpop.f32.mrb[0].mxu0
        %1516 = vmatprep.mubr.bf16.mxu0 0
        %1517 = vmatmul.mubr.bf16.gmra.mrb[0].mxu0 %v1468
        %v1518 = vpop.f32.mrb[0].mxu0
        %v1519 = vadd.f32 0.0, %v1518
        %v1520 = vpop.f32.mrb[0].mxu0
        %v1521 = vpop.f32.mrb[0].mxu0
        %v1522 = vpop.f32.mrb[0].mxu0
        %1523 = vdwg.mxu0
        %v1524 = vpack.c.b16 %v1455, %v1454
        %v1525 = vpack.c.b16 %v1456, %v1456
        %1526 = vrot.lane.b32.xlu0 %v1524, 96
        %v1527 = vpop.permute.xlu0 %1526
        %1528 = vrot.lane.b32.xlu0 %v1525, 96
        %v1529 = vpop.permute.xlu0 %1528
        %v1531 = vsel %vm1463, %v1524, 0
        %v1534 = vsel %vm1463, %v1525, 0
        %v1537 = vsel %vm1463, %v1527, 0
        %v1540 = vsel %vm1463, %v1529, 0
        %1542 = vmatprep.subr.bf16.mxu0 0
        %1543 = vmatpush1.bf16.xpose.msra.mxu0 %v1537
        %1544 = vmatprep.subr.bf16.mxu0 0
        %1545 = vmatpush1.bf16.xpose.msra.mxu0 %v1540
        %1546 = vmatprep.subr.bf16.mxu0 0
        %1547 = vmatpush1.bf16.xpose.msra.mxu0 0
        %1548 = vmatprep.subr.bf16.mxu0 0
        %1549 = vmatpush1.bf16.xpose.msra.mxu0 0
        %1550 = vmatprep.subr.bf16.mxu0 0
        %1551 = vmatpush1.bf16.xpose.msra.mxu0 0
        %1552 = vmatprep.subr.bf16.mxu0 0
        %1553 = vmatpush1.bf16.xpose.msra.mxu0 0
        %1554 = vmatprep.subr.bf16.mxu0 0
        %1555 = vmatpush1.bf16.xpose.msra.mxu0 0
        %1556 = vmatprep.subr.bf16.mxu0 0
        %1557 = vmatpush1.bf16.xpose.msra.mxu0 0
        %1558 = vmatprep.subr.bf16.mxu0 0
        %1559 = vmatpush1.bf16.xpose.msra.mxu0 0
        %1560 = vmatprep.subr.bf16.mxu0 0
        %1561 = vmatpush1.bf16.xpose.msra.mxu0 0
        %1562 = vmatprep.subr.bf16.mxu0 0
        %1563 = vmatpush1.bf16.xpose.msra.mxu0 0
        %1564 = vmatprep.subr.bf16.mxu0 0
        %1565 = vmatpush1.bf16.xpose.msra.mxu0 0
        %1566 = vmatprep.subr.bf16.mxu0 0
        %1567 = vmatpush1.bf16.xpose.msra.mxu0 0
        %1568 = vmatprep.subr.bf16.mxu0 0
        %1569 = vmatpush1.bf16.xpose.msra.mxu0 0
        %1570 = vmatprep.subr.bf16.mxu0 0
        %1571 = vmatpush1.bf16.xpose.msra.mxu0 0
        %1572 = vmatprep.subr.bf16.mxu0 0
        %1573 = vmatpush1.bf16.xpose.msra.mxu0 0
        %1574 = vmatprep.mubr.bf16.mxu0 0
        %1575 = vmatmul.mubr.bf16.gmra.mrb[0].mxu0 %v1531
        %v1576 = vpop.f32.mrb[0].mxu0
        %v1577 = vadd.f32 0.0, %v1576
        %v1578 = vpop.f32.mrb[0].mxu0
        %v1579 = vpop.f32.mrb[0].mxu0
        %v1580 = vadd.f32 0.0, %v1579
        %v1581 = vpop.f32.mrb[0].mxu0
        %1582 = vmatprep.mubr.bf16.mxu0 0
        %1583 = vmatmul.mubr.bf16.gmra.mrb[0].mxu0 %v1534
        %v1584 = vpop.f32.mrb[0].mxu0
        %v1585 = vadd.f32 0.0, %v1584
        %v1586 = vpop.f32.mrb[0].mxu0
        %v1587 = vpop.f32.mrb[0].mxu0
        %v1588 = vpop.f32.mrb[0].mxu0
        %1589 = vdwg.mxu0
        %v1590 = vmul.f32 %v1511, 0.35355338
        %v1591 = vmul.f32 %v1514, 0.35355338
        %v1592 = vmul.f32 %v1519, 0.35355338
        %v1593 = vmul.f32 %v1577, 0.35355338
        %v1594 = vmul.f32 %v1580, 0.35355338
        %v1595 = vmul.f32 %v1585, 0.35355338
        %v1596 = vadd.f32 %v1590, %v1249
        %v1597 = vadd.f32 %v1591, %v1249
        %v1598 = vadd.f32 %v1592, %v1249
        %v1599 = vadd.f32 %v1593, %v1249
        %v1600 = vadd.f32 %v1594, %v1249
        %v1601 = vadd.f32 %v1595, %v1249
        %vm1602 = vcmask 195584
        %v1603 = vsel %vm1602, %v1596, -inf
        %1604 = vmax.xlane.f32.xlu0 %v1603
        %v1605 = vpop.xlane.xlu0 %1604
        %v1606 = vsel %vm1602, %v1597, -inf
        %1607 = vmax.xlane.f32.xlu0 %v1606
        %v1608 = vpop.xlane.xlu0 %1607
        %v1609 = vsel %vm1602, %v1598, -inf
        %1610 = vmax.xlane.f32.xlu0 %v1609
        %v1611 = vpop.xlane.xlu0 %1610
        %v1612 = vsel %vm1602, %v1599, -inf
        %1613 = vmax.xlane.f32.xlu0 %v1612
        %v1614 = vpop.xlane.xlu0 %1613
        %v1615 = vsel %vm1602, %v1600, -inf
        %1616 = vmax.xlane.f32.xlu0 %v1615
        %v1617 = vpop.xlane.xlu0 %1616
        %v1618 = vsel %vm1602, %v1601, -inf
        %1619 = vmax.xlane.f32.xlu0 %v1618
        %v1620 = vpop.xlane.xlu0 %1619
        %v1621 = vsub.f32 %v1596, %v1605
        %v1622 = vsub.f32 %v1597, %v1608
        %v1623 = vsub.f32 %v1598, %v1611
        %v1624 = vsub.f32 %v1599, %v1614
        %v1625 = vsub.f32 %v1600, %v1617
        %v1626 = vsub.f32 %v1601, %v1620
        %v1627 = vmul.f32 %v1621, 1.442695
        %v1628 = vpow.pop %v1627
        %v1629 = vmul.f32 %v1622, 1.442695
        %v1630 = vpow.pop %v1629
        %v1631 = vmul.f32 %v1623, 1.442695
        %v1632 = vpow.pop %v1631
        %v1633 = vmul.f32 %v1624, 1.442695
        %v1634 = vpow.pop %v1633
        %v1635 = vmul.f32 %v1625, 1.442695
        %v1636 = vpow.pop %v1635
        %v1637 = vmul.f32 %v1626, 1.442695
        %v1638 = vpow.pop %v1637
        %v1639 = vsel %vm1602, %v1628, 0.0
        %1640 = vadd.xlane.f32.xlu0 %v1639
        %v1641 = vpop.xlane.xlu0 %1640
        %v1642 = vsel %vm1602, %v1630, 0.0
        %1643 = vadd.xlane.f32.xlu0 %v1642
        %v1644 = vpop.xlane.xlu0 %1643
        %v1645 = vsel %vm1602, %v1632, 0.0
        %1646 = vadd.xlane.f32.xlu0 %v1645
        %v1647 = vpop.xlane.xlu0 %1646
        %v1648 = vsel %vm1602, %v1634, 0.0
        %1649 = vadd.xlane.f32.xlu0 %v1648
        %v1650 = vpop.xlane.xlu0 %1649
        %v1651 = vsel %vm1602, %v1636, 0.0
        %1652 = vadd.xlane.f32.xlu0 %v1651
        %v1653 = vpop.xlane.xlu0 %1652
        %v1654 = vsel %vm1602, %v1638, 0.0
        %1655 = vadd.xlane.f32.xlu0 %v1654
        %v1656 = vpop.xlane.xlu0 %1655
        %v1657 = vrcp.pop %v1641
        %v1658 = vrcp.pop %v1644
        %v1659 = vrcp.pop %v1647
        %v1660 = vrcp.pop %v1650
        %v1661 = vrcp.pop %v1653
        %v1662 = vrcp.pop %v1656
        %v1663 = vmul.f32 %v1628, %v1657
        %v1664 = vmul.f32 %v1630, %v1658
        %v1665 = vmul.f32 %v1632, %v1659
        %v1666 = vmul.f32 %v1634, %v1660
        %v1667 = vmul.f32 %v1636, %v1661
        %v1668 = vmul.f32 %v1638, %v1662
        %v1669 = vpack.c.bf16 %v1664, %v1663
        %v1670 = vpack.c.bf16 %v1665, %v1665
        %v1671 = vpack.c.bf16 %v1667, %v1666
        %v1672 = vpack.c.bf16 %v1668, %v1668
        %1673 = vrot.lane.b32.xlu0 %v1457, 64
        %v1674 = vpop.permute.xlu0 %1673
        %1675 = vrot.lane.b32.xlu0 %v1458, 64
        %v1676 = vpop.permute.xlu0 %1675
        %v1679 = vsel %vm1602, %v1669, 0
        %v1682 = vsel %vm1602, %v1670, 0
        %vm1684 = vcmask 1043456
        %v1686 = vsel %vm1684, %v1676, 0
        %1688 = vmatprep.subr.bf16.mxu0 0
        %1689 = vmatpush1.bf16.msra.mxu0 %v1674
        %1690 = vmatprep.subr.bf16.mxu0 0
        %1691 = vmatpush1.bf16.msra.mxu0 %v1686
        %1692 = vmatprep.subr.bf16.mxu0 0
        %1693 = vmatpush1.bf16.msra.mxu0 0
        %1694 = vmatprep.subr.bf16.mxu0 0
        %1695 = vmatpush1.bf16.msra.mxu0 0
        %1696 = vmatprep.subr.bf16.mxu0 0
        %1697 = vmatpush1.bf16.msra.mxu0 0
        %1698 = vmatprep.subr.bf16.mxu0 0
        %1699 = vmatpush1.bf16.msra.mxu0 0
        %1700 = vmatprep.subr.bf16.mxu0 0
        %1701 = vmatpush1.bf16.msra.mxu0 0
        %1702 = vmatprep.subr.bf16.mxu0 0
        %1703 = vmatpush1.bf16.msra.mxu0 0
        %1704 = vmatprep.subr.bf16.mxu0 0
        %1705 = vmatpush1.bf16.msra.mxu0 0
        %1706 = vmatprep.subr.bf16.mxu0 0
        %1707 = vmatpush1.bf16.msra.mxu0 0
        %1708 = vmatprep.subr.bf16.mxu0 0
        %1709 = vmatpush1.bf16.msra.mxu0 0
        %1710 = vmatprep.subr.bf16.mxu0 0
        %1711 = vmatpush1.bf16.msra.mxu0 0
        %1712 = vmatprep.subr.bf16.mxu0 0
        %1713 = vmatpush1.bf16.msra.mxu0 0
        %1714 = vmatprep.subr.bf16.mxu0 0
        %1715 = vmatpush1.bf16.msra.mxu0 0
        %1716 = vmatprep.subr.bf16.mxu0 0
        %1717 = vmatpush1.bf16.msra.mxu0 0
        %1718 = vmatprep.subr.bf16.mxu0 0
        %1719 = vmatpush1.bf16.msra.mxu0 0
        %1720 = vmatprep.mubr.bf16.mxu0 0
        %1721 = vmatmul.mubr.bf16.gmra.mrb[0].mxu0 %v1679
        %v1722 = vpop.f32.mrb[0].mxu0
        %v1723 = vadd.f32 0.0, %v1722
        %v1724 = vpop.f32.mrb[0].mxu0
        %v1725 = vpop.f32.mrb[0].mxu0
        %v1726 = vadd.f32 0.0, %v1725
        %v1727 = vpop.f32.mrb[0].mxu0
        %1728 = vmatprep.mubr.bf16.mxu0 0
        %1729 = vmatmul.mubr.bf16.gmra.mrb[0].mxu0 %v1682
        %v1730 = vpop.f32.mrb[0].mxu0
        %v1731 = vadd.f32 0.0, %v1730
        %v1732 = vpop.f32.mrb[0].mxu0
        %v1733 = vpop.f32.mrb[0].mxu0
        %v1734 = vpop.f32.mrb[0].mxu0
        %1735 = vdwg.mxu0
        %1736 = vrot.lane.b32.xlu0 %v1524, 64
        %v1737 = vpop.permute.xlu0 %1736
        %1738 = vrot.lane.b32.xlu0 %v1525, 64
        %v1739 = vpop.permute.xlu0 %1738
        %v1742 = vsel %vm1602, %v1671, 0
        %v1745 = vsel %vm1602, %v1672, 0
        %v1748 = vsel %vm1684, %v1739, 0
        %1750 = vmatprep.subr.bf16.mxu0 0
        %1751 = vmatpush1.bf16.msra.mxu0 %v1737
        %1752 = vmatprep.subr.bf16.mxu0 0
        %1753 = vmatpush1.bf16.msra.mxu0 %v1748
        %1754 = vmatprep.subr.bf16.mxu0 0
        %1755 = vmatpush1.bf16.msra.mxu0 0
        %1756 = vmatprep.subr.bf16.mxu0 0
        %1757 = vmatpush1.bf16.msra.mxu0 0
        %1758 = vmatprep.subr.bf16.mxu0 0
        %1759 = vmatpush1.bf16.msra.mxu0 0
        %1760 = vmatprep.subr.bf16.mxu0 0
        %1761 = vmatpush1.bf16.msra.mxu0 0
        %1762 = vmatprep.subr.bf16.mxu0 0
        %1763 = vmatpush1.bf16.msra.mxu0 0
        %1764 = vmatprep.subr.bf16.mxu0 0
        %1765 = vmatpush1.bf16.msra.mxu0 0
        %1766 = vmatprep.subr.bf16.mxu0 0
        %1767 = vmatpush1.bf16.msra.mxu0 0
        %1768 = vmatprep.subr.bf16.mxu0 0
        %1769 = vmatpush1.bf16.msra.mxu0 0
        %1770 = vmatprep.subr.bf16.mxu0 0
        %1771 = vmatpush1.bf16.msra.mxu0 0
        %1772 = vmatprep.subr.bf16.mxu0 0
        %1773 = vmatpush1.bf16.msra.mxu0 0
        %1774 = vmatprep.subr.bf16.mxu0 0
        %1775 = vmatpush1.bf16.msra.mxu0 0
        %1776 = vmatprep.subr.bf16.mxu0 0
        %1777 = vmatpush1.bf16.msra.mxu0 0
        %1778 = vmatprep.subr.bf16.mxu0 0
        %1779 = vmatpush1.bf16.msra.mxu0 0
        %1780 = vmatprep.subr.bf16.mxu0 0
        %1781 = vmatpush1.bf16.msra.mxu0 0
        %1782 = vmatprep.mubr.bf16.mxu0 0
        %1783 = vmatmul.mubr.bf16.gmra.mrb[0].mxu0 %v1742
        %v1784 = vpop.f32.mrb[0].mxu0
        %v1785 = vadd.f32 0.0, %v1784
        %v1786 = vpop.f32.mrb[0].mxu0
        %v1787 = vpop.f32.mrb[0].mxu0
        %v1788 = vadd.f32 0.0, %v1787
        %v1789 = vpop.f32.mrb[0].mxu0
        %1790 = vmatprep.mubr.bf16.mxu0 0
        %1791 = vmatmul.mubr.bf16.gmra.mrb[0].mxu0 %v1745
        %v1792 = vpop.f32.mrb[0].mxu0
        %v1793 = vadd.f32 0.0, %v1792
        %v1794 = vpop.f32.mrb[0].mxu0
        %v1795 = vpop.f32.mrb[0].mxu0
        %v1796 = vpop.f32.mrb[0].mxu0
        %1797 = vdwg.mxu0
        %v1798 = vpack.c.bf16 %v1726, %v1723
        %v1799 = vpack.c.bf16 %v1785, %v1731
        %v1800 = vpack.c.bf16 %v1793, %v1788
        %1801 = vrot.lane.b32.xlu0 %v1457, 120
        %v1802 = vpop.permute.xlu0 %1801
        %1803 = vrot.lane.b32.xlu0 %v1458, 120
        %v1804 = vpop.permute.xlu0 %1803
        %1805 = vrot.lane.b32.xlu0 %v1457, 88
        %v1806 = vpop.permute.xlu0 %1805
        %1807 = vrot.lane.b32.xlu0 %v1458, 88
        %v1808 = vpop.permute.xlu0 %1807
        %v1810 = vsel %vm1463, %v1802, 0
        %v1813 = vsel %vm1463, %v1804, 0
        %v1816 = vsel %vm1463, %v1806, 0
        %v1819 = vsel %vm1463, %v1808, 0
        %1821 = vmatprep.subr.bf16.mxu0 0
        %1822 = vmatpush1.bf16.xpose.msra.mxu0 %v1816
        %1823 = vmatprep.subr.bf16.mxu0 0
        %1824 = vmatpush1.bf16.xpose.msra.mxu0 %v1819
        %1825 = vmatprep.subr.bf16.mxu0 0
        %1826 = vmatpush1.bf16.xpose.msra.mxu0 0
        %1827 = vmatprep.subr.bf16.mxu0 0
        %1828 = vmatpush1.bf16.xpose.msra.mxu0 0
        %1829 = vmatprep.subr.bf16.mxu0 0
        %1830 = vmatpush1.bf16.xpose.msra.mxu0 0
        %1831 = vmatprep.subr.bf16.mxu0 0
        %1832 = vmatpush1.bf16.xpose.msra.mxu0 0
        %1833 = vmatprep.subr.bf16.mxu0 0
        %1834 = vmatpush1.bf16.xpose.msra.mxu0 0
        %1835 = vmatprep.subr.bf16.mxu0 0
        %1836 = vmatpush1.bf16.xpose.msra.mxu0 0
        %1837 = vmatprep.subr.bf16.mxu0 0
        %1838 = vmatpush1.bf16.xpose.msra.mxu0 0
        %1839 = vmatprep.subr.bf16.mxu0 0
        %1840 = vmatpush1.bf16.xpose.msra.mxu0 0
        %1841 = vmatprep.subr.bf16.mxu0 0
        %1842 = vmatpush1.bf16.xpose.msra.mxu0 0
        %1843 = vmatprep.subr.bf16.mxu0 0
        %1844 = vmatpush1.bf16.xpose.msra.mxu0 0
        %1845 = vmatprep.subr.bf16.mxu0 0
        %1846 = vmatpush1.bf16.xpose.msra.mxu0 0
        %1847 = vmatprep.subr.bf16.mxu0 0
        %1848 = vmatpush1.bf16.xpose.msra.mxu0 0
        %1849 = vmatprep.subr.bf16.mxu0 0
        %1850 = vmatpush1.bf16.xpose.msra.mxu0 0
        %1851 = vmatprep.subr.bf16.mxu0 0
        %1852 = vmatpush1.bf16.xpose.msra.mxu0 0
        %1853 = vmatprep.mubr.bf16.mxu0 0
        %1854 = vmatmul.mubr.bf16.gmra.mrb[0].mxu0 %v1810
        %v1855 = vpop.f32.mrb[0].mxu0
        %v1856 = vadd.f32 0.0, %v1855
        %v1857 = vpop.f32.mrb[0].mxu0
        %v1858 = vpop.f32.mrb[0].mxu0
        %v1859 = vadd.f32 0.0, %v1858
        %v1860 = vpop.f32.mrb[0].mxu0
        %1861 = vmatprep.mubr.bf16.mxu0 0
        %1862 = vmatmul.mubr.bf16.gmra.mrb[0].mxu0 %v1813
        %v1863 = vpop.f32.mrb[0].mxu0
        %v1864 = vadd.f32 0.0, %v1863
        %v1865 = vpop.f32.mrb[0].mxu0
        %v1866 = vpop.f32.mrb[0].mxu0
        %v1867 = vpop.f32.mrb[0].mxu0
        %1868 = vdwg.mxu0
        %1869 = vrot.lane.b32.xlu0 %v1524, 120
        %v1870 = vpop.permute.xlu0 %1869
        %1871 = vrot.lane.b32.xlu0 %v1525, 120
        %v1872 = vpop.permute.xlu0 %1871
        %1873 = vrot.lane.b32.xlu0 %v1524, 88
        %v1874 = vpop.permute.xlu0 %1873
        %1875 = vrot.lane.b32.xlu0 %v1525, 88
        %v1876 = vpop.permute.xlu0 %1875
        %v1878 = vsel %vm1463, %v1870, 0
        %v1881 = vsel %vm1463, %v1872, 0
        %v1884 = vsel %vm1463, %v1874, 0
        %v1887 = vsel %vm1463, %v1876, 0
        %1889 = vmatprep.subr.bf16.mxu0 0
        %1890 = vmatpush1.bf16.xpose.msra.mxu0 %v1884
        %1891 = vmatprep.subr.bf16.mxu0 0
        %1892 = vmatpush1.bf16.xpose.msra.mxu0 %v1887
        %1893 = vmatprep.subr.bf16.mxu0 0
        %1894 = vmatpush1.bf16.xpose.msra.mxu0 0
        %1895 = vmatprep.subr.bf16.mxu0 0
        %1896 = vmatpush1.bf16.xpose.msra.mxu0 0
        %1897 = vmatprep.subr.bf16.mxu0 0
        %1898 = vmatpush1.bf16.xpose.msra.mxu0 0
        %1899 = vmatprep.subr.bf16.mxu0 0
        %1900 = vmatpush1.bf16.xpose.msra.mxu0 0
        %1901 = vmatprep.subr.bf16.mxu0 0
        %1902 = vmatpush1.bf16.xpose.msra.mxu0 0
        %1903 = vmatprep.subr.bf16.mxu0 0
        %1904 = vmatpush1.bf16.xpose.msra.mxu0 0
        %1905 = vmatprep.subr.bf16.mxu0 0
        %1906 = vmatpush1.bf16.xpose.msra.mxu0 0
        %1907 = vmatprep.subr.bf16.mxu0 0
        %1908 = vmatpush1.bf16.xpose.msra.mxu0 0
        %1909 = vmatprep.subr.bf16.mxu0 0
        %1910 = vmatpush1.bf16.xpose.msra.mxu0 0
        %1911 = vmatprep.subr.bf16.mxu0 0
        %1912 = vmatpush1.bf16.xpose.msra.mxu0 0
        %1913 = vmatprep.subr.bf16.mxu0 0
        %1914 = vmatpush1.bf16.xpose.msra.mxu0 0
        %1915 = vmatprep.subr.bf16.mxu0 0
        %1916 = vmatpush1.bf16.xpose.msra.mxu0 0
        %1917 = vmatprep.subr.bf16.mxu0 0
        %1918 = vmatpush1.bf16.xpose.msra.mxu0 0
        %1919 = vmatprep.subr.bf16.mxu0 0
        %1920 = vmatpush1.bf16.xpose.msra.mxu0 0
        %1921 = vmatprep.mubr.bf16.mxu0 0
        %1922 = vmatmul.mubr.bf16.gmra.mrb[0].mxu0 %v1878
        %v1923 = vpop.f32.mrb[0].mxu0
        %v1924 = vadd.f32 0.0, %v1923
        %v1925 = vpop.f32.mrb[0].mxu0
        %v1926 = vpop.f32.mrb[0].mxu0
        %v1927 = vadd.f32 0.0, %v1926
        %v1928 = vpop.f32.mrb[0].mxu0
        %1929 = vmatprep.mubr.bf16.mxu0 0
        %1930 = vmatmul.mubr.bf16.gmra.mrb[0].mxu0 %v1881
        %v1931 = vpop.f32.mrb[0].mxu0
        %v1932 = vadd.f32 0.0, %v1931
        %v1933 = vpop.f32.mrb[0].mxu0
        %v1934 = vpop.f32.mrb[0].mxu0
        %v1935 = vpop.f32.mrb[0].mxu0
        %1936 = vdwg.mxu0
        %v1937 = vmul.f32 %v1856, 0.35355338
        %v1938 = vmul.f32 %v1859, 0.35355338
        %v1939 = vmul.f32 %v1864, 0.35355338
        %v1940 = vmul.f32 %v1924, 0.35355338
        %v1941 = vmul.f32 %v1927, 0.35355338
        %v1942 = vmul.f32 %v1932, 0.35355338
        %v1943 = vadd.f32 %v1937, %v1249
        %v1944 = vadd.f32 %v1938, %v1249
        %v1945 = vadd.f32 %v1939, %v1249
        %v1946 = vadd.f32 %v1940, %v1249
        %v1947 = vadd.f32 %v1941, %v1249
        %v1948 = vadd.f32 %v1942, %v1249
        %v1949 = vsel %vm1602, %v1943, -inf
        %1950 = vmax.xlane.f32.xlu0 %v1949
        %v1951 = vpop.xlane.xlu0 %1950
        %v1952 = vsel %vm1602, %v1944, -inf
        %1953 = vmax.xlane.f32.xlu0 %v1952
        %v1954 = vpop.xlane.xlu0 %1953
        %v1955 = vsel %vm1602, %v1945, -inf
        %1956 = vmax.xlane.f32.xlu0 %v1955
        %v1957 = vpop.xlane.xlu0 %1956
        %v1958 = vsel %vm1602, %v1946, -inf
        %1959 = vmax.xlane.f32.xlu0 %v1958
        %v1960 = vpop.xlane.xlu0 %1959
        %v1961 = vsel %vm1602, %v1947, -inf
        %1962 = vmax.xlane.f32.xlu0 %v1961
        %v1963 = vpop.xlane.xlu0 %1962
        %v1964 = vsel %vm1602, %v1948, -inf
        %1965 = vmax.xlane.f32.xlu0 %v1964
        %v1966 = vpop.xlane.xlu0 %1965
        %v1967 = vsub.f32 %v1943, %v1951
        %v1968 = vsub.f32 %v1944, %v1954
        %v1969 = vsub.f32 %v1945, %v1957
        %v1970 = vsub.f32 %v1946, %v1960
        %v1971 = vsub.f32 %v1947, %v1963
        %v1972 = vsub.f32 %v1948, %v1966
        %v1973 = vmul.f32 %v1967, 1.442695
        %v1974 = vpow.pop %v1973
        %v1975 = vmul.f32 %v1968, 1.442695
        %v1976 = vpow.pop %v1975
        %v1977 = vmul.f32 %v1969, 1.442695
        %v1978 = vpow.pop %v1977
        %v1979 = vmul.f32 %v1970, 1.442695
        %v1980 = vpow.pop %v1979
        %v1981 = vmul.f32 %v1971, 1.442695
        %v1982 = vpow.pop %v1981
        %v1983 = vmul.f32 %v1972, 1.442695
        %v1984 = vpow.pop %v1983
        %v1985 = vsel %vm1602, %v1974, 0.0
        %1986 = vadd.xlane.f32.xlu0 %v1985
        %v1987 = vpop.xlane.xlu0 %1986
        %v1988 = vsel %vm1602, %v1976, 0.0
        %1989 = vadd.xlane.f32.xlu0 %v1988
        %v1990 = vpop.xlane.xlu0 %1989
        %v1991 = vsel %vm1602, %v1978, 0.0
        %1992 = vadd.xlane.f32.xlu0 %v1991
        %v1993 = vpop.xlane.xlu0 %1992
        %v1994 = vsel %vm1602, %v1980, 0.0
        %1995 = vadd.xlane.f32.xlu0 %v1994
        %v1996 = vpop.xlane.xlu0 %1995
        %v1997 = vsel %vm1602, %v1982, 0.0
        %1998 = vadd.xlane.f32.xlu0 %v1997
        %v1999 = vpop.xlane.xlu0 %1998
        %v2000 = vsel %vm1602, %v1984, 0.0
        %2001 = vadd.xlane.f32.xlu0 %v2000
        %v2002 = vpop.xlane.xlu0 %2001
        %v2003 = vrcp.pop %v1987
        %v2004 = vrcp.pop %v1990
        %v2005 = vrcp.pop %v1993
        %v2006 = vrcp.pop %v1996
        %v2007 = vrcp.pop %v1999
        %v2008 = vrcp.pop %v2002
        %v2009 = vmul.f32 %v1974, %v2003
        %v2010 = vmul.f32 %v1976, %v2004
        %v2011 = vmul.f32 %v1978, %v2005
        %v2012 = vmul.f32 %v1980, %v2006
        %v2013 = vmul.f32 %v1982, %v2007
        %v2014 = vmul.f32 %v1984, %v2008
        %v2015 = vpack.c.bf16 %v2010, %v2009
        %v2016 = vpack.c.bf16 %v2011, %v2011
        %v2017 = vpack.c.bf16 %v2013, %v2012
        %v2018 = vpack.c.bf16 %v2014, %v2014
        %2019 = vrot.lane.b32.xlu0 %v1457, 56
        %v2020 = vpop.permute.xlu0 %2019
        %2021 = vrot.lane.b32.xlu0 %v1458, 56
        %v2022 = vpop.permute.xlu0 %2021
        %v2025 = vsel %vm1602, %v2015, 0
        %v2028 = vsel %vm1602, %v2016, 0
        %v2031 = vsel %vm1684, %v2022, 0
        %2033 = vmatprep.subr.bf16.mxu0 0
        %2034 = vmatpush1.bf16.msra.mxu0 %v2020
        %2035 = vmatprep.subr.bf16.mxu0 0
        %2036 = vmatpush1.bf16.msra.mxu0 %v2031
        %2037 = vmatprep.subr.bf16.mxu0 0
        %2038 = vmatpush1.bf16.msra.mxu0 0
        %2039 = vmatprep.subr.bf16.mxu0 0
        %2040 = vmatpush1.bf16.msra.mxu0 0
        %2041 = vmatprep.subr.bf16.mxu0 0
        %2042 = vmatpush1.bf16.msra.mxu0 0
        %2043 = vmatprep.subr.bf16.mxu0 0
        %2044 = vmatpush1.bf16.msra.mxu0 0
        %2045 = vmatprep.subr.bf16.mxu0 0
        %2046 = vmatpush1.bf16.msra.mxu0 0
        %2047 = vmatprep.subr.bf16.mxu0 0
        %2048 = vmatpush1.bf16.msra.mxu0 0
        %2049 = vmatprep.subr.bf16.mxu0 0
        %2050 = vmatpush1.bf16.msra.mxu0 0
        %2051 = vmatprep.subr.bf16.mxu0 0
        %2052 = vmatpush1.bf16.msra.mxu0 0
        %2053 = vmatprep.subr.bf16.mxu0 0
        %2054 = vmatpush1.bf16.msra.mxu0 0
        %2055 = vmatprep.subr.bf16.mxu0 0
        %2056 = vmatpush1.bf16.msra.mxu0 0
        %2057 = vmatprep.subr.bf16.mxu0 0
        %2058 = vmatpush1.bf16.msra.mxu0 0
        %2059 = vmatprep.subr.bf16.mxu0 0
        %2060 = vmatpush1.bf16.msra.mxu0 0
        %2061 = vmatprep.subr.bf16.mxu0 0
        %2062 = vmatpush1.bf16.msra.mxu0 0
        %2063 = vmatprep.subr.bf16.mxu0 0
        %2064 = vmatpush1.bf16.msra.mxu0 0
        %2065 = vmatprep.mubr.bf16.mxu0 0
        %2066 = vmatmul.mubr.bf16.gmra.mrb[0].mxu0 %v2025
        %v2067 = vpop.f32.mrb[0].mxu0
        %v2068 = vadd.f32 0.0, %v2067
        %v2069 = vpop.f32.mrb[0].mxu0
        %v2070 = vpop.f32.mrb[0].mxu0
        %v2071 = vadd.f32 0.0, %v2070
        %v2072 = vpop.f32.mrb[0].mxu0
        %2073 = vmatprep.mubr.bf16.mxu0 0
        %2074 = vmatmul.mubr.bf16.gmra.mrb[0].mxu0 %v2028
        %v2075 = vpop.f32.mrb[0].mxu0
        %v2076 = vadd.f32 0.0, %v2075
        %v2077 = vpop.f32.mrb[0].mxu0
        %v2078 = vpop.f32.mrb[0].mxu0
        %v2079 = vpop.f32.mrb[0].mxu0
        %2080 = vdwg.mxu0
        %2081 = vrot.lane.b32.xlu0 %v1524, 56
        %v2082 = vpop.permute.xlu0 %2081
        %2083 = vrot.lane.b32.xlu0 %v1525, 56
        %v2084 = vpop.permute.xlu0 %2083
        %v2087 = vsel %vm1602, %v2017, 0
        %v2090 = vsel %vm1602, %v2018, 0
        %v2093 = vsel %vm1684, %v2084, 0
        %2095 = vmatprep.subr.bf16.mxu0 0
        %2096 = vmatpush1.bf16.msra.mxu0 %v2082
        %2097 = vmatprep.subr.bf16.mxu0 0
        %2098 = vmatpush1.bf16.msra.mxu0 %v2093
        %2099 = vmatprep.subr.bf16.mxu0 0
        %2100 = vmatpush1.bf16.msra.mxu0 0
        %2101 = vmatprep.subr.bf16.mxu0 0
        %2102 = vmatpush1.bf16.msra.mxu0 0
        %2103 = vmatprep.subr.bf16.mxu0 0
        %2104 = vmatpush1.bf16.msra.mxu0 0
        %2105 = vmatprep.subr.bf16.mxu0 0
        %2106 = vmatpush1.bf16.msra.mxu0 0
        %2107 = vmatprep.subr.bf16.mxu0 0
        %2108 = vmatpush1.bf16.msra.mxu0 0
        %2109 = vmatprep.subr.bf16.mxu0 0
        %2110 = vmatpush1.bf16.msra.mxu0 0
        %2111 = vmatprep.subr.bf16.mxu0 0
        %2112 = vmatpush1.bf16.msra.mxu0 0
        %2113 = vmatprep.subr.bf16.mxu0 0
        %2114 = vmatpush1.bf16.msra.mxu0 0
        %2115 = vmatprep.subr.bf16.mxu0 0
        %2116 = vmatpush1.bf16.msra.mxu0 0
        %2117 = vmatprep.subr.bf16.mxu0 0
        %2118 = vmatpush1.bf16.msra.mxu0 0
        %2119 = vmatprep.subr.bf16.mxu0 0
        %2120 = vmatpush1.bf16.msra.mxu0 0
        %2121 = vmatprep.subr.bf16.mxu0 0
        %2122 = vmatpush1.bf16.msra.mxu0 0
        %2123 = vmatprep.subr.bf16.mxu0 0
        %2124 = vmatpush1.bf16.msra.mxu0 0
        %2125 = vmatprep.subr.bf16.mxu0 0
        %2126 = vmatpush1.bf16.msra.mxu0 0
        %2127 = vmatprep.mubr.bf16.mxu0 0
        %2128 = vmatmul.mubr.bf16.gmra.mrb[0].mxu0 %v2087
        %v2129 = vpop.f32.mrb[0].mxu0
        %v2130 = vadd.f32 0.0, %v2129
        %v2131 = vpop.f32.mrb[0].mxu0
        %v2132 = vpop.f32.mrb[0].mxu0
        %v2133 = vadd.f32 0.0, %v2132
        %v2134 = vpop.f32.mrb[0].mxu0
        %2135 = vmatprep.mubr.bf16.mxu0 0
        %2136 = vmatmul.mubr.bf16.gmra.mrb[0].mxu0 %v2090
        %v2137 = vpop.f32.mrb[0].mxu0
        %v2138 = vadd.f32 0.0, %v2137
        %v2139 = vpop.f32.mrb[0].mxu0
        %v2140 = vpop.f32.mrb[0].mxu0
        %v2141 = vpop.f32.mrb[0].mxu0
        %2142 = vdwg.mxu0
        %v2143 = vpack.c.bf16 %v2071, %v2068
        %v2144 = vpack.c.bf16 %v2130, %v2076
        %v2145 = vpack.c.bf16 %v2138, %v2133
        %v2147 = vsel %vm1463, %v2143, 0
        %v2150 = vsel %vm1463, %v2144, 0
        %v2153 = vsel %vm1463, %v2145, 0
        %v2156 = vsel %vm1684, %v1442, 0
        %2158 = vmatprep.subr.bf16.mxu0 0
        %2159 = vmatpush1.bf16.msra.mxu0 %v2156
        %2160 = vmatprep.subr.bf16.mxu0 0
        %2161 = vmatpush1.bf16.msra.mxu0 0
        %2162 = vmatprep.subr.bf16.mxu0 0
        %2163 = vmatpush1.bf16.msra.mxu0 0
        %2164 = vmatprep.subr.bf16.mxu0 0
        %2165 = vmatpush1.bf16.msra.mxu0 0
        %2166 = vmatprep.subr.bf16.mxu0 0
        %2167 = vmatpush1.bf16.msra.mxu0 0
        %2168 = vmatprep.subr.bf16.mxu0 0
        %2169 = vmatpush1.bf16.msra.mxu0 0
        %2170 = vmatprep.subr.bf16.mxu0 0
        %2171 = vmatpush1.bf16.msra.mxu0 0
        %2172 = vmatprep.subr.bf16.mxu0 0
        %2173 = vmatpush1.bf16.msra.mxu0 0
        %2174 = vmatprep.subr.bf16.mxu0 0
        %2175 = vmatpush1.bf16.msra.mxu0 0
        %2176 = vmatprep.subr.bf16.mxu0 0
        %2177 = vmatpush1.bf16.msra.mxu0 0
        %2178 = vmatprep.subr.bf16.mxu0 0
        %2179 = vmatpush1.bf16.msra.mxu0 0
        %2180 = vmatprep.subr.bf16.mxu0 0
        %2181 = vmatpush1.bf16.msra.mxu0 0
        %2182 = vmatprep.subr.bf16.mxu0 0
        %2183 = vmatpush1.bf16.msra.mxu0 0
        %2184 = vmatprep.subr.bf16.mxu0 0
        %2185 = vmatpush1.bf16.msra.mxu0 0
        %2186 = vmatprep.subr.bf16.mxu0 0
        %2187 = vmatpush1.bf16.msra.mxu0 0
        %2188 = vmatprep.subr.bf16.mxu0 0
        %2189 = vmatpush1.bf16.msra.mxu0 0
        %2190 = vmatprep.mubr.bf16.mxu0 0
        %2191 = vmatmul.mubr.bf16.gmra.mrb[0].mxu0 %v2147
        %v2192 = vpop.f32.mrb[0].mxu0
        %v2193 = vadd.f32 0.0, %v2192
        %v2194 = vpop.f32.mrb[0].mxu0
        %v2195 = vpop.f32.mrb[0].mxu0
        %v2196 = vadd.f32 0.0, %v2195
        %v2197 = vpop.f32.mrb[0].mxu0
        %2198 = vmatprep.mubr.bf16.mxu0 0
        %2199 = vmatmul.mubr.bf16.gmra.mrb[0].mxu0 %v2150
        %v2200 = vpop.f32.mrb[0].mxu0
        %v2201 = vadd.f32 0.0, %v2200
        %v2202 = vpop.f32.mrb[0].mxu0
        %v2203 = vpop.f32.mrb[0].mxu0
        %v2204 = vadd.f32 0.0, %v2203
        %v2205 = vpop.f32.mrb[0].mxu0
        %2206 = vmatprep.mubr.bf16.mxu0 0
        %2207 = vmatmul.mubr.bf16.gmra.mrb[0].mxu0 %v2153
        %v2208 = vpop.f32.mrb[0].mxu0
        %v2209 = vadd.f32 0.0, %v2208
        %v2210 = vpop.f32.mrb[0].mxu0
        %v2211 = vpop.f32.mrb[0].mxu0
        %v2212 = vadd.f32 0.0, %v2211
        %v2213 = vpop.f32.mrb[0].mxu0
        %2214 = vdwg.mxu0
        %v2216 = vsel %vm1463, %v1798, 0
        %v2219 = vsel %vm1463, %v1799, 0
        %v2222 = vsel %vm1463, %v1800, 0
        %v2225 = vsel %vm1684, %v1441, 0
        %2227 = vmatprep.subr.bf16.mxu0 0
        %2228 = vmatpush1.bf16.msra.mxu0 %v2225
        %2229 = vmatprep.subr.bf16.mxu0 0
        %2230 = vmatpush1.bf16.msra.mxu0 0
        %2231 = vmatprep.subr.bf16.mxu0 0
        %2232 = vmatpush1.bf16.msra.mxu0 0
        %2233 = vmatprep.subr.bf16.mxu0 0
        %2234 = vmatpush1.bf16.msra.mxu0 0
        %2235 = vmatprep.subr.bf16.mxu0 0
        %2236 = vmatpush1.bf16.msra.mxu0 0
        %2237 = vmatprep.subr.bf16.mxu0 0
        %2238 = vmatpush1.bf16.msra.mxu0 0
        %2239 = vmatprep.subr.bf16.mxu0 0
        %2240 = vmatpush1.bf16.msra.mxu0 0
        %2241 = vmatprep.subr.bf16.mxu0 0
        %2242 = vmatpush1.bf16.msra.mxu0 0
        %2243 = vmatprep.subr.bf16.mxu0 0
        %2244 = vmatpush1.bf16.msra.mxu0 0
        %2245 = vmatprep.subr.bf16.mxu0 0
        %2246 = vmatpush1.bf16.msra.mxu0 0
        %2247 = vmatprep.subr.bf16.mxu0 0
        %2248 = vmatpush1.bf16.msra.mxu0 0
        %2249 = vmatprep.subr.bf16.mxu0 0
        %2250 = vmatpush1.bf16.msra.mxu0 0
        %2251 = vmatprep.subr.bf16.mxu0 0
        %2252 = vmatpush1.bf16.msra.mxu0 0
        %2253 = vmatprep.subr.bf16.mxu0 0
        %2254 = vmatpush1.bf16.msra.mxu0 0
        %2255 = vmatprep.subr.bf16.mxu0 0
        %2256 = vmatpush1.bf16.msra.mxu0 0
        %2257 = vmatprep.subr.bf16.mxu0 0
        %2258 = vmatpush1.bf16.msra.mxu0 0
        %2259 = vmatprep.mubr.bf16.mxu0 0
        %2260 = vmatmul.mubr.bf16.gmra.mrb[0].mxu0 %v2216
        %v2261 = vpop.f32.mrb[0].mxu0
        %v2262 = vadd.f32 %v2193, %v2261
        %v2263 = vpop.f32.mrb[0].mxu0
        %v2264 = vpop.f32.mrb[0].mxu0
        %v2265 = vadd.f32 %v2196, %v2264
        %v2266 = vpop.f32.mrb[0].mxu0
        %2267 = vmatprep.mubr.bf16.mxu0 0
        %2268 = vmatmul.mubr.bf16.gmra.mrb[0].mxu0 %v2219
        %v2269 = vpop.f32.mrb[0].mxu0
        %v2270 = vadd.f32 %v2201, %v2269
        %v2271 = vpop.f32.mrb[0].mxu0
        %v2272 = vpop.f32.mrb[0].mxu0
        %v2273 = vadd.f32 %v2204, %v2272
        %v2274 = vpop.f32.mrb[0].mxu0
        %2275 = vmatprep.mubr.bf16.mxu0 0
        %2276 = vmatmul.mubr.bf16.gmra.mrb[0].mxu0 %v2222
        %v2277 = vpop.f32.mrb[0].mxu0
        %v2278 = vadd.f32 %v2209, %v2277
        %v2279 = vpop.f32.mrb[0].mxu0
        %v2280 = vpop.f32.mrb[0].mxu0
        %v2281 = vadd.f32 %v2212, %v2280
        %v2282 = vpop.f32.mrb[0].mxu0
        %2283 = vdwg.mxu0
        %2284 = vrot.lane.b32.xlu0 %v1457, 112
        %v2285 = vpop.permute.xlu0 %2284
        %2286 = vrot.lane.b32.xlu0 %v1458, 112
        %v2287 = vpop.permute.xlu0 %2286
        %2288 = vrot.lane.b32.xlu0 %v1457, 80
        %v2289 = vpop.permute.xlu0 %2288
        %2290 = vrot.lane.b32.xlu0 %v1458, 80
        %v2291 = vpop.permute.xlu0 %2290
        %v2293 = vsel %vm1463, %v2285, 0
        %v2296 = vsel %vm1463, %v2287, 0
        %v2299 = vsel %vm1463, %v2289, 0
        %v2302 = vsel %vm1463, %v2291, 0
        %2304 = vmatprep.subr.bf16.mxu0 0
        %2305 = vmatpush1.bf16.xpose.msra.mxu0 %v2299
        %2306 = vmatprep.subr.bf16.mxu0 0
        %2307 = vmatpush1.bf16.xpose.msra.mxu0 %v2302
        %2308 = vmatprep.subr.bf16.mxu0 0
        %2309 = vmatpush1.bf16.xpose.msra.mxu0 0
        %2310 = vmatprep.subr.bf16.mxu0 0
        %2311 = vmatpush1.bf16.xpose.msra.mxu0 0
        %2312 = vmatprep.subr.bf16.mxu0 0
        %2313 = vmatpush1.bf16.xpose.msra.mxu0 0
        %2314 = vmatprep.subr.bf16.mxu0 0
        %2315 = vmatpush1.bf16.xpose.msra.mxu0 0
        %2316 = vmatprep.subr.bf16.mxu0 0
        %2317 = vmatpush1.bf16.xpose.msra.mxu0 0
        %2318 = vmatprep.subr.bf16.mxu0 0
        %2319 = vmatpush1.bf16.xpose.msra.mxu0 0
        %2320 = vmatprep.subr.bf16.mxu0 0
        %2321 = vmatpush1.bf16.xpose.msra.mxu0 0
        %2322 = vmatprep.subr.bf16.mxu0 0
        %2323 = vmatpush1.bf16.xpose.msra.mxu0 0
        %2324 = vmatprep.subr.bf16.mxu0 0
        %2325 = vmatpush1.bf16.xpose.msra.mxu0 0
        %2326 = vmatprep.subr.bf16.mxu0 0
        %2327 = vmatpush1.bf16.xpose.msra.mxu0 0
        %2328 = vmatprep.subr.bf16.mxu0 0
        %2329 = vmatpush1.bf16.xpose.msra.mxu0 0
        %2330 = vmatprep.subr.bf16.mxu0 0
        %2331 = vmatpush1.bf16.xpose.msra.mxu0 0
        %2332 = vmatprep.subr.bf16.mxu0 0
        %2333 = vmatpush1.bf16.xpose.msra.mxu0 0
        %2334 = vmatprep.subr.bf16.mxu0 0
        %2335 = vmatpush1.bf16.xpose.msra.mxu0 0
        %2336 = vmatprep.mubr.bf16.mxu0 0
        %2337 = vmatmul.mubr.bf16.gmra.mrb[0].mxu0 %v2293
        %v2338 = vpop.f32.mrb[0].mxu0
        %v2339 = vadd.f32 0.0, %v2338
        %v2340 = vpop.f32.mrb[0].mxu0
        %v2341 = vpop.f32.mrb[0].mxu0
        %v2342 = vadd.f32 0.0, %v2341
        %v2343 = vpop.f32.mrb[0].mxu0
        %2344 = vmatprep.mubr.bf16.mxu0 0
        %2345 = vmatmul.mubr.bf16.gmra.mrb[0].mxu0 %v2296
        %v2346 = vpop.f32.mrb[0].mxu0
        %v2347 = vadd.f32 0.0, %v2346
        %v2348 = vpop.f32.mrb[0].mxu0
        %v2349 = vpop.f32.mrb[0].mxu0
        %v2350 = vpop.f32.mrb[0].mxu0
        %2351 = vdwg.mxu0
        %2352 = vrot.lane.b32.xlu0 %v1524, 112
        %v2353 = vpop.permute.xlu0 %2352
        %2354 = vrot.lane.b32.xlu0 %v1525, 112
        %v2355 = vpop.permute.xlu0 %2354
        %2356 = vrot.lane.b32.xlu0 %v1524, 80
        %v2357 = vpop.permute.xlu0 %2356
        %2358 = vrot.lane.b32.xlu0 %v1525, 80
        %v2359 = vpop.permute.xlu0 %2358
        %v2361 = vsel %vm1463, %v2353, 0
        %v2364 = vsel %vm1463, %v2355, 0
        %v2367 = vsel %vm1463, %v2357, 0
        %v2370 = vsel %vm1463, %v2359, 0
        %2372 = vmatprep.subr.bf16.mxu0 0
        %2373 = vmatpush1.bf16.xpose.msra.mxu0 %v2367
        %2374 = vmatprep.subr.bf16.mxu0 0
        %2375 = vmatpush1.bf16.xpose.msra.mxu0 %v2370
        %2376 = vmatprep.subr.bf16.mxu0 0
        %2377 = vmatpush1.bf16.xpose.msra.mxu0 0
        %2378 = vmatprep.subr.bf16.mxu0 0
        %2379 = vmatpush1.bf16.xpose.msra.mxu0 0
        %2380 = vmatprep.subr.bf16.mxu0 0
        %2381 = vmatpush1.bf16.xpose.msra.mxu0 0
        %2382 = vmatprep.subr.bf16.mxu0 0
        %2383 = vmatpush1.bf16.xpose.msra.mxu0 0
        %2384 = vmatprep.subr.bf16.mxu0 0
        %2385 = vmatpush1.bf16.xpose.msra.mxu0 0
        %2386 = vmatprep.subr.bf16.mxu0 0
        %2387 = vmatpush1.bf16.xpose.msra.mxu0 0
        %2388 = vmatprep.subr.bf16.mxu0 0
        %2389 = vmatpush1.bf16.xpose.msra.mxu0 0
        %2390 = vmatprep.subr.bf16.mxu0 0
        %2391 = vmatpush1.bf16.xpose.msra.mxu0 0
        %2392 = vmatprep.subr.bf16.mxu0 0
        %2393 = vmatpush1.bf16.xpose.msra.mxu0 0
        %2394 = vmatprep.subr.bf16.mxu0 0
        %2395 = vmatpush1.bf16.xpose.msra.mxu0 0
        %2396 = vmatprep.subr.bf16.mxu0 0
        %2397 = vmatpush1.bf16.xpose.msra.mxu0 0
        %2398 = vmatprep.subr.bf16.mxu0 0
        %2399 = vmatpush1.bf16.xpose.msra.mxu0 0
        %2400 = vmatprep.subr.bf16.mxu0 0
        %2401 = vmatpush1.bf16.xpose.msra.mxu0 0
        %2402 = vmatprep.subr.bf16.mxu0 0
        %2403 = vmatpush1.bf16.xpose.msra.mxu0 0
        %2404 = vmatprep.mubr.bf16.mxu0 0
        %2405 = vmatmul.mubr.bf16.gmra.mrb[0].mxu0 %v2361
        %v2406 = vpop.f32.mrb[0].mxu0
        %v2407 = vadd.f32 0.0, %v2406
        %v2408 = vpop.f32.mrb[0].mxu0
        %v2409 = vpop.f32.mrb[0].mxu0
        %v2410 = vadd.f32 0.0, %v2409
        %v2411 = vpop.f32.mrb[0].mxu0
        %2412 = vmatprep.mubr.bf16.mxu0 0
        %2413 = vmatmul.mubr.bf16.gmra.mrb[0].mxu0 %v2364
        %v2414 = vpop.f32.mrb[0].mxu0
        %v2415 = vadd.f32 0.0, %v2414
        %v2416 = vpop.f32.mrb[0].mxu0
        %v2417 = vpop.f32.mrb[0].mxu0
        %v2418 = vpop.f32.mrb[0].mxu0
        %2419 = vdwg.mxu0
        %v2420 = vmul.f32 %v2339, 0.35355338
        %v2421 = vmul.f32 %v2342, 0.35355338
        %v2422 = vmul.f32 %v2347, 0.35355338
        %v2423 = vmul.f32 %v2407, 0.35355338
        %v2424 = vmul.f32 %v2410, 0.35355338
        %v2425 = vmul.f32 %v2415, 0.35355338
        %v2426 = vadd.f32 %v2420, %v1249
        %v2427 = vadd.f32 %v2421, %v1249
        %v2428 = vadd.f32 %v2422, %v1249
        %v2429 = vadd.f32 %v2423, %v1249
        %v2430 = vadd.f32 %v2424, %v1249
        %v2431 = vadd.f32 %v2425, %v1249
        %v2432 = vsel %vm1602, %v2426, -inf
        %2433 = vmax.xlane.f32.xlu0 %v2432
        %v2434 = vpop.xlane.xlu0 %2433
        %v2435 = vsel %vm1602, %v2427, -inf
        %2436 = vmax.xlane.f32.xlu0 %v2435
        %v2437 = vpop.xlane.xlu0 %2436
        %v2438 = vsel %vm1602, %v2428, -inf
        %2439 = vmax.xlane.f32.xlu0 %v2438
        %v2440 = vpop.xlane.xlu0 %2439
        %v2441 = vsel %vm1602, %v2429, -inf
        %2442 = vmax.xlane.f32.xlu0 %v2441
        %v2443 = vpop.xlane.xlu0 %2442
        %v2444 = vsel %vm1602, %v2430, -inf
        %2445 = vmax.xlane.f32.xlu0 %v2444
        %v2446 = vpop.xlane.xlu0 %2445
        %v2447 = vsel %vm1602, %v2431, -inf
        %2448 = vmax.xlane.f32.xlu0 %v2447
        %v2449 = vpop.xlane.xlu0 %2448
        %v2450 = vsub.f32 %v2426, %v2434
        %v2451 = vsub.f32 %v2427, %v2437
        %v2452 = vsub.f32 %v2428, %v2440
        %v2453 = vsub.f32 %v2429, %v2443
        %v2454 = vsub.f32 %v2430, %v2446
        %v2455 = vsub.f32 %v2431, %v2449
        %v2456 = vmul.f32 %v2450, 1.442695
        %v2457 = vpow.pop %v2456
        %v2458 = vmul.f32 %v2451, 1.442695
        %v2459 = vpow.pop %v2458
        %v2460 = vmul.f32 %v2452, 1.442695
        %v2461 = vpow.pop %v2460
        %v2462 = vmul.f32 %v2453, 1.442695
        %v2463 = vpow.pop %v2462
        %v2464 = vmul.f32 %v2454, 1.442695
        %v2465 = vpow.pop %v2464
        %v2466 = vmul.f32 %v2455, 1.442695
        %v2467 = vpow.pop %v2466
        %v2468 = vsel %vm1602, %v2457, 0.0
        %2469 = vadd.xlane.f32.xlu0 %v2468
        %v2470 = vpop.xlane.xlu0 %2469
        %v2471 = vsel %vm1602, %v2459, 0.0
        %2472 = vadd.xlane.f32.xlu0 %v2471
        %v2473 = vpop.xlane.xlu0 %2472
        %v2474 = vsel %vm1602, %v2461, 0.0
        %2475 = vadd.xlane.f32.xlu0 %v2474
        %v2476 = vpop.xlane.xlu0 %2475
        %v2477 = vsel %vm1602, %v2463, 0.0
        %2478 = vadd.xlane.f32.xlu0 %v2477
        %v2479 = vpop.xlane.xlu0 %2478
        %v2480 = vsel %vm1602, %v2465, 0.0
        %2481 = vadd.xlane.f32.xlu0 %v2480
        %v2482 = vpop.xlane.xlu0 %2481
        %v2483 = vsel %vm1602, %v2467, 0.0
        %2484 = vadd.xlane.f32.xlu0 %v2483
        %v2485 = vpop.xlane.xlu0 %2484
        %v2486 = vrcp.pop %v2470
        %v2487 = vrcp.pop %v2473
        %v2488 = vrcp.pop %v2476
        %v2489 = vrcp.pop %v2479
        %v2490 = vrcp.pop %v2482
        %v2491 = vrcp.pop %v2485
        %v2492 = vmul.f32 %v2457, %v2486
        %v2493 = vmul.f32 %v2459, %v2487
        %v2494 = vmul.f32 %v2461, %v2488
        %v2495 = vmul.f32 %v2463, %v2489
        %v2496 = vmul.f32 %v2465, %v2490
        %v2497 = vmul.f32 %v2467, %v2491
        %v2498 = vpack.c.bf16 %v2493, %v2492
        %v2499 = vpack.c.bf16 %v2494, %v2494
        %v2500 = vpack.c.bf16 %v2496, %v2495
        %v2501 = vpack.c.bf16 %v2497, %v2497
        %2502 = vrot.lane.b32.xlu0 %v1457, 48
        %v2503 = vpop.permute.xlu0 %2502
        %2504 = vrot.lane.b32.xlu0 %v1458, 48
        %v2505 = vpop.permute.xlu0 %2504
        %v2508 = vsel %vm1602, %v2498, 0
        %v2511 = vsel %vm1602, %v2499, 0
        %v2514 = vsel %vm1684, %v2505, 0
        %2516 = vmatprep.subr.bf16.mxu0 0
        %2517 = vmatpush1.bf16.msra.mxu0 %v2503
        %2518 = vmatprep.subr.bf16.mxu0 0
        %2519 = vmatpush1.bf16.msra.mxu0 %v2514
        %2520 = vmatprep.subr.bf16.mxu0 0
        %2521 = vmatpush1.bf16.msra.mxu0 0
        %2522 = vmatprep.subr.bf16.mxu0 0
        %2523 = vmatpush1.bf16.msra.mxu0 0
        %2524 = vmatprep.subr.bf16.mxu0 0
        %2525 = vmatpush1.bf16.msra.mxu0 0
        %2526 = vmatprep.subr.bf16.mxu0 0
        %2527 = vmatpush1.bf16.msra.mxu0 0
        %2528 = vmatprep.subr.bf16.mxu0 0
        %2529 = vmatpush1.bf16.msra.mxu0 0
        %2530 = vmatprep.subr.bf16.mxu0 0
        %2531 = vmatpush1.bf16.msra.mxu0 0
        %2532 = vmatprep.subr.bf16.mxu0 0
        %2533 = vmatpush1.bf16.msra.mxu0 0
        %2534 = vmatprep.subr.bf16.mxu0 0
        %2535 = vmatpush1.bf16.msra.mxu0 0
        %2536 = vmatprep.subr.bf16.mxu0 0
        %2537 = vmatpush1.bf16.msra.mxu0 0
        %2538 = vmatprep.subr.bf16.mxu0 0
        %2539 = vmatpush1.bf16.msra.mxu0 0
        %2540 = vmatprep.subr.bf16.mxu0 0
        %2541 = vmatpush1.bf16.msra.mxu0 0
        %2542 = vmatprep.subr.bf16.mxu0 0
        %2543 = vmatpush1.bf16.msra.mxu0 0
        %2544 = vmatprep.subr.bf16.mxu0 0
        %2545 = vmatpush1.bf16.msra.mxu0 0
        %2546 = vmatprep.subr.bf16.mxu0 0
        %2547 = vmatpush1.bf16.msra.mxu0 0
        %2548 = vmatprep.mubr.bf16.mxu0 0
        %2549 = vmatmul.mubr.bf16.gmra.mrb[0].mxu0 %v2508
        %v2550 = vpop.f32.mrb[0].mxu0
        %v2551 = vadd.f32 0.0, %v2550
        %v2552 = vpop.f32.mrb[0].mxu0
        %v2553 = vpop.f32.mrb[0].mxu0
        %v2554 = vadd.f32 0.0, %v2553
        %v2555 = vpop.f32.mrb[0].mxu0
        %2556 = vmatprep.mubr.bf16.mxu0 0
        %2557 = vmatmul.mubr.bf16.gmra.mrb[0].mxu0 %v2511
        %v2558 = vpop.f32.mrb[0].mxu0
        %v2559 = vadd.f32 0.0, %v2558
        %v2560 = vpop.f32.mrb[0].mxu0
        %v2561 = vpop.f32.mrb[0].mxu0
        %v2562 = vpop.f32.mrb[0].mxu0
        %2563 = vdwg.mxu0
        %2564 = vrot.lane.b32.xlu0 %v1524, 48
        %v2565 = vpop.permute.xlu0 %2564
        %2566 = vrot.lane.b32.xlu0 %v1525, 48
        %v2567 = vpop.permute.xlu0 %2566
        %v2570 = vsel %vm1602, %v2500, 0
        %v2573 = vsel %vm1602, %v2501, 0
        %v2576 = vsel %vm1684, %v2567, 0
        %2578 = vmatprep.subr.bf16.mxu0 0
        %2579 = vmatpush1.bf16.msra.mxu0 %v2565
        %2580 = vmatprep.subr.bf16.mxu0 0
        %2581 = vmatpush1.bf16.msra.mxu0 %v2576
        %2582 = vmatprep.subr.bf16.mxu0 0
        %2583 = vmatpush1.bf16.msra.mxu0 0
        %2584 = vmatprep.subr.bf16.mxu0 0
        %2585 = vmatpush1.bf16.msra.mxu0 0
        %2586 = vmatprep.subr.bf16.mxu0 0
        %2587 = vmatpush1.bf16.msra.mxu0 0
        %2588 = vmatprep.subr.bf16.mxu0 0
        %2589 = vmatpush1.bf16.msra.mxu0 0
        %2590 = vmatprep.subr.bf16.mxu0 0
        %2591 = vmatpush1.bf16.msra.mxu0 0
        %2592 = vmatprep.subr.bf16.mxu0 0
        %2593 = vmatpush1.bf16.msra.mxu0 0
        %2594 = vmatprep.subr.bf16.mxu0 0
        %2595 = vmatpush1.bf16.msra.mxu0 0
        %2596 = vmatprep.subr.bf16.mxu0 0
        %2597 = vmatpush1.bf16.msra.mxu0 0
        %2598 = vmatprep.subr.bf16.mxu0 0
        %2599 = vmatpush1.bf16.msra.mxu0 0
        %2600 = vmatprep.subr.bf16.mxu0 0
        %2601 = vmatpush1.bf16.msra.mxu0 0
        %2602 = vmatprep.subr.bf16.mxu0 0
        %2603 = vmatpush1.bf16.msra.mxu0 0
        %2604 = vmatprep.subr.bf16.mxu0 0
        %2605 = vmatpush1.bf16.msra.mxu0 0
        %2606 = vmatprep.subr.bf16.mxu0 0
        %2607 = vmatpush1.bf16.msra.mxu0 0
        %2608 = vmatprep.subr.bf16.mxu0 0
        %2609 = vmatpush1.bf16.msra.mxu0 0
        %2610 = vmatprep.mubr.bf16.mxu0 0
        %2611 = vmatmul.mubr.bf16.gmra.mrb[0].mxu0 %v2570
        %v2612 = vpop.f32.mrb[0].mxu0
        %v2613 = vadd.f32 0.0, %v2612
        %v2614 = vpop.f32.mrb[0].mxu0
        %v2615 = vpop.f32.mrb[0].mxu0
        %v2616 = vadd.f32 0.0, %v2615
        %v2617 = vpop.f32.mrb[0].mxu0
        %2618 = vmatprep.mubr.bf16.mxu0 0
        %2619 = vmatmul.mubr.bf16.gmra.mrb[0].mxu0 %v2573
        %v2620 = vpop.f32.mrb[0].mxu0
        %v2621 = vadd.f32 0.0, %v2620
        %v2622 = vpop.f32.mrb[0].mxu0
        %v2623 = vpop.f32.mrb[0].mxu0
        %v2624 = vpop.f32.mrb[0].mxu0
        %2625 = vdwg.mxu0
        %v2626 = vpack.c.bf16 %v2554, %v2551
        %v2627 = vpack.c.bf16 %v2613, %v2559
        %v2628 = vpack.c.bf16 %v2621, %v2616
        %v2630 = vsel %vm1463, %v2626, 0
        %v2633 = vsel %vm1463, %v2627, 0
        %v2636 = vsel %vm1463, %v2628, 0
        %v2639 = vsel %vm1684, %v1443, 0
        %2641 = vmatprep.subr.bf16.mxu0 0
        %2642 = vmatpush1.bf16.msra.mxu0 %v2639
        %2643 = vmatprep.subr.bf16.mxu0 0
        %2644 = vmatpush1.bf16.msra.mxu0 0
        %2645 = vmatprep.subr.bf16.mxu0 0
        %2646 = vmatpush1.bf16.msra.mxu0 0
        %2647 = vmatprep.subr.bf16.mxu0 0
        %2648 = vmatpush1.bf16.msra.mxu0 0
        %2649 = vmatprep.subr.bf16.mxu0 0
        %2650 = vmatpush1.bf16.msra.mxu0 0
        %2651 = vmatprep.subr.bf16.mxu0 0
        %2652 = vmatpush1.bf16.msra.mxu0 0
        %2653 = vmatprep.subr.bf16.mxu0 0
        %2654 = vmatpush1.bf16.msra.mxu0 0
        %2655 = vmatprep.subr.bf16.mxu0 0
        %2656 = vmatpush1.bf16.msra.mxu0 0
        %2657 = vmatprep.subr.bf16.mxu0 0
        %2658 = vmatpush1.bf16.msra.mxu0 0
        %2659 = vmatprep.subr.bf16.mxu0 0
        %2660 = vmatpush1.bf16.msra.mxu0 0
        %2661 = vmatprep.subr.bf16.mxu0 0
        %2662 = vmatpush1.bf16.msra.mxu0 0
        %2663 = vmatprep.subr.bf16.mxu0 0
        %2664 = vmatpush1.bf16.msra.mxu0 0
        %2665 = vmatprep.subr.bf16.mxu0 0
        %2666 = vmatpush1.bf16.msra.mxu0 0
        %2667 = vmatprep.subr.bf16.mxu0 0
        %2668 = vmatpush1.bf16.msra.mxu0 0
        %2669 = vmatprep.subr.bf16.mxu0 0
        %2670 = vmatpush1.bf16.msra.mxu0 0
        %2671 = vmatprep.subr.bf16.mxu0 0
        %2672 = vmatpush1.bf16.msra.mxu0 0
        %2673 = vmatprep.mubr.bf16.mxu0 0
        %2674 = vmatmul.mubr.bf16.gmra.mrb[0].mxu0 %v2630
        %v2675 = vpop.f32.mrb[0].mxu0
        %v2676 = vadd.f32 0.0, %v2675
        %v2677 = vpop.f32.mrb[0].mxu0
        %v2678 = vpop.f32.mrb[0].mxu0
        %v2679 = vadd.f32 0.0, %v2678
        %v2680 = vpop.f32.mrb[0].mxu0
        %2681 = vmatprep.mubr.bf16.mxu0 0
        %2682 = vmatmul.mubr.bf16.gmra.mrb[0].mxu0 %v2633
        %v2683 = vpop.f32.mrb[0].mxu0
        %v2684 = vadd.f32 0.0, %v2683
        %v2685 = vpop.f32.mrb[0].mxu0
        %v2686 = vpop.f32.mrb[0].mxu0
        %v2687 = vadd.f32 0.0, %v2686
        %v2688 = vpop.f32.mrb[0].mxu0
        %2689 = vmatprep.mubr.bf16.mxu0 0
        %2690 = vmatmul.mubr.bf16.gmra.mrb[0].mxu0 %v2636
        %v2691 = vpop.f32.mrb[0].mxu0
        %v2692 = vadd.f32 0.0, %v2691
        %v2693 = vpop.f32.mrb[0].mxu0
        %v2694 = vpop.f32.mrb[0].mxu0
        %v2695 = vadd.f32 0.0, %v2694
        %v2696 = vpop.f32.mrb[0].mxu0
        %2697 = vdwg.mxu0
        %v2698 = vadd.f32 %v2262, %v2676
        %v2699 = vadd.f32 %v2265, %v2679
        %v2700 = vadd.f32 %v2270, %v2684
        %v2701 = vadd.f32 %v2273, %v2687
        %v2702 = vadd.f32 %v2278, %v2692
        %v2703 = vadd.f32 %v2281, %v2695
        %2704 = vrot.lane.b32.xlu0 %v1457, 104
        %v2705 = vpop.permute.xlu0 %2704
        %2706 = vrot.lane.b32.xlu0 %v1458, 104
        %v2707 = vpop.permute.xlu0 %2706
        %2708 = vrot.lane.b32.xlu0 %v1457, 72
        %v2709 = vpop.permute.xlu0 %2708
        %2710 = vrot.lane.b32.xlu0 %v1458, 72
        %v2711 = vpop.permute.xlu0 %2710
        %v2713 = vsel %vm1463, %v2705, 0
        %v2716 = vsel %vm1463, %v2707, 0
        %v2719 = vsel %vm1463, %v2709, 0
        %v2722 = vsel %vm1463, %v2711, 0
        %2724 = vmatprep.subr.bf16.mxu0 0
        %2725 = vmatpush1.bf16.xpose.msra.mxu0 %v2719
        %2726 = vmatprep.subr.bf16.mxu0 0
        %2727 = vmatpush1.bf16.xpose.msra.mxu0 %v2722
        %2728 = vmatprep.subr.bf16.mxu0 0
        %2729 = vmatpush1.bf16.xpose.msra.mxu0 0
        %2730 = vmatprep.subr.bf16.mxu0 0
        %2731 = vmatpush1.bf16.xpose.msra.mxu0 0
        %2732 = vmatprep.subr.bf16.mxu0 0
        %2733 = vmatpush1.bf16.xpose.msra.mxu0 0
        %2734 = vmatprep.subr.bf16.mxu0 0
        %2735 = vmatpush1.bf16.xpose.msra.mxu0 0
        %2736 = vmatprep.subr.bf16.mxu0 0
        %2737 = vmatpush1.bf16.xpose.msra.mxu0 0
        %2738 = vmatprep.subr.bf16.mxu0 0
        %2739 = vmatpush1.bf16.xpose.msra.mxu0 0
        %2740 = vmatprep.subr.bf16.mxu0 0
        %2741 = vmatpush1.bf16.xpose.msra.mxu0 0
        %2742 = vmatprep.subr.bf16.mxu0 0
        %2743 = vmatpush1.bf16.xpose.msra.mxu0 0
        %2744 = vmatprep.subr.bf16.mxu0 0
        %2745 = vmatpush1.bf16.xpose.msra.mxu0 0
        %2746 = vmatprep.subr.bf16.mxu0 0
        %2747 = vmatpush1.bf16.xpose.msra.mxu0 0
        %2748 = vmatprep.subr.bf16.mxu0 0
        %2749 = vmatpush1.bf16.xpose.msra.mxu0 0
        %2750 = vmatprep.subr.bf16.mxu0 0
        %2751 = vmatpush1.bf16.xpose.msra.mxu0 0
        %2752 = vmatprep.subr.bf16.mxu0 0
        %2753 = vmatpush1.bf16.xpose.msra.mxu0 0
        %2754 = vmatprep.subr.bf16.mxu0 0
        %2755 = vmatpush1.bf16.xpose.msra.mxu0 0
        %2756 = vmatprep.mubr.bf16.mxu0 0
        %2757 = vmatmul.mubr.bf16.gmra.mrb[0].mxu0 %v2713
        %v2758 = vpop.f32.mrb[0].mxu0
        %v2759 = vadd.f32 0.0, %v2758
        %v2760 = vpop.f32.mrb[0].mxu0
        %v2761 = vpop.f32.mrb[0].mxu0
        %v2762 = vadd.f32 0.0, %v2761
        %v2763 = vpop.f32.mrb[0].mxu0
        %2764 = vmatprep.mubr.bf16.mxu0 0
        %2765 = vmatmul.mubr.bf16.gmra.mrb[0].mxu0 %v2716
        %v2766 = vpop.f32.mrb[0].mxu0
        %v2767 = vadd.f32 0.0, %v2766
        %v2768 = vpop.f32.mrb[0].mxu0
        %v2769 = vpop.f32.mrb[0].mxu0
        %v2770 = vpop.f32.mrb[0].mxu0
        %2771 = vdwg.mxu0
        %2772 = vrot.lane.b32.xlu0 %v1524, 104
        %v2773 = vpop.permute.xlu0 %2772
        %2774 = vrot.lane.b32.xlu0 %v1525, 104
        %v2775 = vpop.permute.xlu0 %2774
        %2776 = vrot.lane.b32.xlu0 %v1524, 72
        %v2777 = vpop.permute.xlu0 %2776
        %2778 = vrot.lane.b32.xlu0 %v1525, 72
        %v2779 = vpop.permute.xlu0 %2778
        %v2781 = vsel %vm1463, %v2773, 0
        %v2784 = vsel %vm1463, %v2775, 0
        %v2787 = vsel %vm1463, %v2777, 0
        %v2790 = vsel %vm1463, %v2779, 0
        %2792 = vmatprep.subr.bf16.mxu0 0
        %2793 = vmatpush1.bf16.xpose.msra.mxu0 %v2787
        %2794 = vmatprep.subr.bf16.mxu0 0
        %2795 = vmatpush1.bf16.xpose.msra.mxu0 %v2790
        %2796 = vmatprep.subr.bf16.mxu0 0
        %2797 = vmatpush1.bf16.xpose.msra.mxu0 0
        %2798 = vmatprep.subr.bf16.mxu0 0
        %2799 = vmatpush1.bf16.xpose.msra.mxu0 0
        %2800 = vmatprep.subr.bf16.mxu0 0
        %2801 = vmatpush1.bf16.xpose.msra.mxu0 0
        %2802 = vmatprep.subr.bf16.mxu0 0
        %2803 = vmatpush1.bf16.xpose.msra.mxu0 0
        %2804 = vmatprep.subr.bf16.mxu0 0
        %2805 = vmatpush1.bf16.xpose.msra.mxu0 0
        %2806 = vmatprep.subr.bf16.mxu0 0
        %2807 = vmatpush1.bf16.xpose.msra.mxu0 0
        %2808 = vmatprep.subr.bf16.mxu0 0
        %2809 = vmatpush1.bf16.xpose.msra.mxu0 0
        %2810 = vmatprep.subr.bf16.mxu0 0
        %2811 = vmatpush1.bf16.xpose.msra.mxu0 0
        %2812 = vmatprep.subr.bf16.mxu0 0
        %2813 = vmatpush1.bf16.xpose.msra.mxu0 0
        %2814 = vmatprep.subr.bf16.mxu0 0
        %2815 = vmatpush1.bf16.xpose.msra.mxu0 0
        %2816 = vmatprep.subr.bf16.mxu0 0
        %2817 = vmatpush1.bf16.xpose.msra.mxu0 0
        %2818 = vmatprep.subr.bf16.mxu0 0
        %2819 = vmatpush1.bf16.xpose.msra.mxu0 0
        %2820 = vmatprep.subr.bf16.mxu0 0
        %2821 = vmatpush1.bf16.xpose.msra.mxu0 0
        %2822 = vmatprep.subr.bf16.mxu0 0
        %2823 = vmatpush1.bf16.xpose.msra.mxu0 0
        %2824 = vmatprep.mubr.bf16.mxu0 0
        %2825 = vmatmul.mubr.bf16.gmra.mrb[0].mxu0 %v2781
        %v2826 = vpop.f32.mrb[0].mxu0
        %v2827 = vadd.f32 0.0, %v2826
        %v2828 = vpop.f32.mrb[0].mxu0
        %v2829 = vpop.f32.mrb[0].mxu0
        %v2830 = vadd.f32 0.0, %v2829
        %v2831 = vpop.f32.mrb[0].mxu0
        %2832 = vmatprep.mubr.bf16.mxu0 0
        %2833 = vmatmul.mubr.bf16.gmra.mrb[0].mxu0 %v2784
        %v2834 = vpop.f32.mrb[0].mxu0
        %v2835 = vadd.f32 0.0, %v2834
        %v2836 = vpop.f32.mrb[0].mxu0
        %v2837 = vpop.f32.mrb[0].mxu0
        %v2838 = vpop.f32.mrb[0].mxu0
        %2839 = vdwg.mxu0
        %v2840 = vmul.f32 %v2759, 0.35355338
        %v2841 = vmul.f32 %v2762, 0.35355338
        %v2842 = vmul.f32 %v2767, 0.35355338
        %v2843 = vmul.f32 %v2827, 0.35355338
        %v2844 = vmul.f32 %v2830, 0.35355338
        %v2845 = vmul.f32 %v2835, 0.35355338
        %v2846 = vadd.f32 %v2840, %v1249
        %v2847 = vadd.f32 %v2841, %v1249
        %v2848 = vadd.f32 %v2842, %v1249
        %v2849 = vadd.f32 %v2843, %v1249
        %v2850 = vadd.f32 %v2844, %v1249
        %v2851 = vadd.f32 %v2845, %v1249
        %v2852 = vsel %vm1602, %v2846, -inf
        %2853 = vmax.xlane.f32.xlu0 %v2852
        %v2854 = vpop.xlane.xlu0 %2853
        %v2855 = vsel %vm1602, %v2847, -inf
        %2856 = vmax.xlane.f32.xlu0 %v2855
        %v2857 = vpop.xlane.xlu0 %2856
        %v2858 = vsel %vm1602, %v2848, -inf
        %2859 = vmax.xlane.f32.xlu0 %v2858
        %v2860 = vpop.xlane.xlu0 %2859
        %v2861 = vsel %vm1602, %v2849, -inf
        %2862 = vmax.xlane.f32.xlu0 %v2861
        %v2863 = vpop.xlane.xlu0 %2862
        %v2864 = vsel %vm1602, %v2850, -inf
        %2865 = vmax.xlane.f32.xlu0 %v2864
        %v2866 = vpop.xlane.xlu0 %2865
        %v2867 = vsel %vm1602, %v2851, -inf
        %2868 = vmax.xlane.f32.xlu0 %v2867
        %v2869 = vpop.xlane.xlu0 %2868
        %v2870 = vsub.f32 %v2846, %v2854
        %v2871 = vsub.f32 %v2847, %v2857
        %v2872 = vsub.f32 %v2848, %v2860
        %v2873 = vsub.f32 %v2849, %v2863
        %v2874 = vsub.f32 %v2850, %v2866
        %v2875 = vsub.f32 %v2851, %v2869
        %v2876 = vmul.f32 %v2870, 1.442695
        %v2877 = vpow.pop %v2876
        %v2878 = vmul.f32 %v2871, 1.442695
        %v2879 = vpow.pop %v2878
        %v2880 = vmul.f32 %v2872, 1.442695
        %v2881 = vpow.pop %v2880
        %v2882 = vmul.f32 %v2873, 1.442695
        %v2883 = vpow.pop %v2882
        %v2884 = vmul.f32 %v2874, 1.442695
        %v2885 = vpow.pop %v2884
        %v2886 = vmul.f32 %v2875, 1.442695
        %v2887 = vpow.pop %v2886
        %v2888 = vsel %vm1602, %v2877, 0.0
        %2889 = vadd.xlane.f32.xlu0 %v2888
        %v2890 = vpop.xlane.xlu0 %2889
        %v2891 = vsel %vm1602, %v2879, 0.0
        %2892 = vadd.xlane.f32.xlu0 %v2891
        %v2893 = vpop.xlane.xlu0 %2892
        %v2894 = vsel %vm1602, %v2881, 0.0
        %2895 = vadd.xlane.f32.xlu0 %v2894
        %v2896 = vpop.xlane.xlu0 %2895
        %v2897 = vsel %vm1602, %v2883, 0.0
        %2898 = vadd.xlane.f32.xlu0 %v2897
        %v2899 = vpop.xlane.xlu0 %2898
        %v2900 = vsel %vm1602, %v2885, 0.0
        %2901 = vadd.xlane.f32.xlu0 %v2900
        %v2902 = vpop.xlane.xlu0 %2901
        %v2903 = vsel %vm1602, %v2887, 0.0
        %2904 = vadd.xlane.f32.xlu0 %v2903
        %v2905 = vpop.xlane.xlu0 %2904
        %v2906 = vrcp.pop %v2890
        %v2907 = vrcp.pop %v2893
        %v2908 = vrcp.pop %v2896
        %v2909 = vrcp.pop %v2899
        %v2910 = vrcp.pop %v2902
        %v2911 = vrcp.pop %v2905
        %v2912 = vmul.f32 %v2877, %v2906
        %v2913 = vmul.f32 %v2879, %v2907
        %v2914 = vmul.f32 %v2881, %v2908
        %v2915 = vmul.f32 %v2883, %v2909
        %v2916 = vmul.f32 %v2885, %v2910
        %v2917 = vmul.f32 %v2887, %v2911
        %v2918 = vpack.c.bf16 %v2913, %v2912
        %v2919 = vpack.c.bf16 %v2914, %v2914
        %v2920 = vpack.c.bf16 %v2916, %v2915
        %v2921 = vpack.c.bf16 %v2917, %v2917
        %2922 = vrot.lane.b32.xlu0 %v1457, 40
        %v2923 = vpop.permute.xlu0 %2922
        %2924 = vrot.lane.b32.xlu0 %v1458, 40
        %v2925 = vpop.permute.xlu0 %2924
        %v2928 = vsel %vm1602, %v2918, 0
        %v2931 = vsel %vm1602, %v2919, 0
        %v2934 = vsel %vm1684, %v2925, 0
        %2936 = vmatprep.subr.bf16.mxu0 0
        %2937 = vmatpush1.bf16.msra.mxu0 %v2923
        %2938 = vmatprep.subr.bf16.mxu0 0
        %2939 = vmatpush1.bf16.msra.mxu0 %v2934
        %2940 = vmatprep.subr.bf16.mxu0 0
        %2941 = vmatpush1.bf16.msra.mxu0 0
        %2942 = vmatprep.subr.bf16.mxu0 0
        %2943 = vmatpush1.bf16.msra.mxu0 0
        %2944 = vmatprep.subr.bf16.mxu0 0
        %2945 = vmatpush1.bf16.msra.mxu0 0
        %2946 = vmatprep.subr.bf16.mxu0 0
        %2947 = vmatpush1.bf16.msra.mxu0 0
        %2948 = vmatprep.subr.bf16.mxu0 0
        %2949 = vmatpush1.bf16.msra.mxu0 0
        %2950 = vmatprep.subr.bf16.mxu0 0
        %2951 = vmatpush1.bf16.msra.mxu0 0
        %2952 = vmatprep.subr.bf16.mxu0 0
        %2953 = vmatpush1.bf16.msra.mxu0 0
        %2954 = vmatprep.subr.bf16.mxu0 0
        %2955 = vmatpush1.bf16.msra.mxu0 0
        %2956 = vmatprep.subr.bf16.mxu0 0
        %2957 = vmatpush1.bf16.msra.mxu0 0
        %2958 = vmatprep.subr.bf16.mxu0 0
        %2959 = vmatpush1.bf16.msra.mxu0 0
        %2960 = vmatprep.subr.bf16.mxu0 0
        %2961 = vmatpush1.bf16.msra.mxu0 0
        %2962 = vmatprep.subr.bf16.mxu0 0
        %2963 = vmatpush1.bf16.msra.mxu0 0
        %2964 = vmatprep.subr.bf16.mxu0 0
        %2965 = vmatpush1.bf16.msra.mxu0 0
        %2966 = vmatprep.subr.bf16.mxu0 0
        %2967 = vmatpush1.bf16.msra.mxu0 0
        %2968 = vmatprep.mubr.bf16.mxu0 0
        %2969 = vmatmul.mubr.bf16.gmra.mrb[0].mxu0 %v2928
        %v2970 = vpop.f32.mrb[0].mxu0
        %v2971 = vadd.f32 0.0, %v2970
        %v2972 = vpop.f32.mrb[0].mxu0
        %v2973 = vpop.f32.mrb[0].mxu0
        %v2974 = vadd.f32 0.0, %v2973
        %v2975 = vpop.f32.mrb[0].mxu0
        %2976 = vmatprep.mubr.bf16.mxu0 0
        %2977 = vmatmul.mubr.bf16.gmra.mrb[0].mxu0 %v2931
        %v2978 = vpop.f32.mrb[0].mxu0
        %v2979 = vadd.f32 0.0, %v2978
        %v2980 = vpop.f32.mrb[0].mxu0
        %v2981 = vpop.f32.mrb[0].mxu0
        %v2982 = vpop.f32.mrb[0].mxu0
        %2983 = vdwg.mxu0
        %2984 = vrot.lane.b32.xlu0 %v1524, 40
        %v2985 = vpop.permute.xlu0 %2984
        %2986 = vrot.lane.b32.xlu0 %v1525, 40
        %v2987 = vpop.permute.xlu0 %2986
        %v2990 = vsel %vm1602, %v2920, 0
        %v2993 = vsel %vm1602, %v2921, 0
        %v2996 = vsel %vm1684, %v2987, 0
        %2998 = vmatprep.subr.bf16.mxu0 0
        %2999 = vmatpush1.bf16.msra.mxu0 %v2985
        %3000 = vmatprep.subr.bf16.mxu0 0
        %3001 = vmatpush1.bf16.msra.mxu0 %v2996
        %3002 = vmatprep.subr.bf16.mxu0 0
        %3003 = vmatpush1.bf16.msra.mxu0 0
        %3004 = vmatprep.subr.bf16.mxu0 0
        %3005 = vmatpush1.bf16.msra.mxu0 0
        %3006 = vmatprep.subr.bf16.mxu0 0
        %3007 = vmatpush1.bf16.msra.mxu0 0
        %3008 = vmatprep.subr.bf16.mxu0 0
        %3009 = vmatpush1.bf16.msra.mxu0 0
        %3010 = vmatprep.subr.bf16.mxu0 0
        %3011 = vmatpush1.bf16.msra.mxu0 0
        %3012 = vmatprep.subr.bf16.mxu0 0
        %3013 = vmatpush1.bf16.msra.mxu0 0
        %3014 = vmatprep.subr.bf16.mxu0 0
        %3015 = vmatpush1.bf16.msra.mxu0 0
        %3016 = vmatprep.subr.bf16.mxu0 0
        %3017 = vmatpush1.bf16.msra.mxu0 0
        %3018 = vmatprep.subr.bf16.mxu0 0
        %3019 = vmatpush1.bf16.msra.mxu0 0
        %3020 = vmatprep.subr.bf16.mxu0 0
        %3021 = vmatpush1.bf16.msra.mxu0 0
        %3022 = vmatprep.subr.bf16.mxu0 0
        %3023 = vmatpush1.bf16.msra.mxu0 0
        %3024 = vmatprep.subr.bf16.mxu0 0
        %3025 = vmatpush1.bf16.msra.mxu0 0
        %3026 = vmatprep.subr.bf16.mxu0 0
        %3027 = vmatpush1.bf16.msra.mxu0 0
        %3028 = vmatprep.subr.bf16.mxu0 0
        %3029 = vmatpush1.bf16.msra.mxu0 0
        %3030 = vmatprep.mubr.bf16.mxu0 0
        %3031 = vmatmul.mubr.bf16.gmra.mrb[0].mxu0 %v2990
        %v3032 = vpop.f32.mrb[0].mxu0
        %v3033 = vadd.f32 0.0, %v3032
        %v3034 = vpop.f32.mrb[0].mxu0
        %v3035 = vpop.f32.mrb[0].mxu0
        %v3036 = vadd.f32 0.0, %v3035
        %v3037 = vpop.f32.mrb[0].mxu0
        %3038 = vmatprep.mubr.bf16.mxu0 0
        %3039 = vmatmul.mubr.bf16.gmra.mrb[0].mxu0 %v2993
        %v3040 = vpop.f32.mrb[0].mxu0
        %v3041 = vadd.f32 0.0, %v3040
        %v3042 = vpop.f32.mrb[0].mxu0
        %v3043 = vpop.f32.mrb[0].mxu0
        %v3044 = vpop.f32.mrb[0].mxu0
        %3045 = vdwg.mxu0
        %v3046 = vpack.c.bf16 %v2974, %v2971
        %v3047 = vpack.c.bf16 %v3033, %v2979
        %v3048 = vpack.c.bf16 %v3041, %v3036
        %v3050 = vsel %vm1463, %v3046, 0
        %v3053 = vsel %vm1463, %v3047, 0
        %v3056 = vsel %vm1463, %v3048, 0
        %v3059 = vsel %vm1684, %v1444, 0
        %3061 = vmatprep.subr.bf16.mxu0 0
        %3062 = vmatpush1.bf16.msra.mxu0 %v3059
        %3063 = vmatprep.subr.bf16.mxu0 0
        %3064 = vmatpush1.bf16.msra.mxu0 0
        %3065 = vmatprep.subr.bf16.mxu0 0
        %3066 = vmatpush1.bf16.msra.mxu0 0
        %3067 = vmatprep.subr.bf16.mxu0 0
        %3068 = vmatpush1.bf16.msra.mxu0 0
        %3069 = vmatprep.subr.bf16.mxu0 0
        %3070 = vmatpush1.bf16.msra.mxu0 0
        %3071 = vmatprep.subr.bf16.mxu0 0
        %3072 = vmatpush1.bf16.msra.mxu0 0
        %3073 = vmatprep.subr.bf16.mxu0 0
        %3074 = vmatpush1.bf16.msra.mxu0 0
        %3075 = vmatprep.subr.bf16.mxu0 0
        %3076 = vmatpush1.bf16.msra.mxu0 0
        %3077 = vmatprep.subr.bf16.mxu0 0
        %3078 = vmatpush1.bf16.msra.mxu0 0
        %3079 = vmatprep.subr.bf16.mxu0 0
        %3080 = vmatpush1.bf16.msra.mxu0 0
        %3081 = vmatprep.subr.bf16.mxu0 0
        %3082 = vmatpush1.bf16.msra.mxu0 0
        %3083 = vmatprep.subr.bf16.mxu0 0
        %3084 = vmatpush1.bf16.msra.mxu0 0
        %3085 = vmatprep.subr.bf16.mxu0 0
        %3086 = vmatpush1.bf16.msra.mxu0 0
        %3087 = vmatprep.subr.bf16.mxu0 0
        %3088 = vmatpush1.bf16.msra.mxu0 0
        %3089 = vmatprep.subr.bf16.mxu0 0
        %3090 = vmatpush1.bf16.msra.mxu0 0
        %3091 = vmatprep.subr.bf16.mxu0 0
        %3092 = vmatpush1.bf16.msra.mxu0 0
        %3093 = vmatprep.mubr.bf16.mxu0 0
        %3094 = vmatmul.mubr.bf16.gmra.mrb[0].mxu0 %v3050
        %v3095 = vpop.f32.mrb[0].mxu0
        %v3096 = vadd.f32 0.0, %v3095
        %v3097 = vpop.f32.mrb[0].mxu0
        %v3098 = vpop.f32.mrb[0].mxu0
        %v3099 = vadd.f32 0.0, %v3098
        %v3100 = vpop.f32.mrb[0].mxu0
        %3101 = vmatprep.mubr.bf16.mxu0 0
        %3102 = vmatmul.mubr.bf16.gmra.mrb[0].mxu0 %v3053
        %v3103 = vpop.f32.mrb[0].mxu0
        %v3104 = vadd.f32 0.0, %v3103
        %v3105 = vpop.f32.mrb[0].mxu0
        %v3106 = vpop.f32.mrb[0].mxu0
        %v3107 = vadd.f32 0.0, %v3106
        %v3108 = vpop.f32.mrb[0].mxu0
        %3109 = vmatprep.mubr.bf16.mxu0 0
        %3110 = vmatmul.mubr.bf16.gmra.mrb[0].mxu0 %v3056
        %v3111 = vpop.f32.mrb[0].mxu0
        %v3112 = vadd.f32 0.0, %v3111
        %v3113 = vpop.f32.mrb[0].mxu0
        %v3114 = vpop.f32.mrb[0].mxu0
        %v3115 = vadd.f32 0.0, %v3114
        %v3116 = vpop.f32.mrb[0].mxu0
        %3117 = vdwg.mxu0
        %v3118 = vadd.f32 %v2698, %v3096
        %v3119 = vadd.f32 %v2699, %v3099
        %v3120 = vadd.f32 %v2700, %v3104
        %v3121 = vadd.f32 %v2701, %v3107
        %v3122 = vadd.f32 %v2702, %v3112
        %v3123 = vadd.f32 %v2703, %v3115
        %v3124 = vld [vmem:[%s935] sm:$0x1]
        %v3126 = vlaneseq
        %v3127 = vshrl.u32 %v3126, 7
        %v3128 = vsub.s32 0, %v3127
        %v3129 = vrot.slane %v3124, %v3128
        %v3131 = vadd.f32 %v3118, %v3129
        %v3132 = vadd.f32 %v3119, %v3129
        %v3133 = vadd.f32 %v3120, %v3129
        %v3134 = vadd.f32 %v3121, %v3129
        %v3135 = vadd.f32 %v3122, %v3129
        %v3136 = vadd.f32 %v3123, %v3129
        %v3137 = vadd.f32 %v3131, %v1240
        %v3138 = vadd.f32 %v3132, %v1241
        %v3139 = vadd.f32 %v3133, %v1242
        %v3140 = vadd.f32 %v3134, %v1243
        %v3141 = vadd.f32 %v3135, %v1244
        %v3142 = vadd.f32 %v3136, %v1245
        %v3143 = vld [vmem:[%s938] sm:$0x1]
        %v3144 = vld [vmem:[%s941] sm:$0x1]
        %v3145 = vsel %vm1252, %v3137, 0.0
        %3146 = vadd.xlane.f32.xlu0 %v3145
        %v3147 = vpop.xlane.xlu0 %3146
        %v3148 = vsel %vm1252, %v3138, 0.0
        %3149 = vadd.xlane.f32.xlu0 %v3148
        %v3150 = vpop.xlane.xlu0 %3149
        %v3151 = vsel %vm1252, %v3139, 0.0
        %3152 = vadd.xlane.f32.xlu0 %v3151
        %v3153 = vpop.xlane.xlu0 %3152
        %v3154 = vsel %vm1252, %v3140, 0.0
        %3155 = vadd.xlane.f32.xlu0 %v3154
        %v3156 = vpop.xlane.xlu0 %3155
        %v3157 = vsel %vm1252, %v3141, 0.0
        %3158 = vadd.xlane.f32.xlu0 %v3157
        %v3159 = vpop.xlane.xlu0 %3158
        %v3160 = vsel %vm1252, %v3142, 0.0
        %3161 = vadd.xlane.f32.xlu0 %v3160
        %v3162 = vpop.xlane.xlu0 %3161
        %v3163 = vmul.f32 %v3147, %v1271
        %v3164 = vmul.f32 %v3150, %v1271
        %v3165 = vmul.f32 %v3153, %v1271
        %v3166 = vmul.f32 %v3156, %v1271
        %v3167 = vmul.f32 %v3159, %v1271
        %v3168 = vmul.f32 %v3162, %v1271
        %v3169 = vsub.f32 %v3137, %v3163
        %v3170 = vsub.f32 %v3138, %v3164
        %v3171 = vsub.f32 %v3139, %v3165
        %v3172 = vsub.f32 %v3140, %v3166
        %v3173 = vsub.f32 %v3141, %v3167
        %v3174 = vsub.f32 %v3142, %v3168
        %v3175 = vmul.f32 %v3169, %v3169
        %v3176 = vmul.f32 %v3170, %v3170
        %v3177 = vmul.f32 %v3171, %v3171
        %v3178 = vmul.f32 %v3172, %v3172
        %v3179 = vmul.f32 %v3173, %v3173
        %v3180 = vmul.f32 %v3174, %v3174
        %v3181 = vsel %vm1252, %v3175, 0.0
        %3182 = vadd.xlane.f32.xlu0 %v3181
        %v3183 = vpop.xlane.xlu0 %3182
        %v3184 = vsel %vm1252, %v3176, 0.0
        %3185 = vadd.xlane.f32.xlu0 %v3184
        %v3186 = vpop.xlane.xlu0 %3185
        %v3187 = vsel %vm1252, %v3177, 0.0
        %3188 = vadd.xlane.f32.xlu0 %v3187
        %v3189 = vpop.xlane.xlu0 %3188
        %v3190 = vsel %vm1252, %v3178, 0.0
        %3191 = vadd.xlane.f32.xlu0 %v3190
        %v3192 = vpop.xlane.xlu0 %3191
        %v3193 = vsel %vm1252, %v3179, 0.0
        %3194 = vadd.xlane.f32.xlu0 %v3193
        %v3195 = vpop.xlane.xlu0 %3194
        %v3196 = vsel %vm1252, %v3180, 0.0
        %3197 = vadd.xlane.f32.xlu0 %v3196
        %v3198 = vpop.xlane.xlu0 %3197
        %v3199 = vmul.f32 %v3183, %v1271
        %v3200 = vmul.f32 %v3186, %v1271
        %v3201 = vmul.f32 %v3189, %v1271
        %v3202 = vmul.f32 %v3192, %v1271
        %v3203 = vmul.f32 %v3195, %v1271
        %v3204 = vmul.f32 %v3198, %v1271
        %v3205 = vadd.f32 %v3199, 1e-05
        %v3206 = vadd.f32 %v3200, 1e-05
        %v3207 = vadd.f32 %v3201, 1e-05
        %v3208 = vadd.f32 %v3202, 1e-05
        %v3209 = vadd.f32 %v3203, 1e-05
        %v3210 = vadd.f32 %v3204, 1e-05
        %v3211 = vrsqrt.pop %v3205
        %v3212 = vrsqrt.pop %v3206
        %v3213 = vrsqrt.pop %v3207
        %v3214 = vrsqrt.pop %v3208
        %v3215 = vrsqrt.pop %v3209
        %v3216 = vrsqrt.pop %v3210
        %v3217 = vmul.f32 %v3169, %v3211
        %v3218 = vmul.f32 %v3170, %v3212
        %v3219 = vmul.f32 %v3171, %v3213
        %v3220 = vmul.f32 %v3172, %v3214
        %v3221 = vmul.f32 %v3173, %v3215
        %v3222 = vmul.f32 %v3174, %v3216
        %v3224 = vlaneseq
        %v3225 = vshrl.u32 %v3224, 7
        %v3226 = vsub.s32 0, %v3225
        %v3227 = vrot.slane %v3143, %v3226
        %v3229 = vmul.f32 %v3217, %v3227
        %v3230 = vmul.f32 %v3218, %v3227
        %v3231 = vmul.f32 %v3219, %v3227
        %v3232 = vmul.f32 %v3220, %v3227
        %v3233 = vmul.f32 %v3221, %v3227
        %v3234 = vmul.f32 %v3222, %v3227
        %v3236 = vlaneseq
        %v3237 = vshrl.u32 %v3236, 7
        %v3238 = vsub.s32 0, %v3237
        %v3239 = vrot.slane %v3144, %v3238
        %v3241 = vadd.f32 %v3229, %v3239
        %v3242 = vadd.f32 %v3230, %v3239
        %v3243 = vadd.f32 %v3231, %v3239
        %v3244 = vadd.f32 %v3232, %v3239
        %v3245 = vadd.f32 %v3233, %v3239
        %v3246 = vadd.f32 %v3234, %v3239
        %v3247 = vpack.c.bf16 %v3242, %v3241
        %v3248 = vpack.c.bf16 %v3244, %v3243
        %v3249 = vpack.c.bf16 %v3246, %v3245
        %v3250 = vld [vmem:[%s946] sm:$0xf]
        %v3251 = vld [vmem:[%s946 + $0x4] sm:$0xf]
        %v3252 = vld [vmem:[%s946 + $0x8] sm:$0xf]
        %v3253 = vld [vmem:[%s946 + $0xc] sm:$0xf]
        %v3254 = vld [vmem:[%s949] sm:$0x1]
        %v3256 = vlaneseq
        %v3257 = vshrl.u32 %v3256, 7
        %v3258 = vsub.s32 0, %v3257
        %v3259 = vrot.slane %v3254, %v3258
        %v3265 = vunpack.c.l.b16 %v3250
        %v3266 = vunpack.c.l.b16 %v3251
        %v3267 = vunpack.c.l.b16 %v3252
        %v3268 = vunpack.c.l.b16 %v3253
        %v3269 = vpack.c.b16 %v3266, %v3265
        %v3270 = vpack.c.b16 %v3268, %v3267
        %v3274 = vsel %vm1252, %v3247, 0
        %v3277 = vsel %vm1252, %v3248, 0
        %v3280 = vsel %vm1252, %v3249, 0
        %3282 = vmatprep.subr.bf16.mxu0 0
        %3283 = vmatpush1.bf16.msra.mxu0 %v3269
        %3284 = vmatprep.subr.bf16.mxu0 0
        %3285 = vmatpush1.bf16.msra.mxu0 %v3270
        %3286 = vmatprep.subr.bf16.mxu0 0
        %3287 = vmatpush1.bf16.msra.mxu0 0
        %3288 = vmatprep.subr.bf16.mxu0 0
        %3289 = vmatpush1.bf16.msra.mxu0 0
        %3290 = vmatprep.subr.bf16.mxu0 0
        %3291 = vmatpush1.bf16.msra.mxu0 0
        %3292 = vmatprep.subr.bf16.mxu0 0
        %3293 = vmatpush1.bf16.msra.mxu0 0
        %3294 = vmatprep.subr.bf16.mxu0 0
        %3295 = vmatpush1.bf16.msra.mxu0 0
        %3296 = vmatprep.subr.bf16.mxu0 0
        %3297 = vmatpush1.bf16.msra.mxu0 0
        %3298 = vmatprep.subr.bf16.mxu0 0
        %3299 = vmatpush1.bf16.msra.mxu0 0
        %3300 = vmatprep.subr.bf16.mxu0 0
        %3301 = vmatpush1.bf16.msra.mxu0 0
        %3302 = vmatprep.subr.bf16.mxu0 0
        %3303 = vmatpush1.bf16.msra.mxu0 0
        %3304 = vmatprep.subr.bf16.mxu0 0
        %3305 = vmatpush1.bf16.msra.mxu0 0
        %3306 = vmatprep.subr.bf16.mxu0 0
        %3307 = vmatpush1.bf16.msra.mxu0 0
        %3308 = vmatprep.subr.bf16.mxu0 0
        %3309 = vmatpush1.bf16.msra.mxu0 0
        %3310 = vmatprep.subr.bf16.mxu0 0
        %3311 = vmatpush1.bf16.msra.mxu0 0
        %3312 = vmatprep.subr.bf16.mxu0 0
        %3313 = vmatpush1.bf16.msra.mxu0 0
        %3314 = vmatprep.mubr.bf16.mxu0 0
        %3315 = vmatmul.mubr.bf16.gmra.mrb[0].mxu0 %v3274
        %v3316 = vpop.f32.mrb[0].mxu0
        %v3317 = vadd.f32 %v3259, %v3316
        %v3318 = vpop.f32.mrb[0].mxu0
        %v3319 = vpop.f32.mrb[0].mxu0
        %v3320 = vadd.f32 %v3259, %v3319
        %v3321 = vpop.f32.mrb[0].mxu0
        %3322 = vmatprep.mubr.bf16.mxu0 0
        %3323 = vmatmul.mubr.bf16.gmra.mrb[0].mxu0 %v3277
        %v3324 = vpop.f32.mrb[0].mxu0
        %v3325 = vadd.f32 %v3259, %v3324
        %v3326 = vpop.f32.mrb[0].mxu0
        %v3327 = vpop.f32.mrb[0].mxu0
        %v3328 = vadd.f32 %v3259, %v3327
        %v3329 = vpop.f32.mrb[0].mxu0
        %3330 = vmatprep.mubr.bf16.mxu0 0
        %3331 = vmatmul.mubr.bf16.gmra.mrb[0].mxu0 %v3280
        %v3332 = vpop.f32.mrb[0].mxu0
        %v3333 = vadd.f32 %v3259, %v3332
        %v3334 = vpop.f32.mrb[0].mxu0
        %v3335 = vpop.f32.mrb[0].mxu0
        %v3336 = vadd.f32 %v3259, %v3335
        %v3337 = vpop.f32.mrb[0].mxu0
        %3338 = vdwg.mxu0
        %v3339 = vmul.f32 %v3317, 0.5
        %v3340 = vmul.f32 %v3320, 0.5
        %v3341 = vmul.f32 %v3325, 0.5
        %v3342 = vmul.f32 %v3328, 0.5
        %v3343 = vmul.f32 %v3333, 0.5
        %v3344 = vmul.f32 %v3336, 0.5
        %v3345 = vmul.f32 %v3317, 0.70710677
        %v3346 = vmul.f32 %v3320, 0.70710677
        %v3347 = vmul.f32 %v3325, 0.70710677
        %v3348 = vmul.f32 %v3328, 0.70710677
        %v3349 = vmul.f32 %v3333, 0.70710677
        %v3350 = vmul.f32 %v3336, 0.70710677
        %vm3351 = vcmp.ge.f32.partialorder %v3345, 0.0
        %vm3352 = vcmp.ge.f32.partialorder %v3346, 0.0
        %vm3353 = vcmp.ge.f32.partialorder %v3347, 0.0
        %vm3354 = vcmp.ge.f32.partialorder %v3348, 0.0
        %vm3355 = vcmp.ge.f32.partialorder %v3349, 0.0
        %vm3356 = vcmp.ge.f32.partialorder %v3350, 0.0
        %v3357 = vsel %vm3351, 1.0, -1.0
        %v3358 = vsel %vm3352, 1.0, -1.0
        %v3359 = vsel %vm3353, 1.0, -1.0
        %v3360 = vsel %vm3354, 1.0, -1.0
        %v3361 = vsel %vm3355, 1.0, -1.0
        %v3362 = vsel %vm3356, 1.0, -1.0
        %v3363 = vand.u32 2147483647, %v3345
        %v3364 = vand.u32 2147483647, %v3346
        %v3365 = vand.u32 2147483647, %v3347
        %v3366 = vand.u32 2147483647, %v3348
        %v3367 = vand.u32 2147483647, %v3349
        %v3368 = vand.u32 2147483647, %v3350
        %v3369 = vmul.f32 %v3363, 0.3275911
        %v3370 = vmul.f32 %v3364, 0.3275911
        %v3371 = vmul.f32 %v3365, 0.3275911
        %v3372 = vmul.f32 %v3366, 0.3275911
        %v3373 = vmul.f32 %v3367, 0.3275911
        %v3374 = vmul.f32 %v3368, 0.3275911
        %v3375 = vadd.f32 %v3369, 1.0
        %v3376 = vadd.f32 %v3370, 1.0
        %v3377 = vadd.f32 %v3371, 1.0
        %v3378 = vadd.f32 %v3372, 1.0
        %v3379 = vadd.f32 %v3373, 1.0
        %v3380 = vadd.f32 %v3374, 1.0
        %v3381 = vrcp.pop %v3375
        %v3382 = vmul.f32 1.0, %v3381
        %v3383 = vrcp.pop %v3376
        %v3384 = vmul.f32 1.0, %v3383
        %v3385 = vrcp.pop %v3377
        %v3386 = vmul.f32 1.0, %v3385
        %v3387 = vrcp.pop %v3378
        %v3388 = vmul.f32 1.0, %v3387
        %v3389 = vrcp.pop %v3379
        %v3390 = vmul.f32 1.0, %v3389
        %v3391 = vrcp.pop %v3380
        %v3392 = vmul.f32 1.0, %v3391
        %v3393 = vmul.f32 %v3382, 1.0614054
        %v3394 = vmul.f32 %v3384, 1.0614054
        %v3395 = vmul.f32 %v3386, 1.0614054
        %v3396 = vmul.f32 %v3388, 1.0614054
        %v3397 = vmul.f32 %v3390, 1.0614054
        %v3398 = vmul.f32 %v3392, 1.0614054
        %v3399 = vadd.f32 %v3393, -1.4531521
        %v3400 = vadd.f32 %v3394, -1.4531521
        %v3401 = vadd.f32 %v3395, -1.4531521
        %v3402 = vadd.f32 %v3396, -1.4531521
        %v3403 = vadd.f32 %v3397, -1.4531521
        %v3404 = vadd.f32 %v3398, -1.4531521
        %v3405 = vmul.f32 %v3399, %v3382
        %v3406 = vmul.f32 %v3400, %v3384
        %v3407 = vmul.f32 %v3401, %v3386
        %v3408 = vmul.f32 %v3402, %v3388
        %v3409 = vmul.f32 %v3403, %v3390
        %v3410 = vmul.f32 %v3404, %v3392
        %v3411 = vadd.f32 %v3405, 1.4214138
        %v3412 = vadd.f32 %v3406, 1.4214138
        %v3413 = vadd.f32 %v3407, 1.4214138
        %v3414 = vadd.f32 %v3408, 1.4214138
        %v3415 = vadd.f32 %v3409, 1.4214138
        %v3416 = vadd.f32 %v3410, 1.4214138
        %v3417 = vmul.f32 %v3411, %v3382
        %v3418 = vmul.f32 %v3412, %v3384
        %v3419 = vmul.f32 %v3413, %v3386
        %v3420 = vmul.f32 %v3414, %v3388
        %v3421 = vmul.f32 %v3415, %v3390
        %v3422 = vmul.f32 %v3416, %v3392
        %v3423 = vadd.f32 %v3417, -0.28449672
        %v3424 = vadd.f32 %v3418, -0.28449672
        %v3425 = vadd.f32 %v3419, -0.28449672
        %v3426 = vadd.f32 %v3420, -0.28449672
        %v3427 = vadd.f32 %v3421, -0.28449672
        %v3428 = vadd.f32 %v3422, -0.28449672
        %v3429 = vmul.f32 %v3423, %v3382
        %v3430 = vmul.f32 %v3424, %v3384
        %v3431 = vmul.f32 %v3425, %v3386
        %v3432 = vmul.f32 %v3426, %v3388
        %v3433 = vmul.f32 %v3427, %v3390
        %v3434 = vmul.f32 %v3428, %v3392
        %v3435 = vadd.f32 %v3429, 0.2548296
        %v3436 = vadd.f32 %v3430, 0.2548296
        %v3437 = vadd.f32 %v3431, 0.2548296
        %v3438 = vadd.f32 %v3432, 0.2548296
        %v3439 = vadd.f32 %v3433, 0.2548296
        %v3440 = vadd.f32 %v3434, 0.2548296
        %v3441 = vmul.f32 %v3435, %v3382
        %v3442 = vmul.f32 %v3436, %v3384
        %v3443 = vmul.f32 %v3437, %v3386
        %v3444 = vmul.f32 %v3438, %v3388
        %v3445 = vmul.f32 %v3439, %v3390
        %v3446 = vmul.f32 %v3440, %v3392
        %v3447 = vsub.f32 0.0, %v3363
        %v3448 = vsub.f32 0.0, %v3364
        %v3449 = vsub.f32 0.0, %v3365
        %v3450 = vsub.f32 0.0, %v3366
        %v3451 = vsub.f32 0.0, %v3367
        %v3452 = vsub.f32 0.0, %v3368
        %v3453 = vmul.f32 %v3447, %v3363
        %v3454 = vmul.f32 %v3448, %v3364
        %v3455 = vmul.f32 %v3449, %v3365
        %v3456 = vmul.f32 %v3450, %v3366
        %v3457 = vmul.f32 %v3451, %v3367
        %v3458 = vmul.f32 %v3452, %v3368
        %v3459 = vmul.f32 %v3453, 1.442695
        %v3460 = vpow.pop %v3459
        %v3461 = vmul.f32 %v3454, 1.442695
        %v3462 = vpow.pop %v3461
        %v3463 = vmul.f32 %v3455, 1.442695
        %v3464 = vpow.pop %v3463
        %v3465 = vmul.f32 %v3456, 1.442695
        %v3466 = vpow.pop %v3465
        %v3467 = vmul.f32 %v3457, 1.442695
        %v3468 = vpow.pop %v3467
        %v3469 = vmul.f32 %v3458, 1.442695
        %v3470 = vpow.pop %v3469
        %v3471 = vmul.f32 %v3441, %v3460
        %v3472 = vmul.f32 %v3442, %v3462
        %v3473 = vmul.f32 %v3443, %v3464
        %v3474 = vmul.f32 %v3444, %v3466
        %v3475 = vmul.f32 %v3445, %v3468
        %v3476 = vmul.f32 %v3446, %v3470
        %v3477 = vsub.f32 1.0, %v3471
        %v3478 = vsub.f32 1.0, %v3472
        %v3479 = vsub.f32 1.0, %v3473
        %v3480 = vsub.f32 1.0, %v3474
        %v3481 = vsub.f32 1.0, %v3475
        %v3482 = vsub.f32 1.0, %v3476
        %v3483 = vmul.f32 %v3357, %v3477
        %v3484 = vmul.f32 %v3358, %v3478
        %v3485 = vmul.f32 %v3359, %v3479
        %v3486 = vmul.f32 %v3360, %v3480
        %v3487 = vmul.f32 %v3361, %v3481
        %v3488 = vmul.f32 %v3362, %v3482
        %v3489 = vadd.f32 %v3483, 1.0
        %v3490 = vadd.f32 %v3484, 1.0
        %v3491 = vadd.f32 %v3485, 1.0
        %v3492 = vadd.f32 %v3486, 1.0
        %v3493 = vadd.f32 %v3487, 1.0
        %v3494 = vadd.f32 %v3488, 1.0
        %v3495 = vmul.f32 %v3339, %v3489
        %v3496 = vmul.f32 %v3340, %v3490
        %v3497 = vmul.f32 %v3341, %v3491
        %v3498 = vmul.f32 %v3342, %v3492
        %v3499 = vmul.f32 %v3343, %v3493
        %v3500 = vmul.f32 %v3344, %v3494
        %v3501 = vpack.c.bf16 %v3496, %v3495
        %v3502 = vpack.c.bf16 %v3498, %v3497
        %v3503 = vpack.c.bf16 %v3500, %v3499
        %v3504 = vld [vmem:[%s954] sm:$0xf]
        %v3505 = vld [vmem:[%s954 + $0x4] sm:$0xf]
        %v3506 = vld [vmem:[%s954 + $0x8] sm:$0xf]
        %v3507 = vld [vmem:[%s954 + $0xc] sm:$0xf]
        %v3508 = vld [vmem:[%s954 + $0x10] sm:$0xf]
        %v3509 = vld [vmem:[%s954 + $0x14] sm:$0xf]
        %v3510 = vld [vmem:[%s954 + $0x18] sm:$0xf]
        %v3511 = vld [vmem:[%s954 + $0x1c] sm:$0xf]
        %v3512 = vld [vmem:[%s957] sm:$0x1]
        %v3514 = vlaneseq
        %v3515 = vshrl.u32 %v3514, 7
        %v3516 = vsub.s32 0, %v3515
        %v3517 = vrot.slane %v3512, %v3516
        %v3527 = vunpack.c.l.b16 %v3504
        %v3528 = vunpack.c.l.b16 %v3505
        %v3529 = vunpack.c.l.b16 %v3506
        %v3530 = vunpack.c.l.b16 %v3507
        %v3531 = vunpack.c.l.b16 %v3508
        %v3532 = vunpack.c.l.b16 %v3509
        %v3533 = vunpack.c.l.b16 %v3510
        %v3534 = vunpack.c.l.b16 %v3511
        %v3535 = vpack.c.b16 %v3528, %v3527
        %v3536 = vpack.c.b16 %v3530, %v3529
        %v3537 = vpack.c.b16 %v3532, %v3531
        %v3538 = vpack.c.b16 %v3534, %v3533
        %vm3543 = vcmask 523264
        %v3545 = vsel %vm3543, %v3501, 0
        %v3548 = vsel %vm3543, %v3502, 0
        %v3551 = vsel %vm3543, %v3503, 0
        %3553 = vmatprep.subr.bf16.mxu0 0
        %3554 = vmatpush1.bf16.msra.mxu0 %v3535
        %3555 = vmatprep.subr.bf16.mxu0 0
        %3556 = vmatpush1.bf16.msra.mxu0 %v3536
        %3557 = vmatprep.subr.bf16.mxu0 0
        %3558 = vmatpush1.bf16.msra.mxu0 %v3537
        %3559 = vmatprep.subr.bf16.mxu0 0
        %3560 = vmatpush1.bf16.msra.mxu0 %v3538
        %3561 = vmatprep.subr.bf16.mxu0 0
        %3562 = vmatpush1.bf16.msra.mxu0 0
        %3563 = vmatprep.subr.bf16.mxu0 0
        %3564 = vmatpush1.bf16.msra.mxu0 0
        %3565 = vmatprep.subr.bf16.mxu0 0
        %3566 = vmatpush1.bf16.msra.mxu0 0
        %3567 = vmatprep.subr.bf16.mxu0 0
        %3568 = vmatpush1.bf16.msra.mxu0 0
        %3569 = vmatprep.subr.bf16.mxu0 0
        %3570 = vmatpush1.bf16.msra.mxu0 0
        %3571 = vmatprep.subr.bf16.mxu0 0
        %3572 = vmatpush1.bf16.msra.mxu0 0
        %3573 = vmatprep.subr.bf16.mxu0 0
        %3574 = vmatpush1.bf16.msra.mxu0 0
        %3575 = vmatprep.subr.bf16.mxu0 0
        %3576 = vmatpush1.bf16.msra.mxu0 0
        %3577 = vmatprep.subr.bf16.mxu0 0
        %3578 = vmatpush1.bf16.msra.mxu0 0
        %3579 = vmatprep.subr.bf16.mxu0 0
        %3580 = vmatpush1.bf16.msra.mxu0 0
        %3581 = vmatprep.subr.bf16.mxu0 0
        %3582 = vmatpush1.bf16.msra.mxu0 0
        %3583 = vmatprep.subr.bf16.mxu0 0
        %3584 = vmatpush1.bf16.msra.mxu0 0
        %3585 = vmatprep.mubr.bf16.mxu0 0
        %3586 = vmatmul.mubr.bf16.gmra.mrb[0].mxu0 %v3545
        %v3587 = vpop.f32.mrb[0].mxu0
        %v3588 = vadd.f32 %v3517, %v3587
        %v3589 = vpop.f32.mrb[0].mxu0
        %v3590 = vpop.f32.mrb[0].mxu0
        %v3591 = vadd.f32 %v3517, %v3590
        %v3592 = vpop.f32.mrb[0].mxu0
        %3593 = vmatprep.mubr.bf16.mxu0 0
        %3594 = vmatmul.mubr.bf16.gmra.mrb[0].mxu0 %v3548
        %v3595 = vpop.f32.mrb[0].mxu0
        %v3596 = vadd.f32 %v3517, %v3595
        %v3597 = vpop.f32.mrb[0].mxu0
        %v3598 = vpop.f32.mrb[0].mxu0
        %v3599 = vadd.f32 %v3517, %v3598
        %v3600 = vpop.f32.mrb[0].mxu0
        %3601 = vmatprep.mubr.bf16.mxu0 0
        %3602 = vmatmul.mubr.bf16.gmra.mrb[0].mxu0 %v3551
        %v3603 = vpop.f32.mrb[0].mxu0
        %v3604 = vadd.f32 %v3517, %v3603
        %v3605 = vpop.f32.mrb[0].mxu0
        %v3606 = vpop.f32.mrb[0].mxu0
        %v3607 = vadd.f32 %v3517, %v3606
        %v3608 = vpop.f32.mrb[0].mxu0
        %3609 = vdwg.mxu0
        %v3610 = vadd.f32 %v3588, %v3137
        %v3611 = vadd.f32 %v3591, %v3138
        %v3612 = vadd.f32 %v3596, %v3139
        %v3613 = vadd.f32 %v3599, %v3140
        %v3614 = vadd.f32 %v3604, %v3141
        %v3615 = vadd.f32 %v3607, %v3142
        %3616 = vst.msk [vmem:[#allocation2] sm:$0xff] %vm1252, %v3610
        %3617 = vst.msk [vmem:[#allocation2 + $0x8] sm:$0xff] %vm1252, %v3611
        %3618 = vst.msk [vmem:[#allocation2 + $0x10] sm:$0xff] %vm1252, %v3612
        %3619 = vst.msk [vmem:[#allocation2 + $0x18] sm:$0xff] %vm1252, %v3613
        %3620 = vst.msk [vmem:[#allocation2 + $0x20] sm:$0xff] %vm1252, %v3614
        %3621 = vst.msk [vmem:[#allocation2 + $0x28] sm:$0xff] %vm1252, %v3615
        %p3622 = scmp.eq.s32.totalorder %s40, 1
        // Predicated region
        $region145: #{tpu_custom_call.1} parent=115 // pred_check
          %p3623 = pneg %p3622
        $region146: #{tpu_custom_call.1} parent=115 // pred_check_branch
          %3625 = sbr.rel (%p3623) target = $region148
        $region147: #{tpu_custom_call.1} parent=115 // pred_region
          %v3626 = vld [vmem:[%s20] sm:$0x1]
          %v3627 = vld [vmem:[%s21] sm:$0x1]
          %v3630 = vrot.slane %v3613, 7
          %vm3631 = vcmask 1041409
          %v3632 = vsel %vm3631, %v3630, %v3610
          %vm3634 = vcmask 254976
          %v3635 = vsel %vm3634, %v3632, 0.0
          %3636 = vadd.xlane.f32.xlu0 %v3635
          %v3637 = vpop.xlane.xlu0 %3636
          %v3638 = vmul.f32 %v3637, %v1271
          %v3640 = vrot.slane %v3638, 1
          %v3643 = vsub.f32 %v3610, %v3638
          %v3644 = vsub.f32 %v3613, %v3640
          %v3645 = vmul.f32 %v3643, %v3643
          %v3646 = vmul.f32 %v3644, %v3644
          %v3649 = vrot.slane %v3646, 7
          %v3650 = vsel %vm3631, %v3649, %v3645
          %v3652 = vsel %vm3634, %v3650, 0.0
          %3653 = vadd.xlane.f32.xlu0 %v3652
          %v3654 = vpop.xlane.xlu0 %3653
          %v3655 = vmul.f32 %v3654, %v1271
          %v3656 = vadd.f32 %v3655, 1e-05
          %v3657 = vrsqrt.pop %v3656
          %v3659 = vrot.slane %v3657, 1
          %v3662 = vmul.f32 %v3643, %v3657
          %v3663 = vmul.f32 %v3644, %v3659
          %v3665 = vlaneseq
          %v3666 = vshrl.u32 %v3665, 7
          %v3667 = vsub.s32 0, %v3666
          %v3668 = vrot.slane %v3626, %v3667
          %v3670 = vmul.f32 %v3662, %v3668
          %v3671 = vmul.f32 %v3663, %v3668
          %v3673 = vlaneseq
          %v3674 = vshrl.u32 %v3673, 7
          %v3675 = vsub.s32 0, %v3674
          %v3676 = vrot.slane %v3627, %v3675
          %v3678 = vadd.f32 %v3670, %v3676
          %v3679 = vadd.f32 %v3671, %v3676
          %v3680 = vpack.c.bf16 %v3678, %v3678
          %v3681 = vpack.c.bf16 %v3679, %v3679
          %v3682 = vld [vmem:[%s22] sm:$0xf]
          %v3683 = vld [vmem:[%s22 + $0x4] sm:$0xf]
          %v3684 = vld [vmem:[%s22 + $0x8] sm:$0xf]
          %v3685 = vld [vmem:[%s22 + $0xc] sm:$0xf]
          %v3686 = vld [vmem:[%s23] sm:$0x1]
          %v3688 = vlaneseq
          %v3689 = vshrl.u32 %v3688, 7
          %v3690 = vsub.s32 0, %v3689
          %v3691 = vrot.slane %v3686, %v3690
          %v3695 = vunpack.c.l.b16 %v3680
          %v3696 = vunpack.c.l.b16 %v3681
          %v3697 = vrot.slane %v3696, 7
          %v3698 = vsel %vm3631, %v3697, %v3695
          %v3699 = vpack.c.b16 %v3698, %v3698
          %v3704 = vunpack.c.l.b16 %v3682
          %v3705 = vunpack.c.l.b16 %v3683
          %v3706 = vunpack.c.l.b16 %v3684
          %v3707 = vunpack.c.l.b16 %v3685
          %v3708 = vpack.c.b16 %v3705, %v3704
          %v3709 = vpack.c.b16 %v3707, %v3706
          %v3713 = vsel %vm1252, %v3699, 0
          %3715 = vmatprep.subr.bf16.mxu0 0
          %3716 = vmatpush1.bf16.msra.mxu0 %v3708
          %3717 = vmatprep.subr.bf16.mxu0 0
          %3718 = vmatpush1.bf16.msra.mxu0 %v3709
          %3719 = vmatprep.subr.bf16.mxu0 0
          %3720 = vmatpush1.bf16.msra.mxu0 0
          %3721 = vmatprep.subr.bf16.mxu0 0
          %3722 = vmatpush1.bf16.msra.mxu0 0
          %3723 = vmatprep.subr.bf16.mxu0 0
          %3724 = vmatpush1.bf16.msra.mxu0 0
          %3725 = vmatprep.subr.bf16.mxu0 0
          %3726 = vmatpush1.bf16.msra.mxu0 0
          %3727 = vmatprep.subr.bf16.mxu0 0
          %3728 = vmatpush1.bf16.msra.mxu0 0
          %3729 = vmatprep.subr.bf16.mxu0 0
          %3730 = vmatpush1.bf16.msra.mxu0 0
          %3731 = vmatprep.subr.bf16.mxu0 0
          %3732 = vmatpush1.bf16.msra.mxu0 0
          %3733 = vmatprep.subr.bf16.mxu0 0
          %3734 = vmatpush1.bf16.msra.mxu0 0
          %3735 = vmatprep.subr.bf16.mxu0 0
          %3736 = vmatpush1.bf16.msra.mxu0 0
          %3737 = vmatprep.subr.bf16.mxu0 0
          %3738 = vmatpush1.bf16.msra.mxu0 0
          %3739 = vmatprep.subr.bf16.mxu0 0
          %3740 = vmatpush1.bf16.msra.mxu0 0
          %3741 = vmatprep.subr.bf16.mxu0 0
          %3742 = vmatpush1.bf16.msra.mxu0 0
          %3743 = vmatprep.subr.bf16.mxu0 0
          %3744 = vmatpush1.bf16.msra.mxu0 0
          %3745 = vmatprep.subr.bf16.mxu0 0
          %3746 = vmatpush1.bf16.msra.mxu0 0
          %3747 = vmatprep.mubr.bf16.mxu0 0
          %3748 = vmatmul.mubr.bf16.gmra.mrb[0].mxu0 %v3713
          %v3749 = vpop.f32.mrb[0].mxu0
          %v3750 = vadd.f32 %v3691, %v3749
          %v3751 = vpop.f32.mrb[0].mxu0
          %v3752 = vpop.f32.mrb[0].mxu0
          %v3753 = vpop.f32.mrb[0].mxu0
          %3754 = vdwg.mxu0
          %vm3755 = vcmask 74752
          %3756 = vst.msk [vmem:[#allocation14] sm:$0x3] %vm3755, %v3750
        $region148: #{tpu_custom_call.1} parent=115 // pred_fallthru
          _
        // Predicated region
        $region149: #{tpu_custom_call.1} parent=115 // pred_check
          %p3757 = pneg %p612
        $region150: #{tpu_custom_call.1} parent=115 // pred_check_branch
          %3759 = sbr.rel (%p3757) target = $region152
        $region151: #{tpu_custom_call.1} parent=115 // pred_region
          %s3761 = ssub.s32 32, 32
          %3762 = vsyncadd [#allocation5], %s3761
          %s3764 = sshll.u32 [#allocation14], 4
          %s3765 = int_to_ptr.vmem [resolvable:$true] %s3764
          %3767 = dma.vmem_to_hbm [thread:$0]  %s3765, 32, %s24, [#allocation5]
        $region152: #{tpu_custom_call.1} parent=115 // pred_fallthru
          _
        // Predicated region
        $region153: #{tpu_custom_call.1} parent=115 // pred_check
          %p3768 = pneg %p612
        $region154: #{tpu_custom_call.1} parent=115 // pred_check_branch
          %3770 = sbr.rel (%p3768) target = $region156
        $region155: #{tpu_custom_call.1} parent=115 // pred_region
          %3771 = dma.done [#allocation5], 32
        $region156: #{tpu_custom_call.1} parent=115 // pred_fallthru
          _
      $region116: #{tpu_custom_call.1} parent=5 // pred_fallthru
        _
      %p3772 = scmp.le.s32.totalorder 2, %s35
      // Predicated region
      $region157: #{tpu_custom_call.1} parent=5 // pred_check
        %p3773 = pneg %p3772
      $region158: #{tpu_custom_call.1} parent=5 // pred_check_branch
        %3775 = sbr.rel (%p3773) target = $region160
      $region159: #{tpu_custom_call.1} parent=5 // pred_region
        %s3776 = ssub.s32 %s35, 2
      $region160: #{tpu_custom_call.1} parent=5 // pred_fallthru
        _
    $region6: #{tpu_custom_call.1} parent=1 // loop_footer
      %s39 = sadd.s32 1, %s35
    $region7: #{tpu_custom_call.1} parent=1 // loop_footer_branch
      %34 = sbr.rel target = $region3
    $region8: #{tpu_custom_call.1} parent=1 // loop_exit
      _
    %3777 = vsyncpa [#allocation4], 1
    %s3778 = scalar_lea.sflag [#allocation4], 1
    %3779 = vsyncpa %s3778, 1
    %3780 = vsyncpa [#allocation7], 1
    %3781 = vsyncpa [#allocation10], 1
    %3782 = vsyncpa [#allocation13], 1
    %3783 = vsyncpa [#allocation5], 1
    %s3784 = scalar_lea.sflag [#allocation5], 1
    %3785 = vsyncpa %s3784, 1

</llo_original>
